<compile_context>
chip_gen: v7x
topology: tpu7x:2x2x1
jax: 0.10.0
libtpu: 0.0.40
codegen_flags: <defaults>
</compile_context>

<pallas_src>
from functools import partial

import numpy as np
import jax
import jax.numpy as jnp
from jax.experimental import pallas as pl
from jax.experimental.pallas import tpu as pltpu

CARDINALITY = 32   # BottleneckX.cardinality
EXPANSION = 2      # BottleneckX.expansion (unused in forward)
BN_EPS = 1e-5

LANE = 128                       # TPU lane width (last-dim tile)
_VMEM_CAP = 64 << 20             # v7x per-TensorCore VMEM (smallest of v5e/v6e/v7x)
_VMEM_BUDGET = int(0.75 * _VMEM_CAP)   # picker budget, leaves compiler headroom


def _round_up(v, m):
    return (v + m - 1) // m * m


# --------------------------------------------------------------------------- #
# Kernel
# --------------------------------------------------------------------------- #
def _bottleneckx_kernel(mask_ref, x_ref,
                        w1_ref, s1_ref, b1_ref,
                        w2_ref, s2_ref, b2_ref,
                        w3_ref, s3_ref, b3_ref,
                        out_ref, taps_ref, *, W, cb_p):
    """One block of whole images per grid step.

    mask_ref : (R, 9)  f32   zero-padding validity per row and 3x3 tap
    x_ref    : (R, Cin_p) bf16  flattened channels-last input (also residual)
    w1_ref   : (Cin_p, Cb_p)  bf16  conv1 1x1 weights
    w2_ref   : (9*Cb_p, Cb_p) bf16  grouped 3x3 weights, per-tap block-diagonal
                                    matrices stacked along the contraction axis
    w3_ref   : (Cb_p, Cout_p) bf16  conv3 1x1 weights
    s*/b*    : (1, C_p) f32   folded BatchNorm scale / bias (zero in padding)
    out_ref  : (R, Cout_p) f32
    taps_ref : (R, 9*Cb_p) bf16 VMEM scratch for the stacked conv2 taps
    """
    # ---- conv1 (1x1) + bn1 + relu : one single-pass bf16 MXU matmul ----
    y = jnp.dot(x_ref[...], w1_ref[...], preferred_element_type=jnp.float32)
    y = jnp.maximum(y * s1_ref[...] + b1_ref[...], 0.0)          # (R, Cb_p) f32

    R = y.shape[0]

    # ---- conv2: grouped 3x3 (stride=1, dilation=1, padding=1) + bn2 + relu --
    # Nine shifted+masked taps (sublane rolls ride the XLU slot) are written
    # straight into the bf16 scratch at 128-aligned lane offsets (no concat /
    # lane repack, only one tap live at a time), then contracted by a single
    # matmul with K = 9*Cb_p.
    for kh in range(3):
        for kw in range(3):
            dh, dw = kh - 1, kw - 1
            off = dh * W + dw
            t = kh * 3 + kw
            # shifted[i] = y[(i + off) mod R]; out-of-image rows masked to 0.
            shifted = pltpu.roll(y, shift=(-off) % R, axis=0) if off else y
            if off:
                shifted = shifted * mask_ref[:, t:t + 1]
            taps_ref[:, t * cb_p:(t + 1) * cb_p] = shifted.astype(jnp.bfloat16)

    y = jnp.dot(taps_ref[...], w2_ref[...], preferred_element_type=jnp.float32)
    y = jnp.maximum(y * s2_ref[...] + b2_ref[...], 0.0)          # (R, Cb_p) f32

    # ---- conv3 (1x1) + bn3 ----
    y = jnp.dot(y.astype(jnp.bfloat16), w3_ref[...],
                preferred_element_type=jnp.float32)
    y = y * s3_ref[...] + b3_ref[...]                            # (R, Cout_p)

    # ---- residual add + relu (residual = x; requires Cin == Cout) ----
    # Cout_p is a multiple of 128 -> unmasked, lane-dense stores.
    out_ref[...] = jnp.maximum(y + x_ref[...].astype(jnp.float32), 0.0)


# --------------------------------------------------------------------------- #
# VMEM accounting & block sizing
# --------------------------------------------------------------------------- #
def _per_step_vmem_bytes(rows, cin_p, cb_p, cout_p):
    """Conservative per-grid-step VMEM footprint (bytes)."""
    bf16, f32 = 2, 4
    x_blk = 2 * rows * cin_p * bf16                 # input block, double buffered
    out_blk = 2 * rows * cout_p * f32               # output block, double buffered
    mask_blk = 2 * rows * LANE * f32                # (rows, 9) f32, lane-padded to 128
    weights = 2 * (cin_p + 9 * cb_p + cout_p) * cb_p * bf16   # w1 + w2 + w3
    bn = 2 * 6 * 8 * LANE * f32                     # scales / biases (padded tiles)
    scratch = rows * 9 * cb_p * bf16                # stacked-tap scratch (1 buffer)
    live = 4 * rows * cb_p * f32                    # y / tap / matmul-result headroom
    return x_blk + out_blk + mask_blk + weights + bn + scratch + live


def _pick_images_per_block(N, HW, cin_p, cb_p, cout_p, budget=_VMEM_BUDGET):
    """Largest whole-image block that (a) fits the VMEM budget (sized for
    v7x's 64 MiB/TC), (b) keeps sublane-aligned row counts, and (c) leaves
    >= min(N, 4) grid steps so each v7x TensorCore gets >= 2 pipelined steps."""
    target_blocks = min(N, 4)
    fitting = []
    for ipb in range(1, N + 1):
        if N % ipb:
            continue
        rows = ipb * HW
        if rows % 8 and ipb != N:        # (8,128) rule unless full-dim block
            continue
        if _per_step_vmem_bytes(rows, cin_p, cb_p, cout_p) > budget:
            continue
        fitting.append(ipb)
    if not fitting:
        # TODO(synk): spatial row tiling with a W-row halo for large H*W.
        raise NotImplementedError(
            "a single image exceeds the VMEM budget; spatial halo tiling is "
            "not implemented")
    meeting = [i for i in fitting if N // i >= target_blocks]
    return max(meeting) if meeting else min(fitting)


def _boundary_masks(H, W):
    """(H*W, 9) f32: mask[p, kh*3+kw] == 1 iff neighbour (dh, dw) = (kh-1, kw-1)
    of flattened position p lies inside the image (zero padding elsewhere).
    Also prevents roll wrap-around from bleeding across image boundaries."""
    hh = np.repeat(np.arange(H), W)
    ww = np.tile(np.arange(W), H)
    m = np.zeros((H * W, 9), np.float32)
    for kh in range(3):
        for kw in range(3):
            dh, dw = kh - 1, kw - 1
            ok = ((hh + dh >= 0) & (hh + dh < H) &
                  (ww + dw >= 0) & (ww + dw < W))
            m[:, kh * 3 + kw] = ok.astype(np.float32)
    return m


# --------------------------------------------------------------------------- #
# Wrapper
# --------------------------------------------------------------------------- #
def bottleneckx_forward(x_nchw, kp, *, stride=1, dilation=1):
    assert stride == 1 and dilation == 1, "only stride=1, dilation=1 implemented"
    N, Cin, H, W = x_nchw.shape
    HW = H * W
    assert Cin == kp["cin"], "input channel mismatch"
    assert kp["cin"] == kp["cout"], \
        "residual add requires inplanes == planes (no downsample branch)"
    cin_p, cb_p, cout_p = kp["cin_p"], kp["cb_p"], kp["cout_p"]

    ipb = _pick_images_per_block(N, HW, cin_p, cb_p, cout_p)
    rows = ipb * HW
    n_blocks = N // ipb

    footprint = _per_step_vmem_bytes(rows, cin_p, cb_p, cout_p)
    vmem_limit = int(min(_VMEM_CAP, max(32 << 20, footprint + (footprint >> 1))))

    # NCHW -> flattened channels-last (N*H*W, Cin_p): channels on lanes (zero
    # padded to a multiple of 128 -> lane-dense loads/stores), rows on sublanes.
    # bf16 halves the dominant HBM read; f32 accumulation happens in-kernel.
    x = jnp.transpose(x_nchw, (0, 2, 3, 1)).reshape(N * HW, Cin)
    if cin_p != Cin:
        x = jnp.pad(x, ((0, 0), (0, cin_p - Cin)))
    x = x.astype(jnp.bfloat16)

    # Per-row / per-tap zero-padding masks; identical for every block since
    # each block holds whole images (constant block index -> fetched once).
    mask = jnp.asarray(np.tile(_boundary_masks(H, W), (ipb, 1)))   # (rows, 9)

    def const(arr):
        zeros = (0,) * arr.ndim
        return pl.BlockSpec(arr.shape, lambda i, _z=zeros: _z)

    kernel = partial(_bottleneckx_kernel, W=W, cb_p=cb_p)
    out = pl.pallas_call(
        kernel,
        out_shape=jax.ShapeDtypeStruct((N * HW, cout_p), jnp.float32),
        grid=(n_blocks,),
        in_specs=[
            const(mask),
            pl.BlockSpec((rows, cin_p), lambda i: (i, 0)),
            const(kp["w1"]), const(kp["s1"]), const(kp["b1"]),
            const(kp["w2"]), const(kp["s2"]), const(kp["b2"]),
            const(kp["w3"]), const(kp["s3"]), const(kp["b3"]),
        ],
        out_specs=pl.BlockSpec((rows, cout_p), lambda i: (i, 0)),
        scratch_shapes=[pltpu.VMEM((rows, 9 * cb_p), jnp.bfloat16)],
        compiler_params=pltpu.CompilerParams(
            dimension_semantics=("parallel",),
            vmem_limit_bytes=vmem_limit),
    )(mask, x, kp["w1"], kp["s1"], kp["b1"], kp["w2"], kp["s2"], kp["b2"],
      kp["w3"], kp["s3"], kp["b3"])

    # (N*H*W, Cout_p) -> NCHW (drop channel padding).
    out = out[:, :kp["cout"]].reshape(N, H, W, kp["cout"])
    return jnp.transpose(out, (0, 3, 1, 2))


# --------------------------------------------------------------------------- #
# Parameter preparation
# --------------------------------------------------------------------------- #
def pack_params(p, cardinality=CARDINALITY):
    """Fold BN, pad channels to multiples of 128 lanes, cast matmul weights to
    bf16, and stack the grouped 3x3 weights into a single (9*Cb_p, Cb_p)
    block-diagonal contraction matrix."""
    w1 = np.asarray(p["w1_oihw"])[:, :, 0, 0].T            # (Cin, Cb)
    w3 = np.asarray(p["w3_oihw"])[:, :, 0, 0].T            # (Cb, Cout)
    w2 = np.asarray(p["w2_oihw"])                          # (Cb, cpg, 3, 3)
    cin, cb = w1.shape
    cout = w3.shape[1]
    cpg = w2.shape[1]
    cin_p, cb_p, cout_p = (_round_up(c, LANE) for c in (cin, cb, cout))

    w1_p = np.zeros((cin_p, cb_p), np.float32)
    w1_p[:cin, :cb] = w1
    w3_p = np.zeros((cb_p, cout_p), np.float32)
    w3_p[:cb, :cout] = w3

    # TODO(synk): for very large Cb pass the sparse (9, Cb, cpg) form and
    #             expand in-kernel instead of shipping the dense block-diagonal.
    w2_mats = np.zeros((9, cb_p, cb_p), np.float32)
    for g in range(cardinality):
        o0 = g * cpg
        for kh in range(3):
            for kw in range(3):
                t = kh * 3 + kw
                # w2_mats[t, ic, oc] = w2[oc, ic - o0, kh, kw] for the group block
                w2_mats[t, o0:o0 + cpg, o0:o0 + cpg] = w2[o0:o0 + cpg, :, kh, kw].T
    w2_flat = w2_mats.reshape(9 * cb_p, cb_p)

    def pad_vec(v, n):
        out = np.zeros((1, n), np.float32)
        out[0, :v.shape[0]] = np.asarray(v)
        return out

    return dict(
        w1=jnp.asarray(w1_p, jnp.bfloat16),
        w2=jnp.asarray(w2_flat, jnp.bfloat16),
        w3=jnp.asarray(w3_p, jnp.bfloat16),
        s1=jnp.asarray(pad_vec(p["s1"], cb_p)), b1=jnp.asarray(pad_vec(p["b1"], cb_p)),
        s2=jnp.asarray(pad_vec(p["s2"], cb_p)), b2=jnp.asarray(pad_vec(p["b2"], cb_p)),
        s3=jnp.asarray(pad_vec(p["s3"], cout_p)), b3=jnp.asarray(pad_vec(p["b3"], cout_p)),
        cin=cin, cb=cb, cout=cout, cin_p=cin_p, cb_p=cb_p, cout_p=cout_p,
    )


def init_params(key, inplanes, planes, cardinality=CARDINALITY, eps=BN_EPS):
    """Deterministic synthetic parameters matching BottleneckX.__init__ shapes."""
    bottle = planes * cardinality // 32
    assert bottle % cardinality == 0, "planes must be a multiple of 32"
    cpg = bottle // cardinality                              # channels per group
    ks = jax.random.split(key, 15)

    # PyTorch-layout conv weights (OIHW), no bias (bias=False in the module).
    w1_oihw = 0.1 * jax.random.normal(ks[0], (bottle, inplanes, 1, 1), jnp.float32)
    w2_oihw = 0.1 * jax.random.normal(ks[1], (bottle, cpg, 3, 3), jnp.float32)
    w3_oihw = 0.1 * jax.random.normal(ks[2], (planes, bottle, 1, 1), jnp.float32)

    def bn_fold(k0, k1, k2, k3, c):
        gamma = 1.0 + 0.1 * jax.random.normal(k0, (c,), jnp.float32)
        beta = 0.1 * jax.random.normal(k1, (c,), jnp.float32)
        mean = 0.1 * jax.random.normal(k2, (c,), jnp.float32)
        var = jax.random.uniform(k3, (c,), jnp.float32, minval=0.5, maxval=1.5)
        scale = gamma / jnp.sqrt(var + eps)
        bias = beta - mean * scale
        return scale, bias

    s1, b1 = bn_fold(ks[3], ks[4], ks[5], ks[6], bottle)
    s2, b2 = bn_fold(ks[7], ks[8], ks[9], ks[10], bottle)
    s3, b3 = bn_fold(ks[11], ks[12], ks[13], ks[14], planes)

    ref_params = dict(w1_oihw=w1_oihw, w2_oihw=w2_oihw, w3_oihw=w3_oihw,
                      s1=s1, b1=b1, s2=s2, b2=b2, s3=s3, b3=b3)
    kparams = pack_params(ref_params, cardinality=cardinality)
    return kparams, ref_params


# --------------------------------------------------------------------------- #
# Reference (pure JAX / XLA convs) with the same bf16 operand rounding so the
# structural correctness of the kernel can be checked tightly.
# --------------------------------------------------------------------------- #
def reference_forward(x, p, compute_dtype=jnp.bfloat16):
    conv = partial(jax.lax.conv_general_dilated,
                   dimension_numbers=("NCHW", "OIHW", "NCHW"),
                   preferred_element_type=jnp.float32)

    def bn(y, s, b):
        return y * s.reshape(1, -1, 1, 1) + b.reshape(1, -1, 1, 1)

    cd = compute_dtype
    xc = x.astype(cd)
    y = conv(xc, p["w1_oihw"].astype(cd), window_strides=(1, 1), padding="VALID")
    y = jnp.maximum(bn(y, p["s1"], p["b1"]), 0.0).astype(cd)
    y = conv(y, p["w2_oihw"].astype(cd), window_strides=(1, 1),
             padding=((1, 1), (1, 1)), feature_group_count=CARDINALITY)
    y = jnp.maximum(bn(y, p["s2"], p["b2"]), 0.0).astype(cd)
    y = conv(y, p["w3_oihw"].astype(cd), window_strides=(1, 1), padding="VALID")
    y = bn(y, p["s3"], p["b3"])
    return jnp.maximum(y + xc.astype(jnp.float32), 0.0)


if __name__ == "__main__":
    key = jax.random.PRNGKey(0)
    kx, kp_key = jax.random.split(key)

    # cardinality=32 groups force planes (and hence inplanes, for the residual
    # add) to be a multiple of 32; smallest valid config:
    N, inplanes, planes, H, W = 2, 32, 32, 16, 16
    x = jax.random.normal(kx, (N, inplanes, H, W), jnp.float32)

    kparams, ref_params = init_params(kp_key, inplanes, planes)

    out = bottleneckx_forward(x, kparams)
    out = jax.block_until_ready(out)
    assert out.shape == (N, planes, H, W)

    ref = jax.block_until_ready(reference_forward(x, ref_params))
    np.testing.assert_allclose(np.asarray(out), np.asarray(ref),
                               rtol=2e-3, atol=2e-3)
    print("KERNEL_OK")
</pallas_src>

<mosaic_0001>
module attributes {stable_mosaic.version = 11 : i64} {
  func.func @_bottleneckx_kernel(%arg0: i32, %arg1: memref<256x9xf32, #tpu.memory_space<vmem>>, %arg2: memref<256x128xbf16, #tpu.memory_space<vmem>>, %arg3: memref<128x128xbf16, #tpu.memory_space<vmem>>, %arg4: memref<1x128xf32, #tpu.memory_space<vmem>>, %arg5: memref<1x128xf32, #tpu.memory_space<vmem>>, %arg6: memref<1152x128xbf16, #tpu.memory_space<vmem>>, %arg7: memref<1x128xf32, #tpu.memory_space<vmem>>, %arg8: memref<1x128xf32, #tpu.memory_space<vmem>>, %arg9: memref<128x128xbf16, #tpu.memory_space<vmem>>, %arg10: memref<1x128xf32, #tpu.memory_space<vmem>>, %arg11: memref<1x128xf32, #tpu.memory_space<vmem>>, %arg12: memref<256x128xf32, #tpu.memory_space<vmem>>, %arg13: memref<256x1152xbf16, #tpu.memory_space<vmem>>) attributes {dimension_semantics = [#tpu.dimension_semantics<parallel>], iteration_bounds = array<i64: 2>, scalar_prefetch = 0 : i64, scratch_operands = 1 : i64, tpu.core_type = #tpu.core_type<tc>, window_params = [{pipeline_mode = #tpu.pipeline_mode<synchronous>, transform_indices = @transform_0, window_bounds = array<i64: 256, 9>}, {transform_indices = @transform_1, window_bounds = array<i64: 256, 128>}, {pipeline_mode = #tpu.pipeline_mode<synchronous>, transform_indices = @transform_2, window_bounds = array<i64: 128, 128>}, {pipeline_mode = #tpu.pipeline_mode<synchronous>, transform_indices = @transform_3, window_bounds = array<i64: 1, 128>}, {pipeline_mode = #tpu.pipeline_mode<synchronous>, transform_indices = @transform_4, window_bounds = array<i64: 1, 128>}, {pipeline_mode = #tpu.pipeline_mode<synchronous>, transform_indices = @transform_5, window_bounds = array<i64: 1152, 128>}, {pipeline_mode = #tpu.pipeline_mode<synchronous>, transform_indices = @transform_6, window_bounds = array<i64: 1, 128>}, {pipeline_mode = #tpu.pipeline_mode<synchronous>, transform_indices = @transform_7, window_bounds = array<i64: 1, 128>}, {pipeline_mode = #tpu.pipeline_mode<synchronous>, transform_indices = @transform_8, window_bounds = array<i64: 128, 128>}, {pipeline_mode = #tpu.pipeline_mode<synchronous>, transform_indices = @transform_9, window_bounds = array<i64: 1, 128>}, {pipeline_mode = #tpu.pipeline_mode<synchronous>, transform_indices = @transform_10, window_bounds = array<i64: 1, 128>}, {transform_indices = @transform_11, window_bounds = array<i64: 256, 128>}]} {
    %c0 = arith.constant 0 : index
    %c0_0 = arith.constant 0 : index
    %0 = vector.load %arg2[%c0, %c0_0] : memref<256x128xbf16, #tpu.memory_space<vmem>>, vector<256x128xbf16>
    %c0_1 = arith.constant 0 : index
    %c0_2 = arith.constant 0 : index
    %1 = vector.load %arg3[%c0_1, %c0_2] : memref<128x128xbf16, #tpu.memory_space<vmem>>, vector<128x128xbf16>
    %cst = arith.constant dense<0.000000e+00> : vector<256x128xf32>
    %2 = tpu.matmul %0, %1, %cst {dimension_numbers = #tpu.dot_dimension_numbers<[1], [0], [0], [1], [0, 0, 1, 1], [], []>} : vector<256x128xbf16>, vector<128x128xbf16>, vector<256x128xf32> -> vector<256x128xf32>
    %c0_3 = arith.constant 0 : index
    %c0_4 = arith.constant 0 : index
    %3 = vector.load %arg4[%c0_3, %c0_4] : memref<1x128xf32, #tpu.memory_space<vmem>>, vector<1x128xf32>
    %4 = vector.broadcast %3 : vector<1x128xf32> to vector<256x128xf32>
    %5 = arith.mulf %2, %4 : vector<256x128xf32>
    %c0_5 = arith.constant 0 : index
    %c0_6 = arith.constant 0 : index
    %6 = vector.load %arg5[%c0_5, %c0_6] : memref<1x128xf32, #tpu.memory_space<vmem>>, vector<1x128xf32>
    %7 = vector.broadcast %6 : vector<1x128xf32> to vector<256x128xf32>
    %8 = arith.addf %5, %7 : vector<256x128xf32>
    %cst_7 = arith.constant 0.000000e+00 : f32
    %9 = vector.broadcast %cst_7 : f32 to vector<256x128xf32>
    %10 = arith.maximumf %8, %9 : vector<256x128xf32>
    %c17_i32 = arith.constant 17 : i32
    %11 = tpu.dynamic_rotate %10 by %c17_i32 dim 0 : vector<256x128xf32>, i32 -> vector<256x128xf32>
    %c0_8 = arith.constant 0 : index
    %c0_9 = arith.constant 0 : index
    %12 = vector.load %arg1[%c0_8, %c0_9] : memref<256x9xf32, #tpu.memory_space<vmem>>, vector<256x1xf32>
    %13 = vector.broadcast %12 : vector<256x1xf32> to vector<256x128xf32>
    %14 = arith.mulf %11, %13 : vector<256x128xf32>
    %15 = arith.truncf %14 : vector<256x128xf32> to vector<256x128xbf16>
    %c0_10 = arith.constant 0 : index
    %c0_11 = arith.constant 0 : index
    %16 = vector.load %arg13[%c0_10, %c0_11] : memref<256x1152xbf16, #tpu.memory_space<vmem>>, vector<256x128xbf16>
    tpu.vector_store %arg13[%c0_10, %c0_11], %15 {strides = array<i32>} : memref<256x1152xbf16, #tpu.memory_space<vmem>>, vector<256x128xbf16>,
    %c16_i32 = arith.constant 16 : i32
    %17 = tpu.dynamic_rotate %10 by %c16_i32 dim 0 : vector<256x128xf32>, i32 -> vector<256x128xf32>
    %c0_12 = arith.constant 0 : index
    %c1 = arith.constant 1 : index
    %18 = vector.load %arg1[%c0_12, %c1] : memref<256x9xf32, #tpu.memory_space<vmem>>, vector<256x1xf32>
    %19 = vector.broadcast %18 : vector<256x1xf32> to vector<256x128xf32>
    %20 = arith.mulf %17, %19 : vector<256x128xf32>
    %21 = arith.truncf %20 : vector<256x128xf32> to vector<256x128xbf16>
    %c0_13 = arith.constant 0 : index
    %c128 = arith.constant 128 : index
    %22 = vector.load %arg13[%c0_13, %c128] : memref<256x1152xbf16, #tpu.memory_space<vmem>>, vector<256x128xbf16>
    tpu.vector_store %arg13[%c0_13, %c128], %21 {strides = array<i32>} : memref<256x1152xbf16, #tpu.memory_space<vmem>>, vector<256x128xbf16>,
    %c15_i32 = arith.constant 15 : i32
    %23 = tpu.dynamic_rotate %10 by %c15_i32 dim 0 : vector<256x128xf32>, i32 -> vector<256x128xf32>
    %c0_14 = arith.constant 0 : index
    %c2 = arith.constant 2 : index
    %24 = vector.load %arg1[%c0_14, %c2] : memref<256x9xf32, #tpu.memory_space<vmem>>, vector<256x1xf32>
    %25 = vector.broadcast %24 : vector<256x1xf32> to vector<256x128xf32>
    %26 = arith.mulf %23, %25 : vector<256x128xf32>
    %27 = arith.truncf %26 : vector<256x128xf32> to vector<256x128xbf16>
    %c0_15 = arith.constant 0 : index
    %c256 = arith.constant 256 : index
    %28 = vector.load %arg13[%c0_15, %c256] : memref<256x1152xbf16, #tpu.memory_space<vmem>>, vector<256x128xbf16>
    tpu.vector_store %arg13[%c0_15, %c256], %27 {strides = array<i32>} : memref<256x1152xbf16, #tpu.memory_space<vmem>>, vector<256x128xbf16>,
    %c1_i32 = arith.constant 1 : i32
    %29 = tpu.dynamic_rotate %10 by %c1_i32 dim 0 : vector<256x128xf32>, i32 -> vector<256x128xf32>
    %c0_16 = arith.constant 0 : index
    %c3 = arith.constant 3 : index
    %30 = vector.load %arg1[%c0_16, %c3] : memref<256x9xf32, #tpu.memory_space<vmem>>, vector<256x1xf32>
    %31 = vector.broadcast %30 : vector<256x1xf32> to vector<256x128xf32>
    %32 = arith.mulf %29, %31 : vector<256x128xf32>
    %33 = arith.truncf %32 : vector<256x128xf32> to vector<256x128xbf16>
    %c0_17 = arith.constant 0 : index
    %c384 = arith.constant 384 : index
    %34 = vector.load %arg13[%c0_17, %c384] : memref<256x1152xbf16, #tpu.memory_space<vmem>>, vector<256x128xbf16>
    tpu.vector_store %arg13[%c0_17, %c384], %33 {strides = array<i32>} : memref<256x1152xbf16, #tpu.memory_space<vmem>>, vector<256x128xbf16>,
    %35 = arith.truncf %10 : vector<256x128xf32> to vector<256x128xbf16>
    %c0_18 = arith.constant 0 : index
    %c512 = arith.constant 512 : index
    %36 = vector.load %arg13[%c0_18, %c512] : memref<256x1152xbf16, #tpu.memory_space<vmem>>, vector<256x128xbf16>
    tpu.vector_store %arg13[%c0_18, %c512], %35 {strides = array<i32>} : memref<256x1152xbf16, #tpu.memory_space<vmem>>, vector<256x128xbf16>,
    %c255_i32 = arith.constant 255 : i32
    %37 = tpu.dynamic_rotate %10 by %c255_i32 dim 0 : vector<256x128xf32>, i32 -> vector<256x128xf32>
    %c0_19 = arith.constant 0 : index
    %c5 = arith.constant 5 : index
    %38 = vector.load %arg1[%c0_19, %c5] : memref<256x9xf32, #tpu.memory_space<vmem>>, vector<256x1xf32>
    %39 = vector.broadcast %38 : vector<256x1xf32> to vector<256x128xf32>
    %40 = arith.mulf %37, %39 : vector<256x128xf32>
    %41 = arith.truncf %40 : vector<256x128xf32> to vector<256x128xbf16>
    %c0_20 = arith.constant 0 : index
    %c640 = arith.constant 640 : index
    %42 = vector.load %arg13[%c0_20, %c640] : memref<256x1152xbf16, #tpu.memory_space<vmem>>, vector<256x128xbf16>
    tpu.vector_store %arg13[%c0_20, %c640], %41 {strides = array<i32>} : memref<256x1152xbf16, #tpu.memory_space<vmem>>, vector<256x128xbf16>,
    %c241_i32 = arith.constant 241 : i32
    %43 = tpu.dynamic_rotate %10 by %c241_i32 dim 0 : vector<256x128xf32>, i32 -> vector<256x128xf32>
    %c0_21 = arith.constant 0 : index
    %c6 = arith.constant 6 : index
    %44 = vector.load %arg1[%c0_21, %c6] : memref<256x9xf32, #tpu.memory_space<vmem>>, vector<256x1xf32>
    %45 = vector.broadcast %44 : vector<256x1xf32> to vector<256x128xf32>
    %46 = arith.mulf %43, %45 : vector<256x128xf32>
    %47 = arith.truncf %46 : vector<256x128xf32> to vector<256x128xbf16>
    %c0_22 = arith.constant 0 : index
    %c768 = arith.constant 768 : index
    %48 = vector.load %arg13[%c0_22, %c768] : memref<256x1152xbf16, #tpu.memory_space<vmem>>, vector<256x128xbf16>
    tpu.vector_store %arg13[%c0_22, %c768], %47 {strides = array<i32>} : memref<256x1152xbf16, #tpu.memory_space<vmem>>, vector<256x128xbf16>,
    %c240_i32 = arith.constant 240 : i32
    %49 = tpu.dynamic_rotate %10 by %c240_i32 dim 0 : vector<256x128xf32>, i32 -> vector<256x128xf32>
    %c0_23 = arith.constant 0 : index
    %c7 = arith.constant 7 : index
    %50 = vector.load %arg1[%c0_23, %c7] : memref<256x9xf32, #tpu.memory_space<vmem>>, vector<256x1xf32>
    %51 = vector.broadcast %50 : vector<256x1xf32> to vector<256x128xf32>
    %52 = arith.mulf %49, %51 : vector<256x128xf32>
    %53 = arith.truncf %52 : vector<256x128xf32> to vector<256x128xbf16>
    %c0_24 = arith.constant 0 : index
    %c896 = arith.constant 896 : index
    %54 = vector.load %arg13[%c0_24, %c896] : memref<256x1152xbf16, #tpu.memory_space<vmem>>, vector<256x128xbf16>
    tpu.vector_store %arg13[%c0_24, %c896], %53 {strides = array<i32>} : memref<256x1152xbf16, #tpu.memory_space<vmem>>, vector<256x128xbf16>,
    %c239_i32 = arith.constant 239 : i32
    %55 = tpu.dynamic_rotate %10 by %c239_i32 dim 0 : vector<256x128xf32>, i32 -> vector<256x128xf32>
    %c0_25 = arith.constant 0 : index
    %c8 = arith.constant 8 : index
    %56 = vector.load %arg1[%c0_25, %c8] : memref<256x9xf32, #tpu.memory_space<vmem>>, vector<256x1xf32>
    %57 = vector.broadcast %56 : vector<256x1xf32> to vector<256x128xf32>
    %58 = arith.mulf %55, %57 : vector<256x128xf32>
    %59 = arith.truncf %58 : vector<256x128xf32> to vector<256x128xbf16>
    %c0_26 = arith.constant 0 : index
    %c1024 = arith.constant 1024 : index
    %60 = vector.load %arg13[%c0_26, %c1024] : memref<256x1152xbf16, #tpu.memory_space<vmem>>, vector<256x128xbf16>
    tpu.vector_store %arg13[%c0_26, %c1024], %59 {strides = array<i32>} : memref<256x1152xbf16, #tpu.memory_space<vmem>>, vector<256x128xbf16>,
    %c0_27 = arith.constant 0 : index
    %c0_28 = arith.constant 0 : index
    %61 = vector.load %arg13[%c0_27, %c0_28] : memref<256x1152xbf16, #tpu.memory_space<vmem>>, vector<256x1152xbf16>
    %c0_29 = arith.constant 0 : index
    %c0_30 = arith.constant 0 : index
    %62 = vector.load %arg6[%c0_29, %c0_30] : memref<1152x128xbf16, #tpu.memory_space<vmem>>, vector<1152x128xbf16>
    %cst_31 = arith.constant dense<0.000000e+00> : vector<256x128xf32>
    %63 = tpu.matmul %61, %62, %cst_31 {dimension_numbers = #tpu.dot_dimension_numbers<[1], [0], [0], [1], [0, 0, 1, 1], [], []>} : vector<256x1152xbf16>, vector<1152x128xbf16>, vector<256x128xf32> -> vector<256x128xf32>
    %c0_32 = arith.constant 0 : index
    %c0_33 = arith.constant 0 : index
    %64 = vector.load %arg7[%c0_32, %c0_33] : memref<1x128xf32, #tpu.memory_space<vmem>>, vector<1x128xf32>
    %65 = vector.broadcast %64 : vector<1x128xf32> to vector<256x128xf32>
    %66 = arith.mulf %63, %65 : vector<256x128xf32>
    %c0_34 = arith.constant 0 : index
    %c0_35 = arith.constant 0 : index
    %67 = vector.load %arg8[%c0_34, %c0_35] : memref<1x128xf32, #tpu.memory_space<vmem>>, vector<1x128xf32>
    %68 = vector.broadcast %67 : vector<1x128xf32> to vector<256x128xf32>
    %69 = arith.addf %66, %68 : vector<256x128xf32>
    %cst_36 = arith.constant 0.000000e+00 : f32
    %70 = vector.broadcast %cst_36 : f32 to vector<256x128xf32>
    %71 = arith.maximumf %69, %70 : vector<256x128xf32>
    %72 = arith.truncf %71 : vector<256x128xf32> to vector<256x128xbf16>
    %c0_37 = arith.constant 0 : index
    %c0_38 = arith.constant 0 : index
    %73 = vector.load %arg9[%c0_37, %c0_38] : memref<128x128xbf16, #tpu.memory_space<vmem>>, vector<128x128xbf16>
    %cst_39 = arith.constant dense<0.000000e+00> : vector<256x128xf32>
    %74 = tpu.matmul %72, %73, %cst_39 {dimension_numbers = #tpu.dot_dimension_numbers<[1], [0], [0], [1], [0, 0, 1, 1], [], []>} : vector<256x128xbf16>, vector<128x128xbf16>, vector<256x128xf32> -> vector<256x128xf32>
    %c0_40 = arith.constant 0 : index
    %c0_41 = arith.constant 0 : index
    %75 = vector.load %arg10[%c0_40, %c0_41] : memref<1x128xf32, #tpu.memory_space<vmem>>, vector<1x128xf32>
    %76 = vector.broadcast %75 : vector<1x128xf32> to vector<256x128xf32>
    %77 = arith.mulf %74, %76 : vector<256x128xf32>
    %c0_42 = arith.constant 0 : index
    %c0_43 = arith.constant 0 : index
    %78 = vector.load %arg11[%c0_42, %c0_43] : memref<1x128xf32, #tpu.memory_space<vmem>>, vector<1x128xf32>
    %79 = vector.broadcast %78 : vector<1x128xf32> to vector<256x128xf32>
    %80 = arith.addf %77, %79 : vector<256x128xf32>
    %c0_44 = arith.constant 0 : index
    %c0_45 = arith.constant 0 : index
    %81 = vector.load %arg2[%c0_44, %c0_45] : memref<256x128xbf16, #tpu.memory_space<vmem>>, vector<256x128xbf16>
    %82 = arith.extf %81 : vector<256x128xbf16> to vector<256x128xf32>
    %83 = arith.addf %80, %82 : vector<256x128xf32>
    %cst_46 = arith.constant 0.000000e+00 : f32
    %84 = vector.broadcast %cst_46 : f32 to vector<256x128xf32>
    %85 = arith.maximumf %83, %84 : vector<256x128xf32>
    %c0_47 = arith.constant 0 : index
    %c0_48 = arith.constant 0 : index
    %86 = vector.load %arg12[%c0_47, %c0_48] : memref<256x128xf32, #tpu.memory_space<vmem>>, vector<256x128xf32>
    tpu.vector_store %arg12[%c0_47, %c0_48], %85 {strides = array<i32>} : memref<256x128xf32, #tpu.memory_space<vmem>>, vector<256x128xf32>,
    return
  }
  func.func @transform_0(%arg0: i32) -> (i32, i32) {
    %c0_i32 = arith.constant 0 : i32
    %c0_i32_0 = arith.constant 0 : i32
    %c0_i32_1 = arith.constant 0 : i32
    return %c0_i32, %c0_i32_0 : i32, i32
  }
  func.func @transform_1(%arg0: i32) -> (i32, i32) {
    %c0_i32 = arith.constant 0 : i32
    %c0_i32_0 = arith.constant 0 : i32
    return %arg0, %c0_i32 : i32, i32
  }
  func.func @transform_2(%arg0: i32) -> (i32, i32) {
    %c0_i32 = arith.constant 0 : i32
    %c0_i32_0 = arith.constant 0 : i32
    %c0_i32_1 = arith.constant 0 : i32
    return %c0_i32, %c0_i32_0 : i32, i32
  }
  func.func @transform_3(%arg0: i32) -> (i32, i32) {
    %c0_i32 = arith.constant 0 : i32
    %c0_i32_0 = arith.constant 0 : i32
    %c0_i32_1 = arith.constant 0 : i32
    return %c0_i32, %c0_i32_0 : i32, i32
  }
  func.func @transform_4(%arg0: i32) -> (i32, i32) {
    %c0_i32 = arith.constant 0 : i32
    %c0_i32_0 = arith.constant 0 : i32
    %c0_i32_1 = arith.constant 0 : i32
    return %c0_i32, %c0_i32_0 : i32, i32
  }
  func.func @transform_5(%arg0: i32) -> (i32, i32) {
    %c0_i32 = arith.constant 0 : i32
    %c0_i32_0 = arith.constant 0 : i32
    %c0_i32_1 = arith.constant 0 : i32
    return %c0_i32, %c0_i32_0 : i32, i32
  }
  func.func @transform_6(%arg0: i32) -> (i32, i32) {
    %c0_i32 = arith.constant 0 : i32
    %c0_i32_0 = arith.constant 0 : i32
    %c0_i32_1 = arith.constant 0 : i32
    return %c0_i32, %c0_i32_0 : i32, i32
  }
  func.func @transform_7(%arg0: i32) -> (i32, i32) {
    %c0_i32 = arith.constant 0 : i32
    %c0_i32_0 = arith.constant 0 : i32
    %c0_i32_1 = arith.constant 0 : i32
    return %c0_i32, %c0_i32_0 : i32, i32
  }
  func.func @transform_8(%arg0: i32) -> (i32, i32) {
    %c0_i32 = arith.constant 0 : i32
    %c0_i32_0 = arith.constant 0 : i32
    %c0_i32_1 = arith.constant 0 : i32
    return %c0_i32, %c0_i32_0 : i32, i32
  }
  func.func @transform_9(%arg0: i32) -> (i32, i32) {
    %c0_i32 = arith.constant 0 : i32
    %c0_i32_0 = arith.constant 0 : i32
    %c0_i32_1 = arith.constant 0 : i32
    return %c0_i32, %c0_i32_0 : i32, i32
  }
  func.func @transform_10(%arg0: i32) -> (i32, i32) {
    %c0_i32 = arith.constant 0 : i32
    %c0_i32_0 = arith.constant 0 : i32
    %c0_i32_1 = arith.constant 0 : i32
    return %c0_i32, %c0_i32_0 : i32, i32
  }
  func.func @transform_11(%arg0: i32) -> (i32, i32) {
    %c0_i32 = arith.constant 0 : i32
    %c0_i32_0 = arith.constant 0 : i32
    return %arg0, %c0_i32 : i32, i32
  }
}

</mosaic_0001>

<llo_original>
// kernel: tpu_custom_call.1
$region0: #{tpu_custom_call.1}
  #allocation0 [shape = 'u32[]', space=smem, size = 0x4, offset = 0x4, fixed_abs, tag = 'smem constant byte address 0x4 - core index']
  #allocation1 [shape = 'u32[144,128]{1,0:T(1,128)}', space=vmem, size = 0x12000, scoped, tag = 'internal scratch']
  #allocation2 [shape = 'bf16[256,1152]{1,0:T(16,128)(2,1)}', space=vmem, size = 0x90000, scoped, tag = 'scratch operand']
  %s0 = inlined_call_operand.vmem [shape: f32[256,9], index: 0, kind: input, shape index: {}]
  %s1 = inlined_call_operand.vmem [shape: bf16[512,128], index: 1, kind: input, shape index: {}]
  %s2 = inlined_call_operand.hbm [shape: bf16[128,128], index: 2, kind: input, shape index: {}]
  %s3 = inlined_call_operand.vmem [shape: f32[1,128], index: 3, kind: input, shape index: {}]
  %s4 = inlined_call_operand.vmem [shape: f32[1,128], index: 4, kind: input, shape index: {}]
  %s5 = inlined_call_operand.hbm [shape: bf16[1152,128], index: 5, kind: input, shape index: {}]
  %s6 = inlined_call_operand.vmem [shape: f32[1,128], index: 6, kind: input, shape index: {}]
  %s7 = inlined_call_operand.vmem [shape: f32[1,128], index: 7, kind: input, shape index: {}]
  %s8 = inlined_call_operand.hbm [shape: bf16[128,128], index: 8, kind: input, shape index: {}]
  %s9 = inlined_call_operand.vmem [shape: f32[1,128], index: 9, kind: input, shape index: {}]
  %s10 = inlined_call_operand.vmem [shape: f32[1,128], index: 10, kind: input, shape index: {}]
  %s11 = inlined_call_operand.hbm [shape: f32[512,128], index: 11, kind: output, shape index: {}]
  %s12 = sld [smem:[#allocation0]]
  $region89: #{tpu_custom_call.1} parent=0
    _
  %s14 = ssub.s32 1, %s12
  %s15 = scalar_select 0, %s14, %s12
  $region1: #{tpu_custom_call.1} parent=0
    #allocation3 [shape = 'u8[32768]{0}', space=vmem, size = 0x8000, scoped, tag = 'input window, operand 2, single buffered']
    #allocation4 [shape = 's32[2]{0}', space=sflag, size = 0x8, scoped, tag = 'scoped memory for tpu_custom_call.1']
    #allocation5 [shape = 's32[2]{0}', space=sflag, size = 0x8, scoped, tag = 'scoped memory for tpu_custom_call.1']
    #allocation6 [shape = 'u8[294912]{0}', space=vmem, size = 0x48000, scoped, tag = 'input window, operand 5, single buffered']
    #allocation7 [shape = 's32[1]{0}', space=sflag, size = 0x4, scoped, tag = 'scoped memory for tpu_custom_call.1']
    #allocation8 [shape = 'u8[32768]{0}', space=vmem, size = 0x8000, scoped, tag = 'input window, operand 8, single buffered']
    #allocation9 [shape = 'u8[262144]{0}', space=vmem, size = 0x40000, scoped, tag = 'output window, operand 0']
    %16 = vsyncpa [#allocation4], 0
    %17 = vsyncpa [#allocation7], 0
    %18 = vsyncpa [#allocation5], 0
    %s19 = scalar_lea.sflag [#allocation5], 1
    %20 = vsyncpa %s19, 0
    loop: start=0, step=1, limit=4
    $region2: #{tpu_custom_call.1} parent=1 // loop_pre_header
      _
    $region3: #{tpu_custom_call.1} parent=1 // loop_header
      %s22 = sphi 0, %s26
      %p23 = scmp.ge.s32.totalorder %s22, 4
      %s30 = sphi 0, %s30
      %s32 = sphi 0, %s30
      %s33 = sphi 0, %s32
      %s47 = sphi 0, %s33
      %s53 = sphi 0, %s55
      %s56 = sphi 0, %s53
      %s57 = sphi 0, %s56
      %s73 = sphi 0, %s57
      %s77 = sphi 0, %s77
      %s79 = sphi 0, %s77
      %s80 = sphi 0, %s79
      %s94 = sphi 0, %s80
      %s98 = sphi 0, %s98
      %s100 = sphi 0, %s98
      %s101 = sphi 0, %s100
      %s115 = sphi 0, %s101
      %s119 = sphi 0, %s119
      %s121 = sphi 0, %s119
      %s122 = sphi 0, %s121
      %s136 = sphi 0, %s122
      %s140 = sphi 0, %s140
      %s142 = sphi 0, %s140
      %s143 = sphi 0, %s142
      %s157 = sphi 0, %s143
      %s161 = sphi 0, %s161
      %s163 = sphi 0, %s161
      %s164 = sphi 0, %s163
      %s178 = sphi 0, %s164
      %s182 = sphi 0, %s182
      %s184 = sphi 0, %s182
      %s185 = sphi 0, %s184
      %s199 = sphi 0, %s185
      %s203 = sphi 0, %s203
      %s205 = sphi 0, %s203
      %s206 = sphi 0, %s205
      %s220 = sphi 0, %s206
      %s224 = sphi 0, %s224
      %s226 = sphi 0, %s224
      %s227 = sphi 0, %s226
      %s241 = sphi 0, %s227
      %s245 = sphi 0, %s245
      %s247 = sphi 0, %s245
      %s248 = sphi 0, %s247
      %s262 = sphi 0, %s248
      %s268 = sphi 0, %s270
      %s271 = sphi 0, %s268
      %s272 = sphi 0, %s271
      %s288 = sphi 0, %s272
    $region4: #{tpu_custom_call.1} parent=1 // loop_header_branch
      %25 = sbr.rel (%p23) target = $region8
    $region5: #{tpu_custom_call.1} parent=1 // loop_body
      %s27 = ssub.s32 %s22, 1
      %s28 = ssub.s32 %s22, 2
      %s29 = sadd.s32 %s22, 1
      %s31 = sadd.s32 %s30, 1
      %p34 = scmp.eq.s32.totalorder %s22, 1
      %p35 = scmp.ne.s32.totalorder %s30, %s32
      %p36 = scmp.eq.s32.totalorder %s22, 0
      %p37 = por %p35, %p36
      %p38 = scmp.ne.s32.totalorder %s30, %s32
      %p39 = scmp.eq.s32.totalorder %s27, 1
      %p40 = por %p38, %p39
      %p41 = scmp.ne.s32.totalorder %s32, %s33
      %p42 = scmp.eq.s32.totalorder %s27, 0
      %p43 = por %p41, %p42
      %p44 = scmp.ne.s32.totalorder %s32, %s33
      %p45 = scmp.eq.s32.totalorder %s28, 1
      %p46 = por %p44, %p45
      %p48 = scmp.ne.s32.totalorder %s33, %s47
      %p49 = scmp.eq.s32.totalorder %s28, 0
      %p50 = por %p48, %p49
      %s51 = ssub.s32 %s22, %s29
      %p52 = scmp.eq.s32.totalorder %s51, 0
      %s54 = sadd.s32 %s53, 1
      %s55 = scalar_select %p52, %s53, %s54
      %p58 = pneg %p52
      %p59 = scmp.eq.s32.totalorder %s22, 1
      %p60 = por %p58, %p59
      %p61 = scmp.ne.s32.totalorder %s53, %s56
      %p62 = scmp.eq.s32.totalorder %s22, 0
      %p63 = por %p61, %p62
      %p64 = scmp.ne.s32.totalorder %s53, %s56
      %p65 = scmp.eq.s32.totalorder %s27, 1
      %p66 = por %p64, %p65
      %p67 = scmp.ne.s32.totalorder %s56, %s57
      %p68 = scmp.eq.s32.totalorder %s27, 0
      %p69 = por %p67, %p68
      %p70 = scmp.ne.s32.totalorder %s56, %s57
      %p71 = scmp.eq.s32.totalorder %s28, 1
      %p72 = por %p70, %p71
      %p74 = scmp.ne.s32.totalorder %s57, %s73
      %p75 = scmp.eq.s32.totalorder %s28, 0
      %p76 = por %p74, %p75
      %s78 = sadd.s32 %s77, 1
      %p81 = scmp.eq.s32.totalorder %s22, 1
      %p82 = scmp.ne.s32.totalorder %s77, %s79
      %p83 = scmp.eq.s32.totalorder %s22, 0
      %p84 = por %p82, %p83
      %p85 = scmp.ne.s32.totalorder %s77, %s79
      %p86 = scmp.eq.s32.totalorder %s27, 1
      %p87 = por %p85, %p86
      %p88 = scmp.ne.s32.totalorder %s79, %s80
      %p89 = scmp.eq.s32.totalorder %s27, 0
      %p90 = por %p88, %p89
      %p91 = scmp.ne.s32.totalorder %s79, %s80
      %p92 = scmp.eq.s32.totalorder %s28, 1
      %p93 = por %p91, %p92
      %p95 = scmp.ne.s32.totalorder %s80, %s94
      %p96 = scmp.eq.s32.totalorder %s28, 0
      %p97 = por %p95, %p96
      %s99 = sadd.s32 %s98, 1
      %p102 = scmp.eq.s32.totalorder %s22, 1
      %p103 = scmp.ne.s32.totalorder %s98, %s100
      %p104 = scmp.eq.s32.totalorder %s22, 0
      %p105 = por %p103, %p104
      %p106 = scmp.ne.s32.totalorder %s98, %s100
      %p107 = scmp.eq.s32.totalorder %s27, 1
      %p108 = por %p106, %p107
      %p109 = scmp.ne.s32.totalorder %s100, %s101
      %p110 = scmp.eq.s32.totalorder %s27, 0
      %p111 = por %p109, %p110
      %p112 = scmp.ne.s32.totalorder %s100, %s101
      %p113 = scmp.eq.s32.totalorder %s28, 1
      %p114 = por %p112, %p113
      %p116 = scmp.ne.s32.totalorder %s101, %s115
      %p117 = scmp.eq.s32.totalorder %s28, 0
      %p118 = por %p116, %p117
      %s120 = sadd.s32 %s119, 1
      %p123 = scmp.eq.s32.totalorder %s22, 1
      %p124 = scmp.ne.s32.totalorder %s119, %s121
      %p125 = scmp.eq.s32.totalorder %s22, 0
      %p126 = por %p124, %p125
      %p127 = scmp.ne.s32.totalorder %s119, %s121
      %p128 = scmp.eq.s32.totalorder %s27, 1
      %p129 = por %p127, %p128
      %p130 = scmp.ne.s32.totalorder %s121, %s122
      %p131 = scmp.eq.s32.totalorder %s27, 0
      %p132 = por %p130, %p131
      %p133 = scmp.ne.s32.totalorder %s121, %s122
      %p134 = scmp.eq.s32.totalorder %s28, 1
      %p135 = por %p133, %p134
      %p137 = scmp.ne.s32.totalorder %s122, %s136
      %p138 = scmp.eq.s32.totalorder %s28, 0
      %p139 = por %p137, %p138
      %s141 = sadd.s32 %s140, 1
      %p144 = scmp.eq.s32.totalorder %s22, 1
      %p145 = scmp.ne.s32.totalorder %s140, %s142
      %p146 = scmp.eq.s32.totalorder %s22, 0
      %p147 = por %p145, %p146
      %p148 = scmp.ne.s32.totalorder %s140, %s142
      %p149 = scmp.eq.s32.totalorder %s27, 1
      %p150 = por %p148, %p149
      %p151 = scmp.ne.s32.totalorder %s142, %s143
      %p152 = scmp.eq.s32.totalorder %s27, 0
      %p153 = por %p151, %p152
      %p154 = scmp.ne.s32.totalorder %s142, %s143
      %p155 = scmp.eq.s32.totalorder %s28, 1
      %p156 = por %p154, %p155
      %p158 = scmp.ne.s32.totalorder %s143, %s157
      %p159 = scmp.eq.s32.totalorder %s28, 0
      %p160 = por %p158, %p159
      %s162 = sadd.s32 %s161, 1
      %p165 = scmp.eq.s32.totalorder %s22, 1
      %p166 = scmp.ne.s32.totalorder %s161, %s163
      %p167 = scmp.eq.s32.totalorder %s22, 0
      %p168 = por %p166, %p167
      %p169 = scmp.ne.s32.totalorder %s161, %s163
      %p170 = scmp.eq.s32.totalorder %s27, 1
      %p171 = por %p169, %p170
      %p172 = scmp.ne.s32.totalorder %s163, %s164
      %p173 = scmp.eq.s32.totalorder %s27, 0
      %p174 = por %p172, %p173
      %p175 = scmp.ne.s32.totalorder %s163, %s164
      %p176 = scmp.eq.s32.totalorder %s28, 1
      %p177 = por %p175, %p176
      %p179 = scmp.ne.s32.totalorder %s164, %s178
      %p180 = scmp.eq.s32.totalorder %s28, 0
      %p181 = por %p179, %p180
      %s183 = sadd.s32 %s182, 1
      %p186 = scmp.eq.s32.totalorder %s22, 1
      %p187 = scmp.ne.s32.totalorder %s182, %s184
      %p188 = scmp.eq.s32.totalorder %s22, 0
      %p189 = por %p187, %p188
      %p190 = scmp.ne.s32.totalorder %s182, %s184
      %p191 = scmp.eq.s32.totalorder %s27, 1
      %p192 = por %p190, %p191
      %p193 = scmp.ne.s32.totalorder %s184, %s185
      %p194 = scmp.eq.s32.totalorder %s27, 0
      %p195 = por %p193, %p194
      %p196 = scmp.ne.s32.totalorder %s184, %s185
      %p197 = scmp.eq.s32.totalorder %s28, 1
      %p198 = por %p196, %p197
      %p200 = scmp.ne.s32.totalorder %s185, %s199
      %p201 = scmp.eq.s32.totalorder %s28, 0
      %p202 = por %p200, %p201
      %s204 = sadd.s32 %s203, 1
      %p207 = scmp.eq.s32.totalorder %s22, 1
      %p208 = scmp.ne.s32.totalorder %s203, %s205
      %p209 = scmp.eq.s32.totalorder %s22, 0
      %p210 = por %p208, %p209
      %p211 = scmp.ne.s32.totalorder %s203, %s205
      %p212 = scmp.eq.s32.totalorder %s27, 1
      %p213 = por %p211, %p212
      %p214 = scmp.ne.s32.totalorder %s205, %s206
      %p215 = scmp.eq.s32.totalorder %s27, 0
      %p216 = por %p214, %p215
      %p217 = scmp.ne.s32.totalorder %s205, %s206
      %p218 = scmp.eq.s32.totalorder %s28, 1
      %p219 = por %p217, %p218
      %p221 = scmp.ne.s32.totalorder %s206, %s220
      %p222 = scmp.eq.s32.totalorder %s28, 0
      %p223 = por %p221, %p222
      %s225 = sadd.s32 %s224, 1
      %p228 = scmp.eq.s32.totalorder %s22, 1
      %p229 = scmp.ne.s32.totalorder %s224, %s226
      %p230 = scmp.eq.s32.totalorder %s22, 0
      %p231 = por %p229, %p230
      %p232 = scmp.ne.s32.totalorder %s224, %s226
      %p233 = scmp.eq.s32.totalorder %s27, 1
      %p234 = por %p232, %p233
      %p235 = scmp.ne.s32.totalorder %s226, %s227
      %p236 = scmp.eq.s32.totalorder %s27, 0
      %p237 = por %p235, %p236
      %p238 = scmp.ne.s32.totalorder %s226, %s227
      %p239 = scmp.eq.s32.totalorder %s28, 1
      %p240 = por %p238, %p239
      %p242 = scmp.ne.s32.totalorder %s227, %s241
      %p243 = scmp.eq.s32.totalorder %s28, 0
      %p244 = por %p242, %p243
      %s246 = sadd.s32 %s245, 1
      %p249 = scmp.eq.s32.totalorder %s22, 1
      %p250 = scmp.ne.s32.totalorder %s245, %s247
      %p251 = scmp.eq.s32.totalorder %s22, 0
      %p252 = por %p250, %p251
      %p253 = scmp.ne.s32.totalorder %s245, %s247
      %p254 = scmp.eq.s32.totalorder %s27, 1
      %p255 = por %p253, %p254
      %p256 = scmp.ne.s32.totalorder %s247, %s248
      %p257 = scmp.eq.s32.totalorder %s27, 0
      %p258 = por %p256, %p257
      %p259 = scmp.ne.s32.totalorder %s247, %s248
      %p260 = scmp.eq.s32.totalorder %s28, 1
      %p261 = por %p259, %p260
      %p263 = scmp.ne.s32.totalorder %s248, %s262
      %p264 = scmp.eq.s32.totalorder %s28, 0
      %p265 = por %p263, %p264
      %s266 = ssub.s32 %s22, %s29
      %p267 = scmp.eq.s32.totalorder %s266, 0
      %s269 = sadd.s32 %s268, 1
      %s270 = scalar_select %p267, %s268, %s269
      %p273 = pneg %p267
      %p274 = scmp.eq.s32.totalorder %s22, 1
      %p275 = por %p273, %p274
      %p276 = scmp.ne.s32.totalorder %s268, %s271
      %p277 = scmp.eq.s32.totalorder %s22, 0
      %p278 = por %p276, %p277
      %p279 = scmp.ne.s32.totalorder %s268, %s271
      %p280 = scmp.eq.s32.totalorder %s27, 1
      %p281 = por %p279, %p280
      %p282 = scmp.ne.s32.totalorder %s271, %s272
      %p283 = scmp.eq.s32.totalorder %s27, 0
      %p284 = por %p282, %p283
      %p285 = scmp.ne.s32.totalorder %s271, %s272
      %p286 = scmp.eq.s32.totalorder %s28, 1
      %p287 = por %p285, %p286
      %p289 = scmp.ne.s32.totalorder %s272, %s288
      %p290 = scmp.eq.s32.totalorder %s28, 0
      %p291 = por %p289, %p290
      %p292 = scmp.le.s32.totalorder 1, %s22
      %p293 = scmp.lt.s32.totalorder %s22, 3
      %p294 = pnand %p292, %p293
      %p295 = pneg %p294
      // Predicated region
      $region9: #{tpu_custom_call.1} parent=5 // pred_check
        _
      $region10: #{tpu_custom_call.1} parent=5 // pred_check_branch
        %297 = sbr.rel (%p294) target = $region12
      $region11: #{tpu_custom_call.1} parent=5 // pred_region
        %s298 = ssub.s32 %s22, 1
        // Predicated region
        $region13: #{tpu_custom_call.1} parent=11 // pred_check
          %p299 = pneg %p43
        $region14: #{tpu_custom_call.1} parent=11 // pred_check_branch
          %301 = sbr.rel (%p299) target = $region16
        $region15: #{tpu_custom_call.1} parent=11 // pred_region
          _
        $region16: #{tpu_custom_call.1} parent=11 // pred_fallthru
          _
        // Predicated region
        $region17: #{tpu_custom_call.1} parent=11 // pred_check
          %p302 = pneg %p90
        $region18: #{tpu_custom_call.1} parent=11 // pred_check_branch
          %304 = sbr.rel (%p302) target = $region20
        $region19: #{tpu_custom_call.1} parent=11 // pred_region
          %s306 = ssub.s32 1024, 1024
          %307 = vsyncadd [#allocation4], %s306
          %s308 = sshll.u32 [#allocation3], 4
          %s309 = int_to_ptr.vmem [resolvable:$true] %s308
          %314 = dma.hbm_to_vmem [thread:$0]  %s2, 1024, %s309, [#allocation4], 64, 64, 4
        $region20: #{tpu_custom_call.1} parent=11 // pred_fallthru
          _
        // Predicated region
        $region21: #{tpu_custom_call.1} parent=11 // pred_check
          %p315 = pneg %p111
        $region22: #{tpu_custom_call.1} parent=11 // pred_check_branch
          %317 = sbr.rel (%p315) target = $region24
        $region23: #{tpu_custom_call.1} parent=11 // pred_region
          _
        $region24: #{tpu_custom_call.1} parent=11 // pred_fallthru
          _
        // Predicated region
        $region25: #{tpu_custom_call.1} parent=11 // pred_check
          %p318 = pneg %p132
        $region26: #{tpu_custom_call.1} parent=11 // pred_check_branch
          %320 = sbr.rel (%p318) target = $region28
        $region27: #{tpu_custom_call.1} parent=11 // pred_region
          _
        $region28: #{tpu_custom_call.1} parent=11 // pred_fallthru
          _
        // Predicated region
        $region29: #{tpu_custom_call.1} parent=11 // pred_check
          %p321 = pneg %p153
        $region30: #{tpu_custom_call.1} parent=11 // pred_check_branch
          %323 = sbr.rel (%p321) target = $region32
        $region31: #{tpu_custom_call.1} parent=11 // pred_region
          %s325 = ssub.s32 9216, 9216
          %326 = vsyncadd [#allocation7], %s325
          %s327 = sshll.u32 [#allocation6], 4
          %s328 = int_to_ptr.vmem [resolvable:$true] %s327
          %333 = dma.hbm_to_vmem [thread:$0]  %s5, 9216, %s328, [#allocation7], 64, 64, 4
        $region32: #{tpu_custom_call.1} parent=11 // pred_fallthru
          _
        // Predicated region
        $region33: #{tpu_custom_call.1} parent=11 // pred_check
          %p334 = pneg %p174
        $region34: #{tpu_custom_call.1} parent=11 // pred_check_branch
          %336 = sbr.rel (%p334) target = $region36
        $region35: #{tpu_custom_call.1} parent=11 // pred_region
          _
        $region36: #{tpu_custom_call.1} parent=11 // pred_fallthru
          _
        // Predicated region
        $region37: #{tpu_custom_call.1} parent=11 // pred_check
          %p337 = pneg %p195
        $region38: #{tpu_custom_call.1} parent=11 // pred_check_branch
          %339 = sbr.rel (%p337) target = $region40
        $region39: #{tpu_custom_call.1} parent=11 // pred_region
          _
        $region40: #{tpu_custom_call.1} parent=11 // pred_fallthru
          _
        // Predicated region
        $region41: #{tpu_custom_call.1} parent=11 // pred_check
          %p340 = pneg %p216
        $region42: #{tpu_custom_call.1} parent=11 // pred_check_branch
          %342 = sbr.rel (%p340) target = $region44
        $region43: #{tpu_custom_call.1} parent=11 // pred_region
          %s344 = ssub.s32 1024, 1024
          %345 = vsyncadd [#allocation7], %s344
          %s346 = sshll.u32 [#allocation8], 4
          %s347 = int_to_ptr.vmem [resolvable:$true] %s346
          %352 = dma.hbm_to_vmem [thread:$0]  %s8, 1024, %s347, [#allocation7], 64, 64, 4
        $region44: #{tpu_custom_call.1} parent=11 // pred_fallthru
          _
        // Predicated region
        $region45: #{tpu_custom_call.1} parent=11 // pred_check
          %p353 = pneg %p237
        $region46: #{tpu_custom_call.1} parent=11 // pred_check_branch
          %355 = sbr.rel (%p353) target = $region48
        $region47: #{tpu_custom_call.1} parent=11 // pred_region
          _
        $region48: #{tpu_custom_call.1} parent=11 // pred_fallthru
          _
        // Predicated region
        $region49: #{tpu_custom_call.1} parent=11 // pred_check
          %p356 = pneg %p258
        $region50: #{tpu_custom_call.1} parent=11 // pred_check_branch
          %358 = sbr.rel (%p356) target = $region52
        $region51: #{tpu_custom_call.1} parent=11 // pred_region
          _
        $region52: #{tpu_custom_call.1} parent=11 // pred_fallthru
          _
      $region12: #{tpu_custom_call.1} parent=5 // pred_fallthru
        _
      %p359 = scmp.lt.s32.totalorder %s22, 2
      // Predicated region
      $region53: #{tpu_custom_call.1} parent=5 // pred_check
        %p360 = pneg %p359
      $region54: #{tpu_custom_call.1} parent=5 // pred_check_branch
        %362 = sbr.rel (%p360) target = $region56
      $region55: #{tpu_custom_call.1} parent=5 // pred_region
        // Predicated region
        $region57: #{tpu_custom_call.1} parent=55 // pred_check
          %p363 = pneg %p63
        $region58: #{tpu_custom_call.1} parent=55 // pred_check_branch
          %365 = sbr.rel (%p363) target = $region60
        $region59: #{tpu_custom_call.1} parent=55 // pred_region
          %s366 = smul.u32 32, %s22
          %p367 = scmp.lt.s32.totalorder %s366, 63
          %s368 = scalar_select %p367, %s366, 63
          %s369 = smul.addr %s368, 4
          %s370 = scalar_lea.vmem %s1, %s369
          %s371 = smul.u32 32, %s22
        $region60: #{tpu_custom_call.1} parent=55 // pred_fallthru
          _
      $region56: #{tpu_custom_call.1} parent=5 // pred_fallthru
        _
      %p372 = scmp.le.s32.totalorder 1, %s22
      %p373 = scmp.lt.s32.totalorder %s22, 3
      %p374 = pnand %p372, %p373
      %p375 = pneg %p374
      // Predicated region
      $region61: #{tpu_custom_call.1} parent=5 // pred_check
        _
      $region62: #{tpu_custom_call.1} parent=5 // pred_check_branch
        %377 = sbr.rel (%p374) target = $region64
      $region63: #{tpu_custom_call.1} parent=5 // pred_region
        %s378 = ssub.s32 %s22, 1
        // Predicated region
        $region65: #{tpu_custom_call.1} parent=63 // pred_check
          %p379 = pneg %p90
        $region66: #{tpu_custom_call.1} parent=63 // pred_check_branch
          %381 = sbr.rel (%p379) target = $region68
        $region67: #{tpu_custom_call.1} parent=63 // pred_region
          %382 = dma.done [#allocation4], 1024
        $region68: #{tpu_custom_call.1} parent=63 // pred_fallthru
          _
        // Predicated region
        $region69: #{tpu_custom_call.1} parent=63 // pred_check
          %p383 = pneg %p153
        $region70: #{tpu_custom_call.1} parent=63 // pred_check_branch
          %385 = sbr.rel (%p383) target = $region72
        $region71: #{tpu_custom_call.1} parent=63 // pred_region
          %386 = dma.done [#allocation7], 9216
        $region72: #{tpu_custom_call.1} parent=63 // pred_fallthru
          _
        // Predicated region
        $region73: #{tpu_custom_call.1} parent=63 // pred_check
          %p387 = pneg %p216
        $region74: #{tpu_custom_call.1} parent=63 // pred_check_branch
          %389 = sbr.rel (%p387) target = $region76
        $region75: #{tpu_custom_call.1} parent=63 // pred_region
          %390 = dma.done [#allocation7], 1024
        $region76: #{tpu_custom_call.1} parent=63 // pred_fallthru
          _
        %p391 = pneg %p43
        %p392 = pneg %p40
        %s393 = smul.u32 32, %s27
        %p394 = scmp.lt.s32.totalorder %s393, 63
        %s395 = scalar_select %p394, %s393, 63
        %s396 = smul.addr %s395, 4
        %s397 = scalar_lea.vmem %s1, %s396
        %p398 = pneg %p69
        %p399 = pneg %p66
        %p400 = pneg %p90
        %p401 = pneg %p87
        %p402 = pneg %p111
        %p403 = pneg %p108
        %p404 = pneg %p132
        %p405 = pneg %p129
        %p406 = pneg %p153
        %p407 = pneg %p150
        %p408 = pneg %p174
        %p409 = pneg %p171
        %p410 = pneg %p195
        %p411 = pneg %p192
        %p412 = pneg %p216
        %p413 = pneg %p213
        %p414 = pneg %p237
        %p415 = pneg %p234
        %p416 = pneg %p258
        %p417 = pneg %p255
        %p418 = pneg %p284
        %p419 = pneg %p281
        %s420 = sand.u32 %s271, 1
        %s421 = scalar_lea.sflag [#allocation5], %s420
        %s422 = sand.u32 %s271, 1
        %s423 = smul.addr %s422, 256
        %s424 = scalar_lea.vmem [#allocation9], %s423
        %s425 = smul.u32 32, %s27
        %p426 = scmp.lt.s32.totalorder %s425, 63
        %s427 = scalar_select %p426, %s425, 63
        %s428 = smul.addr %s427, 4
        %s429 = scalar_lea.vmem %s1, %s428
        %s430 = smul.u32 32, %s27
        %s431 = smul.u32 32, %s27
        %v433 = vld [vmem:[%s429] sm:$0xf]
        %v434 = vld [vmem:[%s429 + $0x4] sm:$0xf]
        %v435 = vld [vmem:[%s429 + $0x8] sm:$0xf]
        %v436 = vld [vmem:[%s429 + $0xc] sm:$0xf]
        %v437 = vld [vmem:[%s429 + $0x10] sm:$0xf]
        %v438 = vld [vmem:[%s429 + $0x14] sm:$0xf]
        %v439 = vld [vmem:[%s429 + $0x18] sm:$0xf]
        %v440 = vld [vmem:[%s429 + $0x1c] sm:$0xf]
        %v441 = vld [vmem:[%s429 + $0x20] sm:$0xf]
        %v442 = vld [vmem:[%s429 + $0x24] sm:$0xf]
        %v443 = vld [vmem:[%s429 + $0x28] sm:$0xf]
        %v444 = vld [vmem:[%s429 + $0x2c] sm:$0xf]
        %v445 = vld [vmem:[%s429 + $0x30] sm:$0xf]
        %v446 = vld [vmem:[%s429 + $0x34] sm:$0xf]
        %v447 = vld [vmem:[%s429 + $0x38] sm:$0xf]
        %v448 = vld [vmem:[%s429 + $0x3c] sm:$0xf]
        %v449 = vld [vmem:[%s429 + $0x40] sm:$0xf]
        %v450 = vld [vmem:[%s429 + $0x44] sm:$0xf]
        %v451 = vld [vmem:[%s429 + $0x48] sm:$0xf]
        %v452 = vld [vmem:[%s429 + $0x4c] sm:$0xf]
        %v453 = vld [vmem:[%s429 + $0x50] sm:$0xf]
        %v454 = vld [vmem:[%s429 + $0x54] sm:$0xf]
        %v455 = vld [vmem:[%s429 + $0x58] sm:$0xf]
        %v456 = vld [vmem:[%s429 + $0x5c] sm:$0xf]
        %v457 = vld [vmem:[%s429 + $0x60] sm:$0xf]
        %v458 = vld [vmem:[%s429 + $0x64] sm:$0xf]
        %v459 = vld [vmem:[%s429 + $0x68] sm:$0xf]
        %v460 = vld [vmem:[%s429 + $0x6c] sm:$0xf]
        %v461 = vld [vmem:[%s429 + $0x70] sm:$0xf]
        %v462 = vld [vmem:[%s429 + $0x74] sm:$0xf]
        %v463 = vld [vmem:[%s429 + $0x78] sm:$0xf]
        %v464 = vld [vmem:[%s429 + $0x7c] sm:$0xf]
        %v465 = vld [vmem:[#allocation3] sm:$0xf]
        %v466 = vld [vmem:[#allocation3 + $0x4] sm:$0xf]
        %v467 = vld [vmem:[#allocation3 + $0x8] sm:$0xf]
        %v468 = vld [vmem:[#allocation3 + $0xc] sm:$0xf]
        %v469 = vld [vmem:[#allocation3 + $0x10] sm:$0xf]
        %v470 = vld [vmem:[#allocation3 + $0x14] sm:$0xf]
        %v471 = vld [vmem:[#allocation3 + $0x18] sm:$0xf]
        %v472 = vld [vmem:[#allocation3 + $0x1c] sm:$0xf]
        %v473 = vld [vmem:[#allocation3 + $0x20] sm:$0xf]
        %v474 = vld [vmem:[#allocation3 + $0x24] sm:$0xf]
        %v475 = vld [vmem:[#allocation3 + $0x28] sm:$0xf]
        %v476 = vld [vmem:[#allocation3 + $0x2c] sm:$0xf]
        %v477 = vld [vmem:[#allocation3 + $0x30] sm:$0xf]
        %v478 = vld [vmem:[#allocation3 + $0x34] sm:$0xf]
        %v479 = vld [vmem:[#allocation3 + $0x38] sm:$0xf]
        %v480 = vld [vmem:[#allocation3 + $0x3c] sm:$0xf]
        %v513 = vunpack.c.l.b16 %v433
        %v514 = vunpack.c.l.b16 %v434
        %v515 = vunpack.c.l.b16 %v435
        %v516 = vunpack.c.l.b16 %v436
        %v517 = vunpack.c.l.b16 %v437
        %v518 = vunpack.c.l.b16 %v438
        %v519 = vunpack.c.l.b16 %v439
        %v520 = vunpack.c.l.b16 %v440
        %v521 = vunpack.c.l.b16 %v441
        %v522 = vunpack.c.l.b16 %v442
        %v523 = vunpack.c.l.b16 %v443
        %v524 = vunpack.c.l.b16 %v444
        %v525 = vunpack.c.l.b16 %v445
        %v526 = vunpack.c.l.b16 %v446
        %v527 = vunpack.c.l.b16 %v447
        %v528 = vunpack.c.l.b16 %v448
        %v529 = vunpack.c.l.b16 %v449
        %v530 = vunpack.c.l.b16 %v450
        %v531 = vunpack.c.l.b16 %v451
        %v532 = vunpack.c.l.b16 %v452
        %v533 = vunpack.c.l.b16 %v453
        %v534 = vunpack.c.l.b16 %v454
        %v535 = vunpack.c.l.b16 %v455
        %v536 = vunpack.c.l.b16 %v456
        %v537 = vunpack.c.l.b16 %v457
        %v538 = vunpack.c.l.b16 %v458
        %v539 = vunpack.c.l.b16 %v459
        %v540 = vunpack.c.l.b16 %v460
        %v541 = vunpack.c.l.b16 %v461
        %v542 = vunpack.c.l.b16 %v462
        %v543 = vunpack.c.l.b16 %v463
        %v544 = vunpack.c.l.b16 %v464
        %v545 = vpack.c.b16 %v514, %v513
        %v546 = vpack.c.b16 %v516, %v515
        %v547 = vpack.c.b16 %v518, %v517
        %v548 = vpack.c.b16 %v520, %v519
        %v549 = vpack.c.b16 %v522, %v521
        %v550 = vpack.c.b16 %v524, %v523
        %v551 = vpack.c.b16 %v526, %v525
        %v552 = vpack.c.b16 %v528, %v527
        %v553 = vpack.c.b16 %v530, %v529
        %v554 = vpack.c.b16 %v532, %v531
        %v555 = vpack.c.b16 %v534, %v533
        %v556 = vpack.c.b16 %v536, %v535
        %v557 = vpack.c.b16 %v538, %v537
        %v558 = vpack.c.b16 %v540, %v539
        %v559 = vpack.c.b16 %v542, %v541
        %v560 = vpack.c.b16 %v544, %v543
        %v593 = vunpack.c.l.b16 %v465
        %v594 = vunpack.c.l.b16 %v466
        %v595 = vunpack.c.l.b16 %v467
        %v596 = vunpack.c.l.b16 %v468
        %v597 = vunpack.c.l.b16 %v469
        %v598 = vunpack.c.l.b16 %v470
        %v599 = vunpack.c.l.b16 %v471
        %v600 = vunpack.c.l.b16 %v472
        %v601 = vunpack.c.l.b16 %v473
        %v602 = vunpack.c.l.b16 %v474
        %v603 = vunpack.c.l.b16 %v475
        %v604 = vunpack.c.l.b16 %v476
        %v605 = vunpack.c.l.b16 %v477
        %v606 = vunpack.c.l.b16 %v478
        %v607 = vunpack.c.l.b16 %v479
        %v608 = vunpack.c.l.b16 %v480
        %v609 = vpack.c.b16 %v594, %v593
        %v610 = vpack.c.b16 %v596, %v595
        %v611 = vpack.c.b16 %v598, %v597
        %v612 = vpack.c.b16 %v600, %v599
        %v613 = vpack.c.b16 %v602, %v601
        %v614 = vpack.c.b16 %v604, %v603
        %v615 = vpack.c.b16 %v606, %v605
        %v616 = vpack.c.b16 %v608, %v607
        %625 = vmatprep.subr.bf16.mxu0 0
        %626 = vmatpush1.bf16.msra.mxu0 %v609
        %627 = vmatprep.subr.bf16.mxu0 0
        %628 = vmatpush1.bf16.msra.mxu0 %v610
        %629 = vmatprep.subr.bf16.mxu0 0
        %630 = vmatpush1.bf16.msra.mxu0 %v611
        %631 = vmatprep.subr.bf16.mxu0 0
        %632 = vmatpush1.bf16.msra.mxu0 %v612
        %633 = vmatprep.subr.bf16.mxu0 0
        %634 = vmatpush1.bf16.msra.mxu0 %v613
        %635 = vmatprep.subr.bf16.mxu0 0
        %636 = vmatpush1.bf16.msra.mxu0 %v614
        %637 = vmatprep.subr.bf16.mxu0 0
        %638 = vmatpush1.bf16.msra.mxu0 %v615
        %639 = vmatprep.subr.bf16.mxu0 0
        %640 = vmatpush1.bf16.msra.mxu0 %v616
        %641 = vmatprep.subr.bf16.mxu0 0
        %642 = vmatpush1.bf16.msra.mxu0 0
        %643 = vmatprep.subr.bf16.mxu0 0
        %644 = vmatpush1.bf16.msra.mxu0 0
        %645 = vmatprep.subr.bf16.mxu0 0
        %646 = vmatpush1.bf16.msra.mxu0 0
        %647 = vmatprep.subr.bf16.mxu0 0
        %648 = vmatpush1.bf16.msra.mxu0 0
        %649 = vmatprep.subr.bf16.mxu0 0
        %650 = vmatpush1.bf16.msra.mxu0 0
        %651 = vmatprep.subr.bf16.mxu0 0
        %652 = vmatpush1.bf16.msra.mxu0 0
        %653 = vmatprep.subr.bf16.mxu0 0
        %654 = vmatpush1.bf16.msra.mxu0 0
        %655 = vmatprep.subr.bf16.mxu0 0
        %656 = vmatpush1.bf16.msra.mxu0 0
        %657 = vmatprep.mubr.bf16.mxu0 0
        %658 = vmatmul.mubr.bf16.gmra.mrb[0].mxu0 %v545
        %v659 = vpop.f32.mrb[0].mxu0
        %v660 = vadd.f32 0.0, %v659
        %v661 = vpop.f32.mrb[0].mxu0
        %v662 = vpop.f32.mrb[0].mxu0
        %v663 = vadd.f32 0.0, %v662
        %v664 = vpop.f32.mrb[0].mxu0
        %665 = vmatprep.mubr.bf16.mxu0 0
        %666 = vmatmul.mubr.bf16.gmra.mrb[0].mxu0 %v546
        %v667 = vpop.f32.mrb[0].mxu0
        %v668 = vadd.f32 0.0, %v667
        %v669 = vpop.f32.mrb[0].mxu0
        %v670 = vpop.f32.mrb[0].mxu0
        %v671 = vadd.f32 0.0, %v670
        %v672 = vpop.f32.mrb[0].mxu0
        %673 = vmatprep.mubr.bf16.mxu0 0
        %674 = vmatmul.mubr.bf16.gmra.mrb[0].mxu0 %v547
        %v675 = vpop.f32.mrb[0].mxu0
        %v676 = vadd.f32 0.0, %v675
        %v677 = vpop.f32.mrb[0].mxu0
        %v678 = vpop.f32.mrb[0].mxu0
        %v679 = vadd.f32 0.0, %v678
        %v680 = vpop.f32.mrb[0].mxu0
        %681 = vmatprep.mubr.bf16.mxu0 0
        %682 = vmatmul.mubr.bf16.gmra.mrb[0].mxu0 %v548
        %v683 = vpop.f32.mrb[0].mxu0
        %v684 = vadd.f32 0.0, %v683
        %v685 = vpop.f32.mrb[0].mxu0
        %v686 = vpop.f32.mrb[0].mxu0
        %v687 = vadd.f32 0.0, %v686
        %v688 = vpop.f32.mrb[0].mxu0
        %689 = vmatprep.mubr.bf16.mxu0 0
        %690 = vmatmul.mubr.bf16.gmra.mrb[0].mxu0 %v549
        %v691 = vpop.f32.mrb[0].mxu0
        %v692 = vadd.f32 0.0, %v691
        %v693 = vpop.f32.mrb[0].mxu0
        %v694 = vpop.f32.mrb[0].mxu0
        %v695 = vadd.f32 0.0, %v694
        %v696 = vpop.f32.mrb[0].mxu0
        %697 = vmatprep.mubr.bf16.mxu0 0
        %698 = vmatmul.mubr.bf16.gmra.mrb[0].mxu0 %v550
        %v699 = vpop.f32.mrb[0].mxu0
        %v700 = vadd.f32 0.0, %v699
        %v701 = vpop.f32.mrb[0].mxu0
        %v702 = vpop.f32.mrb[0].mxu0
        %v703 = vadd.f32 0.0, %v702
        %v704 = vpop.f32.mrb[0].mxu0
        %705 = vmatprep.mubr.bf16.mxu0 0
        %706 = vmatmul.mubr.bf16.gmra.mrb[0].mxu0 %v551
        %v707 = vpop.f32.mrb[0].mxu0
        %v708 = vadd.f32 0.0, %v707
        %v709 = vpop.f32.mrb[0].mxu0
        %v710 = vpop.f32.mrb[0].mxu0
        %v711 = vadd.f32 0.0, %v710
        %v712 = vpop.f32.mrb[0].mxu0
        %713 = vmatprep.mubr.bf16.mxu0 0
        %714 = vmatmul.mubr.bf16.gmra.mrb[0].mxu0 %v552
        %v715 = vpop.f32.mrb[0].mxu0
        %v716 = vadd.f32 0.0, %v715
        %v717 = vpop.f32.mrb[0].mxu0
        %v718 = vpop.f32.mrb[0].mxu0
        %v719 = vadd.f32 0.0, %v718
        %v720 = vpop.f32.mrb[0].mxu0
        %721 = vmatprep.mubr.bf16.mxu0 0
        %722 = vmatmul.mubr.bf16.gmra.mrb[0].mxu0 %v553
        %v723 = vpop.f32.mrb[0].mxu0
        %v724 = vadd.f32 0.0, %v723
        %v725 = vpop.f32.mrb[0].mxu0
        %v726 = vpop.f32.mrb[0].mxu0
        %v727 = vadd.f32 0.0, %v726
        %v728 = vpop.f32.mrb[0].mxu0
        %729 = vmatprep.mubr.bf16.mxu0 0
        %730 = vmatmul.mubr.bf16.gmra.mrb[0].mxu0 %v554
        %v731 = vpop.f32.mrb[0].mxu0
        %v732 = vadd.f32 0.0, %v731
        %v733 = vpop.f32.mrb[0].mxu0
        %v734 = vpop.f32.mrb[0].mxu0
        %v735 = vadd.f32 0.0, %v734
        %v736 = vpop.f32.mrb[0].mxu0
        %737 = vmatprep.mubr.bf16.mxu0 0
        %738 = vmatmul.mubr.bf16.gmra.mrb[0].mxu0 %v555
        %v739 = vpop.f32.mrb[0].mxu0
        %v740 = vadd.f32 0.0, %v739
        %v741 = vpop.f32.mrb[0].mxu0
        %v742 = vpop.f32.mrb[0].mxu0
        %v743 = vadd.f32 0.0, %v742
        %v744 = vpop.f32.mrb[0].mxu0
        %745 = vmatprep.mubr.bf16.mxu0 0
        %746 = vmatmul.mubr.bf16.gmra.mrb[0].mxu0 %v556
        %v747 = vpop.f32.mrb[0].mxu0
        %v748 = vadd.f32 0.0, %v747
        %v749 = vpop.f32.mrb[0].mxu0
        %v750 = vpop.f32.mrb[0].mxu0
        %v751 = vadd.f32 0.0, %v750
        %v752 = vpop.f32.mrb[0].mxu0
        %753 = vmatprep.mubr.bf16.mxu0 0
        %754 = vmatmul.mubr.bf16.gmra.mrb[0].mxu0 %v557
        %v755 = vpop.f32.mrb[0].mxu0
        %v756 = vadd.f32 0.0, %v755
        %v757 = vpop.f32.mrb[0].mxu0
        %v758 = vpop.f32.mrb[0].mxu0
        %v759 = vadd.f32 0.0, %v758
        %v760 = vpop.f32.mrb[0].mxu0
        %761 = vmatprep.mubr.bf16.mxu0 0
        %762 = vmatmul.mubr.bf16.gmra.mrb[0].mxu0 %v558
        %v763 = vpop.f32.mrb[0].mxu0
        %v764 = vadd.f32 0.0, %v763
        %v765 = vpop.f32.mrb[0].mxu0
        %v766 = vpop.f32.mrb[0].mxu0
        %v767 = vadd.f32 0.0, %v766
        %v768 = vpop.f32.mrb[0].mxu0
        %769 = vmatprep.mubr.bf16.mxu0 0
        %770 = vmatmul.mubr.bf16.gmra.mrb[0].mxu0 %v559
        %v771 = vpop.f32.mrb[0].mxu0
        %v772 = vadd.f32 0.0, %v771
        %v773 = vpop.f32.mrb[0].mxu0
        %v774 = vpop.f32.mrb[0].mxu0
        %v775 = vadd.f32 0.0, %v774
        %v776 = vpop.f32.mrb[0].mxu0
        %777 = vmatprep.mubr.bf16.mxu0 0
        %778 = vmatmul.mubr.bf16.gmra.mrb[0].mxu0 %v560
        %v779 = vpop.f32.mrb[0].mxu0
        %v780 = vadd.f32 0.0, %v779
        %v781 = vpop.f32.mrb[0].mxu0
        %v782 = vpop.f32.mrb[0].mxu0
        %v783 = vadd.f32 0.0, %v782
        %v784 = vpop.f32.mrb[0].mxu0
        %785 = vdwg.mxu0
        %v786 = vld [vmem:[%s3] sm:$0x1]
        %v788 = vlaneseq
        %v789 = vshrl.u32 %v788, 7
        %v790 = vsub.s32 0, %v789
        %v791 = vrot.slane %v786, %v790
        %v793 = vmul.f32 %v660, %v791
        %v794 = vmul.f32 %v663, %v791
        %v795 = vmul.f32 %v668, %v791
        %v796 = vmul.f32 %v671, %v791
        %v797 = vmul.f32 %v676, %v791
        %v798 = vmul.f32 %v679, %v791
        %v799 = vmul.f32 %v684, %v791
        %v800 = vmul.f32 %v687, %v791
        %v801 = vmul.f32 %v692, %v791
        %v802 = vmul.f32 %v695, %v791
        %v803 = vmul.f32 %v700, %v791
        %v804 = vmul.f32 %v703, %v791
        %v805 = vmul.f32 %v708, %v791
        %v806 = vmul.f32 %v711, %v791
        %v807 = vmul.f32 %v716, %v791
        %v808 = vmul.f32 %v719, %v791
        %v809 = vmul.f32 %v724, %v791
        %v810 = vmul.f32 %v727, %v791
        %v811 = vmul.f32 %v732, %v791
        %v812 = vmul.f32 %v735, %v791
        %v813 = vmul.f32 %v740, %v791
        %v814 = vmul.f32 %v743, %v791
        %v815 = vmul.f32 %v748, %v791
        %v816 = vmul.f32 %v751, %v791
        %v817 = vmul.f32 %v756, %v791
        %v818 = vmul.f32 %v759, %v791
        %v819 = vmul.f32 %v764, %v791
        %v820 = vmul.f32 %v767, %v791
        %v821 = vmul.f32 %v772, %v791
        %v822 = vmul.f32 %v775, %v791
        %v823 = vmul.f32 %v780, %v791
        %v824 = vmul.f32 %v783, %v791
        %v825 = vld [vmem:[%s4] sm:$0x1]
        %v827 = vlaneseq
        %v828 = vshrl.u32 %v827, 7
        %v829 = vsub.s32 0, %v828
        %v830 = vrot.slane %v825, %v829
        %v832 = vadd.f32 %v793, %v830
        %v833 = vadd.f32 %v794, %v830
        %v834 = vadd.f32 %v795, %v830
        %v835 = vadd.f32 %v796, %v830
        %v836 = vadd.f32 %v797, %v830
        %v837 = vadd.f32 %v798, %v830
        %v838 = vadd.f32 %v799, %v830
        %v839 = vadd.f32 %v800, %v830
        %v840 = vadd.f32 %v801, %v830
        %v841 = vadd.f32 %v802, %v830
        %v842 = vadd.f32 %v803, %v830
        %v843 = vadd.f32 %v804, %v830
        %v844 = vadd.f32 %v805, %v830
        %v845 = vadd.f32 %v806, %v830
        %v846 = vadd.f32 %v807, %v830
        %v847 = vadd.f32 %v808, %v830
        %v848 = vadd.f32 %v809, %v830
        %v849 = vadd.f32 %v810, %v830
        %v850 = vadd.f32 %v811, %v830
        %v851 = vadd.f32 %v812, %v830
        %v852 = vadd.f32 %v813, %v830
        %v853 = vadd.f32 %v814, %v830
        %v854 = vadd.f32 %v815, %v830
        %v855 = vadd.f32 %v816, %v830
        %v856 = vadd.f32 %v817, %v830
        %v857 = vadd.f32 %v818, %v830
        %v858 = vadd.f32 %v819, %v830
        %v859 = vadd.f32 %v820, %v830
        %v860 = vadd.f32 %v821, %v830
        %v861 = vadd.f32 %v822, %v830
        %v862 = vadd.f32 %v823, %v830
        %v863 = vadd.f32 %v824, %v830
        %v864 = vmax.f32 %v832, 0.0
        %v865 = vmax.f32 %v833, 0.0
        %v866 = vmax.f32 %v834, 0.0
        %v867 = vmax.f32 %v835, 0.0
        %v868 = vmax.f32 %v836, 0.0
        %v869 = vmax.f32 %v837, 0.0
        %v870 = vmax.f32 %v838, 0.0
        %v871 = vmax.f32 %v839, 0.0
        %v872 = vmax.f32 %v840, 0.0
        %v873 = vmax.f32 %v841, 0.0
        %v874 = vmax.f32 %v842, 0.0
        %v875 = vmax.f32 %v843, 0.0
        %v876 = vmax.f32 %v844, 0.0
        %v877 = vmax.f32 %v845, 0.0
        %v878 = vmax.f32 %v846, 0.0
        %v879 = vmax.f32 %v847, 0.0
        %v880 = vmax.f32 %v848, 0.0
        %v881 = vmax.f32 %v849, 0.0
        %v882 = vmax.f32 %v850, 0.0
        %v883 = vmax.f32 %v851, 0.0
        %v884 = vmax.f32 %v852, 0.0
        %v885 = vmax.f32 %v853, 0.0
        %v886 = vmax.f32 %v854, 0.0
        %v887 = vmax.f32 %v855, 0.0
        %v888 = vmax.f32 %v856, 0.0
        %v889 = vmax.f32 %v857, 0.0
        %v890 = vmax.f32 %v858, 0.0
        %v891 = vmax.f32 %v859, 0.0
        %v892 = vmax.f32 %v860, 0.0
        %v893 = vmax.f32 %v861, 0.0
        %v894 = vmax.f32 %v862, 0.0
        %v895 = vmax.f32 %v863, 0.0
        %v896 = vrot.slane %v864, 7
        %v897 = vrot.slane %v865, 7
        %v898 = vrot.slane %v866, 7
        %v899 = vrot.slane %v867, 7
        %v900 = vrot.slane %v868, 7
        %v901 = vrot.slane %v869, 7
        %v902 = vrot.slane %v870, 7
        %v903 = vrot.slane %v871, 7
        %v904 = vrot.slane %v872, 7
        %v905 = vrot.slane %v873, 7
        %v906 = vrot.slane %v874, 7
        %v907 = vrot.slane %v875, 7
        %v908 = vrot.slane %v876, 7
        %v909 = vrot.slane %v877, 7
        %v910 = vrot.slane %v878, 7
        %v911 = vrot.slane %v879, 7
        %v912 = vrot.slane %v880, 7
        %v913 = vrot.slane %v881, 7
        %v914 = vrot.slane %v882, 7
        %v915 = vrot.slane %v883, 7
        %v916 = vrot.slane %v884, 7
        %v917 = vrot.slane %v885, 7
        %v918 = vrot.slane %v886, 7
        %v919 = vrot.slane %v887, 7
        %v920 = vrot.slane %v888, 7
        %v921 = vrot.slane %v889, 7
        %v922 = vrot.slane %v890, 7
        %v923 = vrot.slane %v891, 7
        %v924 = vrot.slane %v892, 7
        %v925 = vrot.slane %v893, 7
        %v926 = vrot.slane %v894, 7
        %v927 = vrot.slane %v895, 7
        %v928 = vlaneseq
        %v929 = vshrl.u32 %v928, 7
        %vm930 = vcmp.lt.s32.totalorder %v929, 1
        %v931 = vsel %vm930, %v926, %v927
        %v932 = vsel %vm930, %v925, %v926
        %v933 = vsel %vm930, %v924, %v925
        %v934 = vsel %vm930, %v923, %v924
        %v935 = vsel %vm930, %v922, %v923
        %v936 = vsel %vm930, %v921, %v922
        %v937 = vsel %vm930, %v920, %v921
        %v938 = vsel %vm930, %v919, %v920
        %v939 = vsel %vm930, %v918, %v919
        %v940 = vsel %vm930, %v917, %v918
        %v941 = vsel %vm930, %v916, %v917
        %v942 = vsel %vm930, %v915, %v916
        %v943 = vsel %vm930, %v914, %v915
        %v944 = vsel %vm930, %v913, %v914
        %v945 = vsel %vm930, %v912, %v913
        %v946 = vsel %vm930, %v911, %v912
        %v947 = vsel %vm930, %v910, %v911
        %v948 = vsel %vm930, %v909, %v910
        %v949 = vsel %vm930, %v908, %v909
        %v950 = vsel %vm930, %v907, %v908
        %v951 = vsel %vm930, %v906, %v907
        %v952 = vsel %vm930, %v905, %v906
        %v953 = vsel %vm930, %v904, %v905
        %v954 = vsel %vm930, %v903, %v904
        %v955 = vsel %vm930, %v902, %v903
        %v956 = vsel %vm930, %v901, %v902
        %v957 = vsel %vm930, %v900, %v901
        %v958 = vsel %vm930, %v899, %v900
        %v959 = vsel %vm930, %v898, %v899
        %v960 = vsel %vm930, %v897, %v898
        %v961 = vsel %vm930, %v896, %v897
        %v962 = vsel %vm930, %v927, %v896
        %v963 = vld [vmem:[%s0] sm:$0xff]
        %v964 = vld [vmem:[%s0 + $0x8] sm:$0xff]
        %v965 = vld [vmem:[%s0 + $0x10] sm:$0xff]
        %v966 = vld [vmem:[%s0 + $0x18] sm:$0xff]
        %v967 = vld [vmem:[%s0 + $0x20] sm:$0xff]
        %v968 = vld [vmem:[%s0 + $0x28] sm:$0xff]
        %v969 = vld [vmem:[%s0 + $0x30] sm:$0xff]
        %v970 = vld [vmem:[%s0 + $0x38] sm:$0xff]
        %v971 = vld [vmem:[%s0 + $0x40] sm:$0xff]
        %v972 = vld [vmem:[%s0 + $0x48] sm:$0xff]
        %v973 = vld [vmem:[%s0 + $0x50] sm:$0xff]
        %v974 = vld [vmem:[%s0 + $0x58] sm:$0xff]
        %v975 = vld [vmem:[%s0 + $0x60] sm:$0xff]
        %v976 = vld [vmem:[%s0 + $0x68] sm:$0xff]
        %v977 = vld [vmem:[%s0 + $0x70] sm:$0xff]
        %v978 = vld [vmem:[%s0 + $0x78] sm:$0xff]
        %v979 = vld [vmem:[%s0 + $0x80] sm:$0xff]
        %v980 = vld [vmem:[%s0 + $0x88] sm:$0xff]
        %v981 = vld [vmem:[%s0 + $0x90] sm:$0xff]
        %v982 = vld [vmem:[%s0 + $0x98] sm:$0xff]
        %v983 = vld [vmem:[%s0 + $0xa0] sm:$0xff]
        %v984 = vld [vmem:[%s0 + $0xa8] sm:$0xff]
        %v985 = vld [vmem:[%s0 + $0xb0] sm:$0xff]
        %v986 = vld [vmem:[%s0 + $0xb8] sm:$0xff]
        %v987 = vld [vmem:[%s0 + $0xc0] sm:$0xff]
        %v988 = vld [vmem:[%s0 + $0xc8] sm:$0xff]
        %v989 = vld [vmem:[%s0 + $0xd0] sm:$0xff]
        %v990 = vld [vmem:[%s0 + $0xd8] sm:$0xff]
        %v991 = vld [vmem:[%s0 + $0xe0] sm:$0xff]
        %v992 = vld [vmem:[%s0 + $0xe8] sm:$0xff]
        %v993 = vld [vmem:[%s0 + $0xf0] sm:$0xff]
        %v994 = vld [vmem:[%s0 + $0xf8] sm:$0xff]
        %996 = vset.pattern.permute.xlu0 0
        %997 = vperm.xlu0 %996, %v963
        %v998 = vpop.permute.xlu0 %997
        %1001 = vset.pattern.permute.xlu0 0
        %1002 = vperm.xlu0 %1001, %v964
        %v1003 = vpop.permute.xlu0 %1002
        %1006 = vset.pattern.permute.xlu0 0
        %1007 = vperm.xlu0 %1006, %v965
        %v1008 = vpop.permute.xlu0 %1007
        %1011 = vset.pattern.permute.xlu0 0
        %1012 = vperm.xlu0 %1011, %v966
        %v1013 = vpop.permute.xlu0 %1012
        %1016 = vset.pattern.permute.xlu0 0
        %1017 = vperm.xlu0 %1016, %v967
        %v1018 = vpop.permute.xlu0 %1017
        %1021 = vset.pattern.permute.xlu0 0
        %1022 = vperm.xlu0 %1021, %v968
        %v1023 = vpop.permute.xlu0 %1022
        %1026 = vset.pattern.permute.xlu0 0
        %1027 = vperm.xlu0 %1026, %v969
        %v1028 = vpop.permute.xlu0 %1027
        %1031 = vset.pattern.permute.xlu0 0
        %1032 = vperm.xlu0 %1031, %v970
        %v1033 = vpop.permute.xlu0 %1032
        %1036 = vset.pattern.permute.xlu0 0
        %1037 = vperm.xlu0 %1036, %v971
        %v1038 = vpop.permute.xlu0 %1037
        %1041 = vset.pattern.permute.xlu0 0
        %1042 = vperm.xlu0 %1041, %v972
        %v1043 = vpop.permute.xlu0 %1042
        %1046 = vset.pattern.permute.xlu0 0
        %1047 = vperm.xlu0 %1046, %v973
        %v1048 = vpop.permute.xlu0 %1047
        %1051 = vset.pattern.permute.xlu0 0
        %1052 = vperm.xlu0 %1051, %v974
        %v1053 = vpop.permute.xlu0 %1052
        %1056 = vset.pattern.permute.xlu0 0
        %1057 = vperm.xlu0 %1056, %v975
        %v1058 = vpop.permute.xlu0 %1057
        %1061 = vset.pattern.permute.xlu0 0
        %1062 = vperm.xlu0 %1061, %v976
        %v1063 = vpop.permute.xlu0 %1062
        %1066 = vset.pattern.permute.xlu0 0
        %1067 = vperm.xlu0 %1066, %v977
        %v1068 = vpop.permute.xlu0 %1067
        %1071 = vset.pattern.permute.xlu0 0
        %1072 = vperm.xlu0 %1071, %v978
        %v1073 = vpop.permute.xlu0 %1072
        %1076 = vset.pattern.permute.xlu0 0
        %1077 = vperm.xlu0 %1076, %v979
        %v1078 = vpop.permute.xlu0 %1077
        %1081 = vset.pattern.permute.xlu0 0
        %1082 = vperm.xlu0 %1081, %v980
        %v1083 = vpop.permute.xlu0 %1082
        %1086 = vset.pattern.permute.xlu0 0
        %1087 = vperm.xlu0 %1086, %v981
        %v1088 = vpop.permute.xlu0 %1087
        %1091 = vset.pattern.permute.xlu0 0
        %1092 = vperm.xlu0 %1091, %v982
        %v1093 = vpop.permute.xlu0 %1092
        %1096 = vset.pattern.permute.xlu0 0
        %1097 = vperm.xlu0 %1096, %v983
        %v1098 = vpop.permute.xlu0 %1097
        %1101 = vset.pattern.permute.xlu0 0
        %1102 = vperm.xlu0 %1101, %v984
        %v1103 = vpop.permute.xlu0 %1102
        %1106 = vset.pattern.permute.xlu0 0
        %1107 = vperm.xlu0 %1106, %v985
        %v1108 = vpop.permute.xlu0 %1107
        %1111 = vset.pattern.permute.xlu0 0
        %1112 = vperm.xlu0 %1111, %v986
        %v1113 = vpop.permute.xlu0 %1112
        %1116 = vset.pattern.permute.xlu0 0
        %1117 = vperm.xlu0 %1116, %v987
        %v1118 = vpop.permute.xlu0 %1117
        %1121 = vset.pattern.permute.xlu0 0
        %1122 = vperm.xlu0 %1121, %v988
        %v1123 = vpop.permute.xlu0 %1122
        %1126 = vset.pattern.permute.xlu0 0
        %1127 = vperm.xlu0 %1126, %v989
        %v1128 = vpop.permute.xlu0 %1127
        %1131 = vset.pattern.permute.xlu0 0
        %1132 = vperm.xlu0 %1131, %v990
        %v1133 = vpop.permute.xlu0 %1132
        %1136 = vset.pattern.permute.xlu0 0
        %1137 = vperm.xlu0 %1136, %v991
        %v1138 = vpop.permute.xlu0 %1137
        %1141 = vset.pattern.permute.xlu0 0
        %1142 = vperm.xlu0 %1141, %v992
        %v1143 = vpop.permute.xlu0 %1142
        %1146 = vset.pattern.permute.xlu0 0
        %1147 = vperm.xlu0 %1146, %v993
        %v1148 = vpop.permute.xlu0 %1147
        %1151 = vset.pattern.permute.xlu0 0
        %1152 = vperm.xlu0 %1151, %v994
        %v1153 = vpop.permute.xlu0 %1152
        %v1155 = vmul.f32 %v932, %v998
        %v1156 = vmul.f32 %v931, %v1003
        %v1157 = vmul.f32 %v962, %v1008
        %v1158 = vmul.f32 %v961, %v1013
        %v1159 = vmul.f32 %v960, %v1018
        %v1160 = vmul.f32 %v959, %v1023
        %v1161 = vmul.f32 %v958, %v1028
        %v1162 = vmul.f32 %v957, %v1033
        %v1163 = vmul.f32 %v956, %v1038
        %v1164 = vmul.f32 %v955, %v1043
        %v1165 = vmul.f32 %v954, %v1048
        %v1166 = vmul.f32 %v953, %v1053
        %v1167 = vmul.f32 %v952, %v1058
        %v1168 = vmul.f32 %v951, %v1063
        %v1169 = vmul.f32 %v950, %v1068
        %v1170 = vmul.f32 %v949, %v1073
        %v1171 = vmul.f32 %v948, %v1078
        %v1172 = vmul.f32 %v947, %v1083
        %v1173 = vmul.f32 %v946, %v1088
        %v1174 = vmul.f32 %v945, %v1093
        %v1175 = vmul.f32 %v944, %v1098
        %v1176 = vmul.f32 %v943, %v1103
        %v1177 = vmul.f32 %v942, %v1108
        %v1178 = vmul.f32 %v941, %v1113
        %v1179 = vmul.f32 %v940, %v1118
        %v1180 = vmul.f32 %v939, %v1123
        %v1181 = vmul.f32 %v938, %v1128
        %v1182 = vmul.f32 %v937, %v1133
        %v1183 = vmul.f32 %v936, %v1138
        %v1184 = vmul.f32 %v935, %v1143
        %v1185 = vmul.f32 %v934, %v1148
        %v1186 = vmul.f32 %v933, %v1153
        %v1187 = vpack.c.bf16 %v1156, %v1155
        %v1188 = vpack.c.bf16 %v1158, %v1157
        %v1189 = vpack.c.bf16 %v1160, %v1159
        %v1190 = vpack.c.bf16 %v1162, %v1161
        %v1191 = vpack.c.bf16 %v1164, %v1163
        %v1192 = vpack.c.bf16 %v1166, %v1165
        %v1193 = vpack.c.bf16 %v1168, %v1167
        %v1194 = vpack.c.bf16 %v1170, %v1169
        %v1195 = vpack.c.bf16 %v1172, %v1171
        %v1196 = vpack.c.bf16 %v1174, %v1173
        %v1197 = vpack.c.bf16 %v1176, %v1175
        %v1198 = vpack.c.bf16 %v1178, %v1177
        %v1199 = vpack.c.bf16 %v1180, %v1179
        %v1200 = vpack.c.bf16 %v1182, %v1181
        %v1201 = vpack.c.bf16 %v1184, %v1183
        %v1202 = vpack.c.bf16 %v1186, %v1185
        %1203 = vst [vmem:[#allocation2] sm:$0xff] %v1187
        %1204 = vst [vmem:[#allocation2 + $0x48] sm:$0xff] %v1188
        %1205 = vst [vmem:[#allocation2 + $0x90] sm:$0xff] %v1189
        %1206 = vst [vmem:[#allocation2 + $0xd8] sm:$0xff] %v1190
        %1207 = vst [vmem:[#allocation2 + $0x120] sm:$0xff] %v1191
        %1208 = vst [vmem:[#allocation2 + $0x168] sm:$0xff] %v1192
        %1209 = vst [vmem:[#allocation2 + $0x1b0] sm:$0xff] %v1193
        %1210 = vst [vmem:[#allocation2 + $0x1f8] sm:$0xff] %v1194
        %1211 = vst [vmem:[#allocation2 + $0x240] sm:$0xff] %v1195
        %1212 = vst [vmem:[#allocation2 + $0x288] sm:$0xff] %v1196
        %1213 = vst [vmem:[#allocation2 + $0x2d0] sm:$0xff] %v1197
        %1214 = vst [vmem:[#allocation2 + $0x318] sm:$0xff] %v1198
        %1215 = vst [vmem:[#allocation2 + $0x360] sm:$0xff] %v1199
        %1216 = vst [vmem:[#allocation2 + $0x3a8] sm:$0xff] %v1200
        %1217 = vst [vmem:[#allocation2 + $0x3f0] sm:$0xff] %v1201
        %1218 = vst [vmem:[#allocation2 + $0x438] sm:$0xff] %v1202
        %v1219 = vld [vmem:[%s0] sm:$0xff]
        %v1220 = vld [vmem:[%s0 + $0x8] sm:$0xff]
        %v1221 = vld [vmem:[%s0 + $0x10] sm:$0xff]
        %v1222 = vld [vmem:[%s0 + $0x18] sm:$0xff]
        %v1223 = vld [vmem:[%s0 + $0x20] sm:$0xff]
        %v1224 = vld [vmem:[%s0 + $0x28] sm:$0xff]
        %v1225 = vld [vmem:[%s0 + $0x30] sm:$0xff]
        %v1226 = vld [vmem:[%s0 + $0x38] sm:$0xff]
        %v1227 = vld [vmem:[%s0 + $0x40] sm:$0xff]
        %v1228 = vld [vmem:[%s0 + $0x48] sm:$0xff]
        %v1229 = vld [vmem:[%s0 + $0x50] sm:$0xff]
        %v1230 = vld [vmem:[%s0 + $0x58] sm:$0xff]
        %v1231 = vld [vmem:[%s0 + $0x60] sm:$0xff]
        %v1232 = vld [vmem:[%s0 + $0x68] sm:$0xff]
        %v1233 = vld [vmem:[%s0 + $0x70] sm:$0xff]
        %v1234 = vld [vmem:[%s0 + $0x78] sm:$0xff]
        %v1235 = vld [vmem:[%s0 + $0x80] sm:$0xff]
        %v1236 = vld [vmem:[%s0 + $0x88] sm:$0xff]
        %v1237 = vld [vmem:[%s0 + $0x90] sm:$0xff]
        %v1238 = vld [vmem:[%s0 + $0x98] sm:$0xff]
        %v1239 = vld [vmem:[%s0 + $0xa0] sm:$0xff]
        %v1240 = vld [vmem:[%s0 + $0xa8] sm:$0xff]
        %v1241 = vld [vmem:[%s0 + $0xb0] sm:$0xff]
        %v1242 = vld [vmem:[%s0 + $0xb8] sm:$0xff]
        %v1243 = vld [vmem:[%s0 + $0xc0] sm:$0xff]
        %v1244 = vld [vmem:[%s0 + $0xc8] sm:$0xff]
        %v1245 = vld [vmem:[%s0 + $0xd0] sm:$0xff]
        %v1246 = vld [vmem:[%s0 + $0xd8] sm:$0xff]
        %v1247 = vld [vmem:[%s0 + $0xe0] sm:$0xff]
        %v1248 = vld [vmem:[%s0 + $0xe8] sm:$0xff]
        %v1249 = vld [vmem:[%s0 + $0xf0] sm:$0xff]
        %v1250 = vld [vmem:[%s0 + $0xf8] sm:$0xff]
        %1252 = vset.pattern.permute.xlu0 1
        %1253 = vperm.xlu0 %1252, %v1219
        %v1254 = vpop.permute.xlu0 %1253
        %1257 = vset.pattern.permute.xlu0 1
        %1258 = vperm.xlu0 %1257, %v1220
        %v1259 = vpop.permute.xlu0 %1258
        %1262 = vset.pattern.permute.xlu0 1
        %1263 = vperm.xlu0 %1262, %v1221
        %v1264 = vpop.permute.xlu0 %1263
        %1267 = vset.pattern.permute.xlu0 1
        %1268 = vperm.xlu0 %1267, %v1222
        %v1269 = vpop.permute.xlu0 %1268
        %1272 = vset.pattern.permute.xlu0 1
        %1273 = vperm.xlu0 %1272, %v1223
        %v1274 = vpop.permute.xlu0 %1273
        %1277 = vset.pattern.permute.xlu0 1
        %1278 = vperm.xlu0 %1277, %v1224
        %v1279 = vpop.permute.xlu0 %1278
        %1282 = vset.pattern.permute.xlu0 1
        %1283 = vperm.xlu0 %1282, %v1225
        %v1284 = vpop.permute.xlu0 %1283
        %1287 = vset.pattern.permute.xlu0 1
        %1288 = vperm.xlu0 %1287, %v1226
        %v1289 = vpop.permute.xlu0 %1288
        %1292 = vset.pattern.permute.xlu0 1
        %1293 = vperm.xlu0 %1292, %v1227
        %v1294 = vpop.permute.xlu0 %1293
        %1297 = vset.pattern.permute.xlu0 1
        %1298 = vperm.xlu0 %1297, %v1228
        %v1299 = vpop.permute.xlu0 %1298
        %1302 = vset.pattern.permute.xlu0 1
        %1303 = vperm.xlu0 %1302, %v1229
        %v1304 = vpop.permute.xlu0 %1303
        %1307 = vset.pattern.permute.xlu0 1
        %1308 = vperm.xlu0 %1307, %v1230
        %v1309 = vpop.permute.xlu0 %1308
        %1312 = vset.pattern.permute.xlu0 1
        %1313 = vperm.xlu0 %1312, %v1231
        %v1314 = vpop.permute.xlu0 %1313
        %1317 = vset.pattern.permute.xlu0 1
        %1318 = vperm.xlu0 %1317, %v1232
        %v1319 = vpop.permute.xlu0 %1318
        %1322 = vset.pattern.permute.xlu0 1
        %1323 = vperm.xlu0 %1322, %v1233
        %v1324 = vpop.permute.xlu0 %1323
        %1327 = vset.pattern.permute.xlu0 1
        %1328 = vperm.xlu0 %1327, %v1234
        %v1329 = vpop.permute.xlu0 %1328
        %1332 = vset.pattern.permute.xlu0 1
        %1333 = vperm.xlu0 %1332, %v1235
        %v1334 = vpop.permute.xlu0 %1333
        %1337 = vset.pattern.permute.xlu0 1
        %1338 = vperm.xlu0 %1337, %v1236
        %v1339 = vpop.permute.xlu0 %1338
        %1342 = vset.pattern.permute.xlu0 1
        %1343 = vperm.xlu0 %1342, %v1237
        %v1344 = vpop.permute.xlu0 %1343
        %1347 = vset.pattern.permute.xlu0 1
        %1348 = vperm.xlu0 %1347, %v1238
        %v1349 = vpop.permute.xlu0 %1348
        %1352 = vset.pattern.permute.xlu0 1
        %1353 = vperm.xlu0 %1352, %v1239
        %v1354 = vpop.permute.xlu0 %1353
        %1357 = vset.pattern.permute.xlu0 1
        %1358 = vperm.xlu0 %1357, %v1240
        %v1359 = vpop.permute.xlu0 %1358
        %1362 = vset.pattern.permute.xlu0 1
        %1363 = vperm.xlu0 %1362, %v1241
        %v1364 = vpop.permute.xlu0 %1363
        %1367 = vset.pattern.permute.xlu0 1
        %1368 = vperm.xlu0 %1367, %v1242
        %v1369 = vpop.permute.xlu0 %1368
        %1372 = vset.pattern.permute.xlu0 1
        %1373 = vperm.xlu0 %1372, %v1243
        %v1374 = vpop.permute.xlu0 %1373
        %1377 = vset.pattern.permute.xlu0 1
        %1378 = vperm.xlu0 %1377, %v1244
        %v1379 = vpop.permute.xlu0 %1378
        %1382 = vset.pattern.permute.xlu0 1
        %1383 = vperm.xlu0 %1382, %v1245
        %v1384 = vpop.permute.xlu0 %1383
        %1387 = vset.pattern.permute.xlu0 1
        %1388 = vperm.xlu0 %1387, %v1246
        %v1389 = vpop.permute.xlu0 %1388
        %1392 = vset.pattern.permute.xlu0 1
        %1393 = vperm.xlu0 %1392, %v1247
        %v1394 = vpop.permute.xlu0 %1393
        %1397 = vset.pattern.permute.xlu0 1
        %1398 = vperm.xlu0 %1397, %v1248
        %v1399 = vpop.permute.xlu0 %1398
        %1402 = vset.pattern.permute.xlu0 1
        %1403 = vperm.xlu0 %1402, %v1249
        %v1404 = vpop.permute.xlu0 %1403
        %1407 = vset.pattern.permute.xlu0 1
        %1408 = vperm.xlu0 %1407, %v1250
        %v1409 = vpop.permute.xlu0 %1408
        %v1411 = vmul.f32 %v894, %v1254
        %v1412 = vmul.f32 %v895, %v1259
        %v1413 = vmul.f32 %v864, %v1264
        %v1414 = vmul.f32 %v865, %v1269
        %v1415 = vmul.f32 %v866, %v1274
        %v1416 = vmul.f32 %v867, %v1279
        %v1417 = vmul.f32 %v868, %v1284
        %v1418 = vmul.f32 %v869, %v1289
        %v1419 = vmul.f32 %v870, %v1294
        %v1420 = vmul.f32 %v871, %v1299
        %v1421 = vmul.f32 %v872, %v1304
        %v1422 = vmul.f32 %v873, %v1309
        %v1423 = vmul.f32 %v874, %v1314
        %v1424 = vmul.f32 %v875, %v1319
        %v1425 = vmul.f32 %v876, %v1324
        %v1426 = vmul.f32 %v877, %v1329
        %v1427 = vmul.f32 %v878, %v1334
        %v1428 = vmul.f32 %v879, %v1339
        %v1429 = vmul.f32 %v880, %v1344
        %v1430 = vmul.f32 %v881, %v1349
        %v1431 = vmul.f32 %v882, %v1354
        %v1432 = vmul.f32 %v883, %v1359
        %v1433 = vmul.f32 %v884, %v1364
        %v1434 = vmul.f32 %v885, %v1369
        %v1435 = vmul.f32 %v886, %v1374
        %v1436 = vmul.f32 %v887, %v1379
        %v1437 = vmul.f32 %v888, %v1384
        %v1438 = vmul.f32 %v889, %v1389
        %v1439 = vmul.f32 %v890, %v1394
        %v1440 = vmul.f32 %v891, %v1399
        %v1441 = vmul.f32 %v892, %v1404
        %v1442 = vmul.f32 %v893, %v1409
        %v1443 = vpack.c.bf16 %v1412, %v1411
        %v1444 = vpack.c.bf16 %v1414, %v1413
        %v1445 = vpack.c.bf16 %v1416, %v1415
        %v1446 = vpack.c.bf16 %v1418, %v1417
        %v1447 = vpack.c.bf16 %v1420, %v1419
        %v1448 = vpack.c.bf16 %v1422, %v1421
        %v1449 = vpack.c.bf16 %v1424, %v1423
        %v1450 = vpack.c.bf16 %v1426, %v1425
        %v1451 = vpack.c.bf16 %v1428, %v1427
        %v1452 = vpack.c.bf16 %v1430, %v1429
        %v1453 = vpack.c.bf16 %v1432, %v1431
        %v1454 = vpack.c.bf16 %v1434, %v1433
        %v1455 = vpack.c.bf16 %v1436, %v1435
        %v1456 = vpack.c.bf16 %v1438, %v1437
        %v1457 = vpack.c.bf16 %v1440, %v1439
        %v1458 = vpack.c.bf16 %v1442, %v1441
        %1459 = vst [vmem:[#allocation2 + $0x8] sm:$0xff] %v1443
        %1460 = vst [vmem:[#allocation2 + $0x50] sm:$0xff] %v1444
        %1461 = vst [vmem:[#allocation2 + $0x98] sm:$0xff] %v1445
        %1462 = vst [vmem:[#allocation2 + $0xe0] sm:$0xff] %v1446
        %1463 = vst [vmem:[#allocation2 + $0x128] sm:$0xff] %v1447
        %1464 = vst [vmem:[#allocation2 + $0x170] sm:$0xff] %v1448
        %1465 = vst [vmem:[#allocation2 + $0x1b8] sm:$0xff] %v1449
        %1466 = vst [vmem:[#allocation2 + $0x200] sm:$0xff] %v1450
        %1467 = vst [vmem:[#allocation2 + $0x248] sm:$0xff] %v1451
        %1468 = vst [vmem:[#allocation2 + $0x290] sm:$0xff] %v1452
        %1469 = vst [vmem:[#allocation2 + $0x2d8] sm:$0xff] %v1453
        %1470 = vst [vmem:[#allocation2 + $0x320] sm:$0xff] %v1454
        %1471 = vst [vmem:[#allocation2 + $0x368] sm:$0xff] %v1455
        %1472 = vst [vmem:[#allocation2 + $0x3b0] sm:$0xff] %v1456
        %1473 = vst [vmem:[#allocation2 + $0x3f8] sm:$0xff] %v1457
        %1474 = vst [vmem:[#allocation2 + $0x440] sm:$0xff] %v1458
        %v1475 = vrot.slane %v864, 1
        %v1476 = vrot.slane %v865, 1
        %v1477 = vrot.slane %v866, 1
        %v1478 = vrot.slane %v867, 1
        %v1479 = vrot.slane %v868, 1
        %v1480 = vrot.slane %v869, 1
        %v1481 = vrot.slane %v870, 1
        %v1482 = vrot.slane %v871, 1
        %v1483 = vrot.slane %v872, 1
        %v1484 = vrot.slane %v873, 1
        %v1485 = vrot.slane %v874, 1
        %v1486 = vrot.slane %v875, 1
        %v1487 = vrot.slane %v876, 1
        %v1488 = vrot.slane %v877, 1
        %v1489 = vrot.slane %v878, 1
        %v1490 = vrot.slane %v879, 1
        %v1491 = vrot.slane %v880, 1
        %v1492 = vrot.slane %v881, 1
        %v1493 = vrot.slane %v882, 1
        %v1494 = vrot.slane %v883, 1
        %v1495 = vrot.slane %v884, 1
        %v1496 = vrot.slane %v885, 1
        %v1497 = vrot.slane %v886, 1
        %v1498 = vrot.slane %v887, 1
        %v1499 = vrot.slane %v888, 1
        %v1500 = vrot.slane %v889, 1
        %v1501 = vrot.slane %v890, 1
        %v1502 = vrot.slane %v891, 1
        %v1503 = vrot.slane %v892, 1
        %v1504 = vrot.slane %v893, 1
        %v1505 = vrot.slane %v894, 1
        %v1506 = vrot.slane %v895, 1
        %vm1507 = vcmp.lt.s32.totalorder %v929, 7
        %v1508 = vsel %vm1507, %v1505, %v1506
        %v1509 = vsel %vm1507, %v1504, %v1505
        %v1510 = vsel %vm1507, %v1503, %v1504
        %v1511 = vsel %vm1507, %v1502, %v1503
        %v1512 = vsel %vm1507, %v1501, %v1502
        %v1513 = vsel %vm1507, %v1500, %v1501
        %v1514 = vsel %vm1507, %v1499, %v1500
        %v1515 = vsel %vm1507, %v1498, %v1499
        %v1516 = vsel %vm1507, %v1497, %v1498
        %v1517 = vsel %vm1507, %v1496, %v1497
        %v1518 = vsel %vm1507, %v1495, %v1496
        %v1519 = vsel %vm1507, %v1494, %v1495
        %v1520 = vsel %vm1507, %v1493, %v1494
        %v1521 = vsel %vm1507, %v1492, %v1493
        %v1522 = vsel %vm1507, %v1491, %v1492
        %v1523 = vsel %vm1507, %v1490, %v1491
        %v1524 = vsel %vm1507, %v1489, %v1490
        %v1525 = vsel %vm1507, %v1488, %v1489
        %v1526 = vsel %vm1507, %v1487, %v1488
        %v1527 = vsel %vm1507, %v1486, %v1487
        %v1528 = vsel %vm1507, %v1485, %v1486
        %v1529 = vsel %vm1507, %v1484, %v1485
        %v1530 = vsel %vm1507, %v1483, %v1484
        %v1531 = vsel %vm1507, %v1482, %v1483
        %v1532 = vsel %vm1507, %v1481, %v1482
        %v1533 = vsel %vm1507, %v1480, %v1481
        %v1534 = vsel %vm1507, %v1479, %v1480
        %v1535 = vsel %vm1507, %v1478, %v1479
        %v1536 = vsel %vm1507, %v1477, %v1478
        %v1537 = vsel %vm1507, %v1476, %v1477
        %v1538 = vsel %vm1507, %v1475, %v1476
        %v1539 = vsel %vm1507, %v1506, %v1475
        %v1540 = vld [vmem:[%s0] sm:$0xff]
        %v1541 = vld [vmem:[%s0 + $0x8] sm:$0xff]
        %v1542 = vld [vmem:[%s0 + $0x10] sm:$0xff]
        %v1543 = vld [vmem:[%s0 + $0x18] sm:$0xff]
        %v1544 = vld [vmem:[%s0 + $0x20] sm:$0xff]
        %v1545 = vld [vmem:[%s0 + $0x28] sm:$0xff]
        %v1546 = vld [vmem:[%s0 + $0x30] sm:$0xff]
        %v1547 = vld [vmem:[%s0 + $0x38] sm:$0xff]
        %v1548 = vld [vmem:[%s0 + $0x40] sm:$0xff]
        %v1549 = vld [vmem:[%s0 + $0x48] sm:$0xff]
        %v1550 = vld [vmem:[%s0 + $0x50] sm:$0xff]
        %v1551 = vld [vmem:[%s0 + $0x58] sm:$0xff]
        %v1552 = vld [vmem:[%s0 + $0x60] sm:$0xff]
        %v1553 = vld [vmem:[%s0 + $0x68] sm:$0xff]
        %v1554 = vld [vmem:[%s0 + $0x70] sm:$0xff]
        %v1555 = vld [vmem:[%s0 + $0x78] sm:$0xff]
        %v1556 = vld [vmem:[%s0 + $0x80] sm:$0xff]
        %v1557 = vld [vmem:[%s0 + $0x88] sm:$0xff]
        %v1558 = vld [vmem:[%s0 + $0x90] sm:$0xff]
        %v1559 = vld [vmem:[%s0 + $0x98] sm:$0xff]
        %v1560 = vld [vmem:[%s0 + $0xa0] sm:$0xff]
        %v1561 = vld [vmem:[%s0 + $0xa8] sm:$0xff]
        %v1562 = vld [vmem:[%s0 + $0xb0] sm:$0xff]
        %v1563 = vld [vmem:[%s0 + $0xb8] sm:$0xff]
        %v1564 = vld [vmem:[%s0 + $0xc0] sm:$0xff]
        %v1565 = vld [vmem:[%s0 + $0xc8] sm:$0xff]
        %v1566 = vld [vmem:[%s0 + $0xd0] sm:$0xff]
        %v1567 = vld [vmem:[%s0 + $0xd8] sm:$0xff]
        %v1568 = vld [vmem:[%s0 + $0xe0] sm:$0xff]
        %v1569 = vld [vmem:[%s0 + $0xe8] sm:$0xff]
        %v1570 = vld [vmem:[%s0 + $0xf0] sm:$0xff]
        %v1571 = vld [vmem:[%s0 + $0xf8] sm:$0xff]
        %1573 = vset.pattern.permute.xlu0 2
        %1574 = vperm.xlu0 %1573, %v1540
        %v1575 = vpop.permute.xlu0 %1574
        %1578 = vset.pattern.permute.xlu0 2
        %1579 = vperm.xlu0 %1578, %v1541
        %v1580 = vpop.permute.xlu0 %1579
        %1583 = vset.pattern.permute.xlu0 2
        %1584 = vperm.xlu0 %1583, %v1542
        %v1585 = vpop.permute.xlu0 %1584
        %1588 = vset.pattern.permute.xlu0 2
        %1589 = vperm.xlu0 %1588, %v1543
        %v1590 = vpop.permute.xlu0 %1589
        %1593 = vset.pattern.permute.xlu0 2
        %1594 = vperm.xlu0 %1593, %v1544
        %v1595 = vpop.permute.xlu0 %1594
        %1598 = vset.pattern.permute.xlu0 2
        %1599 = vperm.xlu0 %1598, %v1545
        %v1600 = vpop.permute.xlu0 %1599
        %1603 = vset.pattern.permute.xlu0 2
        %1604 = vperm.xlu0 %1603, %v1546
        %v1605 = vpop.permute.xlu0 %1604
        %1608 = vset.pattern.permute.xlu0 2
        %1609 = vperm.xlu0 %1608, %v1547
        %v1610 = vpop.permute.xlu0 %1609
        %1613 = vset.pattern.permute.xlu0 2
        %1614 = vperm.xlu0 %1613, %v1548
        %v1615 = vpop.permute.xlu0 %1614
        %1618 = vset.pattern.permute.xlu0 2
        %1619 = vperm.xlu0 %1618, %v1549
        %v1620 = vpop.permute.xlu0 %1619
        %1623 = vset.pattern.permute.xlu0 2
        %1624 = vperm.xlu0 %1623, %v1550
        %v1625 = vpop.permute.xlu0 %1624
        %1628 = vset.pattern.permute.xlu0 2
        %1629 = vperm.xlu0 %1628, %v1551
        %v1630 = vpop.permute.xlu0 %1629
        %1633 = vset.pattern.permute.xlu0 2
        %1634 = vperm.xlu0 %1633, %v1552
        %v1635 = vpop.permute.xlu0 %1634
        %1638 = vset.pattern.permute.xlu0 2
        %1639 = vperm.xlu0 %1638, %v1553
        %v1640 = vpop.permute.xlu0 %1639
        %1643 = vset.pattern.permute.xlu0 2
        %1644 = vperm.xlu0 %1643, %v1554
        %v1645 = vpop.permute.xlu0 %1644
        %1648 = vset.pattern.permute.xlu0 2
        %1649 = vperm.xlu0 %1648, %v1555
        %v1650 = vpop.permute.xlu0 %1649
        %1653 = vset.pattern.permute.xlu0 2
        %1654 = vperm.xlu0 %1653, %v1556
        %v1655 = vpop.permute.xlu0 %1654
        %1658 = vset.pattern.permute.xlu0 2
        %1659 = vperm.xlu0 %1658, %v1557
        %v1660 = vpop.permute.xlu0 %1659
        %1663 = vset.pattern.permute.xlu0 2
        %1664 = vperm.xlu0 %1663, %v1558
        %v1665 = vpop.permute.xlu0 %1664
        %1668 = vset.pattern.permute.xlu0 2
        %1669 = vperm.xlu0 %1668, %v1559
        %v1670 = vpop.permute.xlu0 %1669
        %1673 = vset.pattern.permute.xlu0 2
        %1674 = vperm.xlu0 %1673, %v1560
        %v1675 = vpop.permute.xlu0 %1674
        %1678 = vset.pattern.permute.xlu0 2
        %1679 = vperm.xlu0 %1678, %v1561
        %v1680 = vpop.permute.xlu0 %1679
        %1683 = vset.pattern.permute.xlu0 2
        %1684 = vperm.xlu0 %1683, %v1562
        %v1685 = vpop.permute.xlu0 %1684
        %1688 = vset.pattern.permute.xlu0 2
        %1689 = vperm.xlu0 %1688, %v1563
        %v1690 = vpop.permute.xlu0 %1689
        %1693 = vset.pattern.permute.xlu0 2
        %1694 = vperm.xlu0 %1693, %v1564
        %v1695 = vpop.permute.xlu0 %1694
        %1698 = vset.pattern.permute.xlu0 2
        %1699 = vperm.xlu0 %1698, %v1565
        %v1700 = vpop.permute.xlu0 %1699
        %1703 = vset.pattern.permute.xlu0 2
        %1704 = vperm.xlu0 %1703, %v1566
        %v1705 = vpop.permute.xlu0 %1704
        %1708 = vset.pattern.permute.xlu0 2
        %1709 = vperm.xlu0 %1708, %v1567
        %v1710 = vpop.permute.xlu0 %1709
        %1713 = vset.pattern.permute.xlu0 2
        %1714 = vperm.xlu0 %1713, %v1568
        %v1715 = vpop.permute.xlu0 %1714
        %1718 = vset.pattern.permute.xlu0 2
        %1719 = vperm.xlu0 %1718, %v1569
        %v1720 = vpop.permute.xlu0 %1719
        %1723 = vset.pattern.permute.xlu0 2
        %1724 = vperm.xlu0 %1723, %v1570
        %v1725 = vpop.permute.xlu0 %1724
        %1728 = vset.pattern.permute.xlu0 2
        %1729 = vperm.xlu0 %1728, %v1571
        %v1730 = vpop.permute.xlu0 %1729
        %v1732 = vmul.f32 %v1508, %v1575
        %v1733 = vmul.f32 %v1539, %v1580
        %v1734 = vmul.f32 %v1538, %v1585
        %v1735 = vmul.f32 %v1537, %v1590
        %v1736 = vmul.f32 %v1536, %v1595
        %v1737 = vmul.f32 %v1535, %v1600
        %v1738 = vmul.f32 %v1534, %v1605
        %v1739 = vmul.f32 %v1533, %v1610
        %v1740 = vmul.f32 %v1532, %v1615
        %v1741 = vmul.f32 %v1531, %v1620
        %v1742 = vmul.f32 %v1530, %v1625
        %v1743 = vmul.f32 %v1529, %v1630
        %v1744 = vmul.f32 %v1528, %v1635
        %v1745 = vmul.f32 %v1527, %v1640
        %v1746 = vmul.f32 %v1526, %v1645
        %v1747 = vmul.f32 %v1525, %v1650
        %v1748 = vmul.f32 %v1524, %v1655
        %v1749 = vmul.f32 %v1523, %v1660
        %v1750 = vmul.f32 %v1522, %v1665
        %v1751 = vmul.f32 %v1521, %v1670
        %v1752 = vmul.f32 %v1520, %v1675
        %v1753 = vmul.f32 %v1519, %v1680
        %v1754 = vmul.f32 %v1518, %v1685
        %v1755 = vmul.f32 %v1517, %v1690
        %v1756 = vmul.f32 %v1516, %v1695
        %v1757 = vmul.f32 %v1515, %v1700
        %v1758 = vmul.f32 %v1514, %v1705
        %v1759 = vmul.f32 %v1513, %v1710
        %v1760 = vmul.f32 %v1512, %v1715
        %v1761 = vmul.f32 %v1511, %v1720
        %v1762 = vmul.f32 %v1510, %v1725
        %v1763 = vmul.f32 %v1509, %v1730
        %v1764 = vpack.c.bf16 %v1733, %v1732
        %v1765 = vpack.c.bf16 %v1735, %v1734
        %v1766 = vpack.c.bf16 %v1737, %v1736
        %v1767 = vpack.c.bf16 %v1739, %v1738
        %v1768 = vpack.c.bf16 %v1741, %v1740
        %v1769 = vpack.c.bf16 %v1743, %v1742
        %v1770 = vpack.c.bf16 %v1745, %v1744
        %v1771 = vpack.c.bf16 %v1747, %v1746
        %v1772 = vpack.c.bf16 %v1749, %v1748
        %v1773 = vpack.c.bf16 %v1751, %v1750
        %v1774 = vpack.c.bf16 %v1753, %v1752
        %v1775 = vpack.c.bf16 %v1755, %v1754
        %v1776 = vpack.c.bf16 %v1757, %v1756
        %v1777 = vpack.c.bf16 %v1759, %v1758
        %v1778 = vpack.c.bf16 %v1761, %v1760
        %v1779 = vpack.c.bf16 %v1763, %v1762
        %1780 = vst [vmem:[#allocation2 + $0x10] sm:$0xff] %v1764
        %1781 = vst [vmem:[#allocation2 + $0x58] sm:$0xff] %v1765
        %1782 = vst [vmem:[#allocation2 + $0xa0] sm:$0xff] %v1766
        %1783 = vst [vmem:[#allocation2 + $0xe8] sm:$0xff] %v1767
        %1784 = vst [vmem:[#allocation2 + $0x130] sm:$0xff] %v1768
        %1785 = vst [vmem:[#allocation2 + $0x178] sm:$0xff] %v1769
        %1786 = vst [vmem:[#allocation2 + $0x1c0] sm:$0xff] %v1770
        %1787 = vst [vmem:[#allocation2 + $0x208] sm:$0xff] %v1771
        %1788 = vst [vmem:[#allocation2 + $0x250] sm:$0xff] %v1772
        %1789 = vst [vmem:[#allocation2 + $0x298] sm:$0xff] %v1773
        %1790 = vst [vmem:[#allocation2 + $0x2e0] sm:$0xff] %v1774
        %1791 = vst [vmem:[#allocation2 + $0x328] sm:$0xff] %v1775
        %1792 = vst [vmem:[#allocation2 + $0x370] sm:$0xff] %v1776
        %1793 = vst [vmem:[#allocation2 + $0x3b8] sm:$0xff] %v1777
        %1794 = vst [vmem:[#allocation2 + $0x400] sm:$0xff] %v1778
        %1795 = vst [vmem:[#allocation2 + $0x448] sm:$0xff] %v1779
        %v1796 = vld [vmem:[%s0] sm:$0xff]
        %v1797 = vld [vmem:[%s0 + $0x8] sm:$0xff]
        %v1798 = vld [vmem:[%s0 + $0x10] sm:$0xff]
        %v1799 = vld [vmem:[%s0 + $0x18] sm:$0xff]
        %v1800 = vld [vmem:[%s0 + $0x20] sm:$0xff]
        %v1801 = vld [vmem:[%s0 + $0x28] sm:$0xff]
        %v1802 = vld [vmem:[%s0 + $0x30] sm:$0xff]
        %v1803 = vld [vmem:[%s0 + $0x38] sm:$0xff]
        %v1804 = vld [vmem:[%s0 + $0x40] sm:$0xff]
        %v1805 = vld [vmem:[%s0 + $0x48] sm:$0xff]
        %v1806 = vld [vmem:[%s0 + $0x50] sm:$0xff]
        %v1807 = vld [vmem:[%s0 + $0x58] sm:$0xff]
        %v1808 = vld [vmem:[%s0 + $0x60] sm:$0xff]
        %v1809 = vld [vmem:[%s0 + $0x68] sm:$0xff]
        %v1810 = vld [vmem:[%s0 + $0x70] sm:$0xff]
        %v1811 = vld [vmem:[%s0 + $0x78] sm:$0xff]
        %v1812 = vld [vmem:[%s0 + $0x80] sm:$0xff]
        %v1813 = vld [vmem:[%s0 + $0x88] sm:$0xff]
        %v1814 = vld [vmem:[%s0 + $0x90] sm:$0xff]
        %v1815 = vld [vmem:[%s0 + $0x98] sm:$0xff]
        %v1816 = vld [vmem:[%s0 + $0xa0] sm:$0xff]
        %v1817 = vld [vmem:[%s0 + $0xa8] sm:$0xff]
        %v1818 = vld [vmem:[%s0 + $0xb0] sm:$0xff]
        %v1819 = vld [vmem:[%s0 + $0xb8] sm:$0xff]
        %v1820 = vld [vmem:[%s0 + $0xc0] sm:$0xff]
        %v1821 = vld [vmem:[%s0 + $0xc8] sm:$0xff]
        %v1822 = vld [vmem:[%s0 + $0xd0] sm:$0xff]
        %v1823 = vld [vmem:[%s0 + $0xd8] sm:$0xff]
        %v1824 = vld [vmem:[%s0 + $0xe0] sm:$0xff]
        %v1825 = vld [vmem:[%s0 + $0xe8] sm:$0xff]
        %v1826 = vld [vmem:[%s0 + $0xf0] sm:$0xff]
        %v1827 = vld [vmem:[%s0 + $0xf8] sm:$0xff]
        %1829 = vset.pattern.permute.xlu0 3
        %1830 = vperm.xlu0 %1829, %v1796
        %v1831 = vpop.permute.xlu0 %1830
        %1834 = vset.pattern.permute.xlu0 3
        %1835 = vperm.xlu0 %1834, %v1797
        %v1836 = vpop.permute.xlu0 %1835
        %1839 = vset.pattern.permute.xlu0 3
        %1840 = vperm.xlu0 %1839, %v1798
        %v1841 = vpop.permute.xlu0 %1840
        %1844 = vset.pattern.permute.xlu0 3
        %1845 = vperm.xlu0 %1844, %v1799
        %v1846 = vpop.permute.xlu0 %1845
        %1849 = vset.pattern.permute.xlu0 3
        %1850 = vperm.xlu0 %1849, %v1800
        %v1851 = vpop.permute.xlu0 %1850
        %1854 = vset.pattern.permute.xlu0 3
        %1855 = vperm.xlu0 %1854, %v1801
        %v1856 = vpop.permute.xlu0 %1855
        %1859 = vset.pattern.permute.xlu0 3
        %1860 = vperm.xlu0 %1859, %v1802
        %v1861 = vpop.permute.xlu0 %1860
        %1864 = vset.pattern.permute.xlu0 3
        %1865 = vperm.xlu0 %1864, %v1803
        %v1866 = vpop.permute.xlu0 %1865
        %1869 = vset.pattern.permute.xlu0 3
        %1870 = vperm.xlu0 %1869, %v1804
        %v1871 = vpop.permute.xlu0 %1870
        %1874 = vset.pattern.permute.xlu0 3
        %1875 = vperm.xlu0 %1874, %v1805
        %v1876 = vpop.permute.xlu0 %1875
        %1879 = vset.pattern.permute.xlu0 3
        %1880 = vperm.xlu0 %1879, %v1806
        %v1881 = vpop.permute.xlu0 %1880
        %1884 = vset.pattern.permute.xlu0 3
        %1885 = vperm.xlu0 %1884, %v1807
        %v1886 = vpop.permute.xlu0 %1885
        %1889 = vset.pattern.permute.xlu0 3
        %1890 = vperm.xlu0 %1889, %v1808
        %v1891 = vpop.permute.xlu0 %1890
        %1894 = vset.pattern.permute.xlu0 3
        %1895 = vperm.xlu0 %1894, %v1809
        %v1896 = vpop.permute.xlu0 %1895
        %1899 = vset.pattern.permute.xlu0 3
        %1900 = vperm.xlu0 %1899, %v1810
        %v1901 = vpop.permute.xlu0 %1900
        %1904 = vset.pattern.permute.xlu0 3
        %1905 = vperm.xlu0 %1904, %v1811
        %v1906 = vpop.permute.xlu0 %1905
        %1909 = vset.pattern.permute.xlu0 3
        %1910 = vperm.xlu0 %1909, %v1812
        %v1911 = vpop.permute.xlu0 %1910
        %1914 = vset.pattern.permute.xlu0 3
        %1915 = vperm.xlu0 %1914, %v1813
        %v1916 = vpop.permute.xlu0 %1915
        %1919 = vset.pattern.permute.xlu0 3
        %1920 = vperm.xlu0 %1919, %v1814
        %v1921 = vpop.permute.xlu0 %1920
        %1924 = vset.pattern.permute.xlu0 3
        %1925 = vperm.xlu0 %1924, %v1815
        %v1926 = vpop.permute.xlu0 %1925
        %1929 = vset.pattern.permute.xlu0 3
        %1930 = vperm.xlu0 %1929, %v1816
        %v1931 = vpop.permute.xlu0 %1930
        %1934 = vset.pattern.permute.xlu0 3
        %1935 = vperm.xlu0 %1934, %v1817
        %v1936 = vpop.permute.xlu0 %1935
        %1939 = vset.pattern.permute.xlu0 3
        %1940 = vperm.xlu0 %1939, %v1818
        %v1941 = vpop.permute.xlu0 %1940
        %1944 = vset.pattern.permute.xlu0 3
        %1945 = vperm.xlu0 %1944, %v1819
        %v1946 = vpop.permute.xlu0 %1945
        %1949 = vset.pattern.permute.xlu0 3
        %1950 = vperm.xlu0 %1949, %v1820
        %v1951 = vpop.permute.xlu0 %1950
        %1954 = vset.pattern.permute.xlu0 3
        %1955 = vperm.xlu0 %1954, %v1821
        %v1956 = vpop.permute.xlu0 %1955
        %1959 = vset.pattern.permute.xlu0 3
        %1960 = vperm.xlu0 %1959, %v1822
        %v1961 = vpop.permute.xlu0 %1960
        %1964 = vset.pattern.permute.xlu0 3
        %1965 = vperm.xlu0 %1964, %v1823
        %v1966 = vpop.permute.xlu0 %1965
        %1969 = vset.pattern.permute.xlu0 3
        %1970 = vperm.xlu0 %1969, %v1824
        %v1971 = vpop.permute.xlu0 %1970
        %1974 = vset.pattern.permute.xlu0 3
        %1975 = vperm.xlu0 %1974, %v1825
        %v1976 = vpop.permute.xlu0 %1975
        %1979 = vset.pattern.permute.xlu0 3
        %1980 = vperm.xlu0 %1979, %v1826
        %v1981 = vpop.permute.xlu0 %1980
        %1984 = vset.pattern.permute.xlu0 3
        %1985 = vperm.xlu0 %1984, %v1827
        %v1986 = vpop.permute.xlu0 %1985
        %v1988 = vmul.f32 %v962, %v1831
        %v1989 = vmul.f32 %v961, %v1836
        %v1990 = vmul.f32 %v960, %v1841
        %v1991 = vmul.f32 %v959, %v1846
        %v1992 = vmul.f32 %v958, %v1851
        %v1993 = vmul.f32 %v957, %v1856
        %v1994 = vmul.f32 %v956, %v1861
        %v1995 = vmul.f32 %v955, %v1866
        %v1996 = vmul.f32 %v954, %v1871
        %v1997 = vmul.f32 %v953, %v1876
        %v1998 = vmul.f32 %v952, %v1881
        %v1999 = vmul.f32 %v951, %v1886
        %v2000 = vmul.f32 %v950, %v1891
        %v2001 = vmul.f32 %v949, %v1896
        %v2002 = vmul.f32 %v948, %v1901
        %v2003 = vmul.f32 %v947, %v1906
        %v2004 = vmul.f32 %v946, %v1911
        %v2005 = vmul.f32 %v945, %v1916
        %v2006 = vmul.f32 %v944, %v1921
        %v2007 = vmul.f32 %v943, %v1926
        %v2008 = vmul.f32 %v942, %v1931
        %v2009 = vmul.f32 %v941, %v1936
        %v2010 = vmul.f32 %v940, %v1941
        %v2011 = vmul.f32 %v939, %v1946
        %v2012 = vmul.f32 %v938, %v1951
        %v2013 = vmul.f32 %v937, %v1956
        %v2014 = vmul.f32 %v936, %v1961
        %v2015 = vmul.f32 %v935, %v1966
        %v2016 = vmul.f32 %v934, %v1971
        %v2017 = vmul.f32 %v933, %v1976
        %v2018 = vmul.f32 %v932, %v1981
        %v2019 = vmul.f32 %v931, %v1986
        %v2020 = vpack.c.bf16 %v1989, %v1988
        %v2021 = vpack.c.bf16 %v1991, %v1990
        %v2022 = vpack.c.bf16 %v1993, %v1992
        %v2023 = vpack.c.bf16 %v1995, %v1994
        %v2024 = vpack.c.bf16 %v1997, %v1996
        %v2025 = vpack.c.bf16 %v1999, %v1998
        %v2026 = vpack.c.bf16 %v2001, %v2000
        %v2027 = vpack.c.bf16 %v2003, %v2002
        %v2028 = vpack.c.bf16 %v2005, %v2004
        %v2029 = vpack.c.bf16 %v2007, %v2006
        %v2030 = vpack.c.bf16 %v2009, %v2008
        %v2031 = vpack.c.bf16 %v2011, %v2010
        %v2032 = vpack.c.bf16 %v2013, %v2012
        %v2033 = vpack.c.bf16 %v2015, %v2014
        %v2034 = vpack.c.bf16 %v2017, %v2016
        %v2035 = vpack.c.bf16 %v2019, %v2018
        %2036 = vst [vmem:[#allocation2 + $0x18] sm:$0xff] %v2020
        %2037 = vst [vmem:[#allocation2 + $0x60] sm:$0xff] %v2021
        %2038 = vst [vmem:[#allocation2 + $0xa8] sm:$0xff] %v2022
        %2039 = vst [vmem:[#allocation2 + $0xf0] sm:$0xff] %v2023
        %2040 = vst [vmem:[#allocation2 + $0x138] sm:$0xff] %v2024
        %2041 = vst [vmem:[#allocation2 + $0x180] sm:$0xff] %v2025
        %2042 = vst [vmem:[#allocation2 + $0x1c8] sm:$0xff] %v2026
        %2043 = vst [vmem:[#allocation2 + $0x210] sm:$0xff] %v2027
        %2044 = vst [vmem:[#allocation2 + $0x258] sm:$0xff] %v2028
        %2045 = vst [vmem:[#allocation2 + $0x2a0] sm:$0xff] %v2029
        %2046 = vst [vmem:[#allocation2 + $0x2e8] sm:$0xff] %v2030
        %2047 = vst [vmem:[#allocation2 + $0x330] sm:$0xff] %v2031
        %2048 = vst [vmem:[#allocation2 + $0x378] sm:$0xff] %v2032
        %2049 = vst [vmem:[#allocation2 + $0x3c0] sm:$0xff] %v2033
        %2050 = vst [vmem:[#allocation2 + $0x408] sm:$0xff] %v2034
        %2051 = vst [vmem:[#allocation2 + $0x450] sm:$0xff] %v2035
        %v2052 = vpack.c.bf16 %v865, %v864
        %v2053 = vpack.c.bf16 %v867, %v866
        %v2054 = vpack.c.bf16 %v869, %v868
        %v2055 = vpack.c.bf16 %v871, %v870
        %v2056 = vpack.c.bf16 %v873, %v872
        %v2057 = vpack.c.bf16 %v875, %v874
        %v2058 = vpack.c.bf16 %v877, %v876
        %v2059 = vpack.c.bf16 %v879, %v878
        %v2060 = vpack.c.bf16 %v881, %v880
        %v2061 = vpack.c.bf16 %v883, %v882
        %v2062 = vpack.c.bf16 %v885, %v884
        %v2063 = vpack.c.bf16 %v887, %v886
        %v2064 = vpack.c.bf16 %v889, %v888
        %v2065 = vpack.c.bf16 %v891, %v890
        %v2066 = vpack.c.bf16 %v893, %v892
        %v2067 = vpack.c.bf16 %v895, %v894
        %2068 = vst [vmem:[#allocation2 + $0x20] sm:$0xff] %v2052
        %2069 = vst [vmem:[#allocation2 + $0x68] sm:$0xff] %v2053
        %2070 = vst [vmem:[#allocation2 + $0xb0] sm:$0xff] %v2054
        %2071 = vst [vmem:[#allocation2 + $0xf8] sm:$0xff] %v2055
        %2072 = vst [vmem:[#allocation2 + $0x140] sm:$0xff] %v2056
        %2073 = vst [vmem:[#allocation2 + $0x188] sm:$0xff] %v2057
        %2074 = vst [vmem:[#allocation2 + $0x1d0] sm:$0xff] %v2058
        %2075 = vst [vmem:[#allocation2 + $0x218] sm:$0xff] %v2059
        %2076 = vst [vmem:[#allocation2 + $0x260] sm:$0xff] %v2060
        %2077 = vst [vmem:[#allocation2 + $0x2a8] sm:$0xff] %v2061
        %2078 = vst [vmem:[#allocation2 + $0x2f0] sm:$0xff] %v2062
        %2079 = vst [vmem:[#allocation2 + $0x338] sm:$0xff] %v2063
        %2080 = vst [vmem:[#allocation2 + $0x380] sm:$0xff] %v2064
        %2081 = vst [vmem:[#allocation2 + $0x3c8] sm:$0xff] %v2065
        %2082 = vst [vmem:[#allocation2 + $0x410] sm:$0xff] %v2066
        %2083 = vst [vmem:[#allocation2 + $0x458] sm:$0xff] %v2067
        %v2084 = vld [vmem:[%s0] sm:$0xff]
        %v2085 = vld [vmem:[%s0 + $0x8] sm:$0xff]
        %v2086 = vld [vmem:[%s0 + $0x10] sm:$0xff]
        %v2087 = vld [vmem:[%s0 + $0x18] sm:$0xff]
        %v2088 = vld [vmem:[%s0 + $0x20] sm:$0xff]
        %v2089 = vld [vmem:[%s0 + $0x28] sm:$0xff]
        %v2090 = vld [vmem:[%s0 + $0x30] sm:$0xff]
        %v2091 = vld [vmem:[%s0 + $0x38] sm:$0xff]
        %v2092 = vld [vmem:[%s0 + $0x40] sm:$0xff]
        %v2093 = vld [vmem:[%s0 + $0x48] sm:$0xff]
        %v2094 = vld [vmem:[%s0 + $0x50] sm:$0xff]
        %v2095 = vld [vmem:[%s0 + $0x58] sm:$0xff]
        %v2096 = vld [vmem:[%s0 + $0x60] sm:$0xff]
        %v2097 = vld [vmem:[%s0 + $0x68] sm:$0xff]
        %v2098 = vld [vmem:[%s0 + $0x70] sm:$0xff]
        %v2099 = vld [vmem:[%s0 + $0x78] sm:$0xff]
        %v2100 = vld [vmem:[%s0 + $0x80] sm:$0xff]
        %v2101 = vld [vmem:[%s0 + $0x88] sm:$0xff]
        %v2102 = vld [vmem:[%s0 + $0x90] sm:$0xff]
        %v2103 = vld [vmem:[%s0 + $0x98] sm:$0xff]
        %v2104 = vld [vmem:[%s0 + $0xa0] sm:$0xff]
        %v2105 = vld [vmem:[%s0 + $0xa8] sm:$0xff]
        %v2106 = vld [vmem:[%s0 + $0xb0] sm:$0xff]
        %v2107 = vld [vmem:[%s0 + $0xb8] sm:$0xff]
        %v2108 = vld [vmem:[%s0 + $0xc0] sm:$0xff]
        %v2109 = vld [vmem:[%s0 + $0xc8] sm:$0xff]
        %v2110 = vld [vmem:[%s0 + $0xd0] sm:$0xff]
        %v2111 = vld [vmem:[%s0 + $0xd8] sm:$0xff]
        %v2112 = vld [vmem:[%s0 + $0xe0] sm:$0xff]
        %v2113 = vld [vmem:[%s0 + $0xe8] sm:$0xff]
        %v2114 = vld [vmem:[%s0 + $0xf0] sm:$0xff]
        %v2115 = vld [vmem:[%s0 + $0xf8] sm:$0xff]
        %2117 = vset.pattern.permute.xlu0 5
        %2118 = vperm.xlu0 %2117, %v2084
        %v2119 = vpop.permute.xlu0 %2118
        %2122 = vset.pattern.permute.xlu0 5
        %2123 = vperm.xlu0 %2122, %v2085
        %v2124 = vpop.permute.xlu0 %2123
        %2127 = vset.pattern.permute.xlu0 5
        %2128 = vperm.xlu0 %2127, %v2086
        %v2129 = vpop.permute.xlu0 %2128
        %2132 = vset.pattern.permute.xlu0 5
        %2133 = vperm.xlu0 %2132, %v2087
        %v2134 = vpop.permute.xlu0 %2133
        %2137 = vset.pattern.permute.xlu0 5
        %2138 = vperm.xlu0 %2137, %v2088
        %v2139 = vpop.permute.xlu0 %2138
        %2142 = vset.pattern.permute.xlu0 5
        %2143 = vperm.xlu0 %2142, %v2089
        %v2144 = vpop.permute.xlu0 %2143
        %2147 = vset.pattern.permute.xlu0 5
        %2148 = vperm.xlu0 %2147, %v2090
        %v2149 = vpop.permute.xlu0 %2148
        %2152 = vset.pattern.permute.xlu0 5
        %2153 = vperm.xlu0 %2152, %v2091
        %v2154 = vpop.permute.xlu0 %2153
        %2157 = vset.pattern.permute.xlu0 5
        %2158 = vperm.xlu0 %2157, %v2092
        %v2159 = vpop.permute.xlu0 %2158
        %2162 = vset.pattern.permute.xlu0 5
        %2163 = vperm.xlu0 %2162, %v2093
        %v2164 = vpop.permute.xlu0 %2163
        %2167 = vset.pattern.permute.xlu0 5
        %2168 = vperm.xlu0 %2167, %v2094
        %v2169 = vpop.permute.xlu0 %2168
        %2172 = vset.pattern.permute.xlu0 5
        %2173 = vperm.xlu0 %2172, %v2095
        %v2174 = vpop.permute.xlu0 %2173
        %2177 = vset.pattern.permute.xlu0 5
        %2178 = vperm.xlu0 %2177, %v2096
        %v2179 = vpop.permute.xlu0 %2178
        %2182 = vset.pattern.permute.xlu0 5
        %2183 = vperm.xlu0 %2182, %v2097
        %v2184 = vpop.permute.xlu0 %2183
        %2187 = vset.pattern.permute.xlu0 5
        %2188 = vperm.xlu0 %2187, %v2098
        %v2189 = vpop.permute.xlu0 %2188
        %2192 = vset.pattern.permute.xlu0 5
        %2193 = vperm.xlu0 %2192, %v2099
        %v2194 = vpop.permute.xlu0 %2193
        %2197 = vset.pattern.permute.xlu0 5
        %2198 = vperm.xlu0 %2197, %v2100
        %v2199 = vpop.permute.xlu0 %2198
        %2202 = vset.pattern.permute.xlu0 5
        %2203 = vperm.xlu0 %2202, %v2101
        %v2204 = vpop.permute.xlu0 %2203
        %2207 = vset.pattern.permute.xlu0 5
        %2208 = vperm.xlu0 %2207, %v2102
        %v2209 = vpop.permute.xlu0 %2208
        %2212 = vset.pattern.permute.xlu0 5
        %2213 = vperm.xlu0 %2212, %v2103
        %v2214 = vpop.permute.xlu0 %2213
        %2217 = vset.pattern.permute.xlu0 5
        %2218 = vperm.xlu0 %2217, %v2104
        %v2219 = vpop.permute.xlu0 %2218
        %2222 = vset.pattern.permute.xlu0 5
        %2223 = vperm.xlu0 %2222, %v2105
        %v2224 = vpop.permute.xlu0 %2223
        %2227 = vset.pattern.permute.xlu0 5
        %2228 = vperm.xlu0 %2227, %v2106
        %v2229 = vpop.permute.xlu0 %2228
        %2232 = vset.pattern.permute.xlu0 5
        %2233 = vperm.xlu0 %2232, %v2107
        %v2234 = vpop.permute.xlu0 %2233
        %2237 = vset.pattern.permute.xlu0 5
        %2238 = vperm.xlu0 %2237, %v2108
        %v2239 = vpop.permute.xlu0 %2238
        %2242 = vset.pattern.permute.xlu0 5
        %2243 = vperm.xlu0 %2242, %v2109
        %v2244 = vpop.permute.xlu0 %2243
        %2247 = vset.pattern.permute.xlu0 5
        %2248 = vperm.xlu0 %2247, %v2110
        %v2249 = vpop.permute.xlu0 %2248
        %2252 = vset.pattern.permute.xlu0 5
        %2253 = vperm.xlu0 %2252, %v2111
        %v2254 = vpop.permute.xlu0 %2253
        %2257 = vset.pattern.permute.xlu0 5
        %2258 = vperm.xlu0 %2257, %v2112
        %v2259 = vpop.permute.xlu0 %2258
        %2262 = vset.pattern.permute.xlu0 5
        %2263 = vperm.xlu0 %2262, %v2113
        %v2264 = vpop.permute.xlu0 %2263
        %2267 = vset.pattern.permute.xlu0 5
        %2268 = vperm.xlu0 %2267, %v2114
        %v2269 = vpop.permute.xlu0 %2268
        %2272 = vset.pattern.permute.xlu0 5
        %2273 = vperm.xlu0 %2272, %v2115
        %v2274 = vpop.permute.xlu0 %2273
        %v2276 = vmul.f32 %v1538, %v2119
        %v2277 = vmul.f32 %v1537, %v2124
        %v2278 = vmul.f32 %v1536, %v2129
        %v2279 = vmul.f32 %v1535, %v2134
        %v2280 = vmul.f32 %v1534, %v2139
        %v2281 = vmul.f32 %v1533, %v2144
        %v2282 = vmul.f32 %v1532, %v2149
        %v2283 = vmul.f32 %v1531, %v2154
        %v2284 = vmul.f32 %v1530, %v2159
        %v2285 = vmul.f32 %v1529, %v2164
        %v2286 = vmul.f32 %v1528, %v2169
        %v2287 = vmul.f32 %v1527, %v2174
        %v2288 = vmul.f32 %v1526, %v2179
        %v2289 = vmul.f32 %v1525, %v2184
        %v2290 = vmul.f32 %v1524, %v2189
        %v2291 = vmul.f32 %v1523, %v2194
        %v2292 = vmul.f32 %v1522, %v2199
        %v2293 = vmul.f32 %v1521, %v2204
        %v2294 = vmul.f32 %v1520, %v2209
        %v2295 = vmul.f32 %v1519, %v2214
        %v2296 = vmul.f32 %v1518, %v2219
        %v2297 = vmul.f32 %v1517, %v2224
        %v2298 = vmul.f32 %v1516, %v2229
        %v2299 = vmul.f32 %v1515, %v2234
        %v2300 = vmul.f32 %v1514, %v2239
        %v2301 = vmul.f32 %v1513, %v2244
        %v2302 = vmul.f32 %v1512, %v2249
        %v2303 = vmul.f32 %v1511, %v2254
        %v2304 = vmul.f32 %v1510, %v2259
        %v2305 = vmul.f32 %v1509, %v2264
        %v2306 = vmul.f32 %v1508, %v2269
        %v2307 = vmul.f32 %v1539, %v2274
        %v2308 = vpack.c.bf16 %v2277, %v2276
        %v2309 = vpack.c.bf16 %v2279, %v2278
        %v2310 = vpack.c.bf16 %v2281, %v2280
        %v2311 = vpack.c.bf16 %v2283, %v2282
        %v2312 = vpack.c.bf16 %v2285, %v2284
        %v2313 = vpack.c.bf16 %v2287, %v2286
        %v2314 = vpack.c.bf16 %v2289, %v2288
        %v2315 = vpack.c.bf16 %v2291, %v2290
        %v2316 = vpack.c.bf16 %v2293, %v2292
        %v2317 = vpack.c.bf16 %v2295, %v2294
        %v2318 = vpack.c.bf16 %v2297, %v2296
        %v2319 = vpack.c.bf16 %v2299, %v2298
        %v2320 = vpack.c.bf16 %v2301, %v2300
        %v2321 = vpack.c.bf16 %v2303, %v2302
        %v2322 = vpack.c.bf16 %v2305, %v2304
        %v2323 = vpack.c.bf16 %v2307, %v2306
        %2324 = vst [vmem:[#allocation2 + $0x28] sm:$0xff] %v2308
        %2325 = vst [vmem:[#allocation2 + $0x70] sm:$0xff] %v2309
        %2326 = vst [vmem:[#allocation2 + $0xb8] sm:$0xff] %v2310
        %2327 = vst [vmem:[#allocation2 + $0x100] sm:$0xff] %v2311
        %2328 = vst [vmem:[#allocation2 + $0x148] sm:$0xff] %v2312
        %2329 = vst [vmem:[#allocation2 + $0x190] sm:$0xff] %v2313
        %2330 = vst [vmem:[#allocation2 + $0x1d8] sm:$0xff] %v2314
        %2331 = vst [vmem:[#allocation2 + $0x220] sm:$0xff] %v2315
        %2332 = vst [vmem:[#allocation2 + $0x268] sm:$0xff] %v2316
        %2333 = vst [vmem:[#allocation2 + $0x2b0] sm:$0xff] %v2317
        %2334 = vst [vmem:[#allocation2 + $0x2f8] sm:$0xff] %v2318
        %2335 = vst [vmem:[#allocation2 + $0x340] sm:$0xff] %v2319
        %2336 = vst [vmem:[#allocation2 + $0x388] sm:$0xff] %v2320
        %2337 = vst [vmem:[#allocation2 + $0x3d0] sm:$0xff] %v2321
        %2338 = vst [vmem:[#allocation2 + $0x418] sm:$0xff] %v2322
        %2339 = vst [vmem:[#allocation2 + $0x460] sm:$0xff] %v2323
        %v2340 = vld [vmem:[%s0] sm:$0xff]
        %v2341 = vld [vmem:[%s0 + $0x8] sm:$0xff]
        %v2342 = vld [vmem:[%s0 + $0x10] sm:$0xff]
        %v2343 = vld [vmem:[%s0 + $0x18] sm:$0xff]
        %v2344 = vld [vmem:[%s0 + $0x20] sm:$0xff]
        %v2345 = vld [vmem:[%s0 + $0x28] sm:$0xff]
        %v2346 = vld [vmem:[%s0 + $0x30] sm:$0xff]
        %v2347 = vld [vmem:[%s0 + $0x38] sm:$0xff]
        %v2348 = vld [vmem:[%s0 + $0x40] sm:$0xff]
        %v2349 = vld [vmem:[%s0 + $0x48] sm:$0xff]
        %v2350 = vld [vmem:[%s0 + $0x50] sm:$0xff]
        %v2351 = vld [vmem:[%s0 + $0x58] sm:$0xff]
        %v2352 = vld [vmem:[%s0 + $0x60] sm:$0xff]
        %v2353 = vld [vmem:[%s0 + $0x68] sm:$0xff]
        %v2354 = vld [vmem:[%s0 + $0x70] sm:$0xff]
        %v2355 = vld [vmem:[%s0 + $0x78] sm:$0xff]
        %v2356 = vld [vmem:[%s0 + $0x80] sm:$0xff]
        %v2357 = vld [vmem:[%s0 + $0x88] sm:$0xff]
        %v2358 = vld [vmem:[%s0 + $0x90] sm:$0xff]
        %v2359 = vld [vmem:[%s0 + $0x98] sm:$0xff]
        %v2360 = vld [vmem:[%s0 + $0xa0] sm:$0xff]
        %v2361 = vld [vmem:[%s0 + $0xa8] sm:$0xff]
        %v2362 = vld [vmem:[%s0 + $0xb0] sm:$0xff]
        %v2363 = vld [vmem:[%s0 + $0xb8] sm:$0xff]
        %v2364 = vld [vmem:[%s0 + $0xc0] sm:$0xff]
        %v2365 = vld [vmem:[%s0 + $0xc8] sm:$0xff]
        %v2366 = vld [vmem:[%s0 + $0xd0] sm:$0xff]
        %v2367 = vld [vmem:[%s0 + $0xd8] sm:$0xff]
        %v2368 = vld [vmem:[%s0 + $0xe0] sm:$0xff]
        %v2369 = vld [vmem:[%s0 + $0xe8] sm:$0xff]
        %v2370 = vld [vmem:[%s0 + $0xf0] sm:$0xff]
        %v2371 = vld [vmem:[%s0 + $0xf8] sm:$0xff]
        %2373 = vset.pattern.permute.xlu0 6
        %2374 = vperm.xlu0 %2373, %v2340
        %v2375 = vpop.permute.xlu0 %2374
        %2378 = vset.pattern.permute.xlu0 6
        %2379 = vperm.xlu0 %2378, %v2341
        %v2380 = vpop.permute.xlu0 %2379
        %2383 = vset.pattern.permute.xlu0 6
        %2384 = vperm.xlu0 %2383, %v2342
        %v2385 = vpop.permute.xlu0 %2384
        %2388 = vset.pattern.permute.xlu0 6
        %2389 = vperm.xlu0 %2388, %v2343
        %v2390 = vpop.permute.xlu0 %2389
        %2393 = vset.pattern.permute.xlu0 6
        %2394 = vperm.xlu0 %2393, %v2344
        %v2395 = vpop.permute.xlu0 %2394
        %2398 = vset.pattern.permute.xlu0 6
        %2399 = vperm.xlu0 %2398, %v2345
        %v2400 = vpop.permute.xlu0 %2399
        %2403 = vset.pattern.permute.xlu0 6
        %2404 = vperm.xlu0 %2403, %v2346
        %v2405 = vpop.permute.xlu0 %2404
        %2408 = vset.pattern.permute.xlu0 6
        %2409 = vperm.xlu0 %2408, %v2347
        %v2410 = vpop.permute.xlu0 %2409
        %2413 = vset.pattern.permute.xlu0 6
        %2414 = vperm.xlu0 %2413, %v2348
        %v2415 = vpop.permute.xlu0 %2414
        %2418 = vset.pattern.permute.xlu0 6
        %2419 = vperm.xlu0 %2418, %v2349
        %v2420 = vpop.permute.xlu0 %2419
        %2423 = vset.pattern.permute.xlu0 6
        %2424 = vperm.xlu0 %2423, %v2350
        %v2425 = vpop.permute.xlu0 %2424
        %2428 = vset.pattern.permute.xlu0 6
        %2429 = vperm.xlu0 %2428, %v2351
        %v2430 = vpop.permute.xlu0 %2429
        %2433 = vset.pattern.permute.xlu0 6
        %2434 = vperm.xlu0 %2433, %v2352
        %v2435 = vpop.permute.xlu0 %2434
        %2438 = vset.pattern.permute.xlu0 6
        %2439 = vperm.xlu0 %2438, %v2353
        %v2440 = vpop.permute.xlu0 %2439
        %2443 = vset.pattern.permute.xlu0 6
        %2444 = vperm.xlu0 %2443, %v2354
        %v2445 = vpop.permute.xlu0 %2444
        %2448 = vset.pattern.permute.xlu0 6
        %2449 = vperm.xlu0 %2448, %v2355
        %v2450 = vpop.permute.xlu0 %2449
        %2453 = vset.pattern.permute.xlu0 6
        %2454 = vperm.xlu0 %2453, %v2356
        %v2455 = vpop.permute.xlu0 %2454
        %2458 = vset.pattern.permute.xlu0 6
        %2459 = vperm.xlu0 %2458, %v2357
        %v2460 = vpop.permute.xlu0 %2459
        %2463 = vset.pattern.permute.xlu0 6
        %2464 = vperm.xlu0 %2463, %v2358
        %v2465 = vpop.permute.xlu0 %2464
        %2468 = vset.pattern.permute.xlu0 6
        %2469 = vperm.xlu0 %2468, %v2359
        %v2470 = vpop.permute.xlu0 %2469
        %2473 = vset.pattern.permute.xlu0 6
        %2474 = vperm.xlu0 %2473, %v2360
        %v2475 = vpop.permute.xlu0 %2474
        %2478 = vset.pattern.permute.xlu0 6
        %2479 = vperm.xlu0 %2478, %v2361
        %v2480 = vpop.permute.xlu0 %2479
        %2483 = vset.pattern.permute.xlu0 6
        %2484 = vperm.xlu0 %2483, %v2362
        %v2485 = vpop.permute.xlu0 %2484
        %2488 = vset.pattern.permute.xlu0 6
        %2489 = vperm.xlu0 %2488, %v2363
        %v2490 = vpop.permute.xlu0 %2489
        %2493 = vset.pattern.permute.xlu0 6
        %2494 = vperm.xlu0 %2493, %v2364
        %v2495 = vpop.permute.xlu0 %2494
        %2498 = vset.pattern.permute.xlu0 6
        %2499 = vperm.xlu0 %2498, %v2365
        %v2500 = vpop.permute.xlu0 %2499
        %2503 = vset.pattern.permute.xlu0 6
        %2504 = vperm.xlu0 %2503, %v2366
        %v2505 = vpop.permute.xlu0 %2504
        %2508 = vset.pattern.permute.xlu0 6
        %2509 = vperm.xlu0 %2508, %v2367
        %v2510 = vpop.permute.xlu0 %2509
        %2513 = vset.pattern.permute.xlu0 6
        %2514 = vperm.xlu0 %2513, %v2368
        %v2515 = vpop.permute.xlu0 %2514
        %2518 = vset.pattern.permute.xlu0 6
        %2519 = vperm.xlu0 %2518, %v2369
        %v2520 = vpop.permute.xlu0 %2519
        %2523 = vset.pattern.permute.xlu0 6
        %2524 = vperm.xlu0 %2523, %v2370
        %v2525 = vpop.permute.xlu0 %2524
        %2528 = vset.pattern.permute.xlu0 6
        %2529 = vperm.xlu0 %2528, %v2371
        %v2530 = vpop.permute.xlu0 %2529
        %v2532 = vmul.f32 %v960, %v2375
        %v2533 = vmul.f32 %v959, %v2380
        %v2534 = vmul.f32 %v958, %v2385
        %v2535 = vmul.f32 %v957, %v2390
        %v2536 = vmul.f32 %v956, %v2395
        %v2537 = vmul.f32 %v955, %v2400
        %v2538 = vmul.f32 %v954, %v2405
        %v2539 = vmul.f32 %v953, %v2410
        %v2540 = vmul.f32 %v952, %v2415
        %v2541 = vmul.f32 %v951, %v2420
        %v2542 = vmul.f32 %v950, %v2425
        %v2543 = vmul.f32 %v949, %v2430
        %v2544 = vmul.f32 %v948, %v2435
        %v2545 = vmul.f32 %v947, %v2440
        %v2546 = vmul.f32 %v946, %v2445
        %v2547 = vmul.f32 %v945, %v2450
        %v2548 = vmul.f32 %v944, %v2455
        %v2549 = vmul.f32 %v943, %v2460
        %v2550 = vmul.f32 %v942, %v2465
        %v2551 = vmul.f32 %v941, %v2470
        %v2552 = vmul.f32 %v940, %v2475
        %v2553 = vmul.f32 %v939, %v2480
        %v2554 = vmul.f32 %v938, %v2485
        %v2555 = vmul.f32 %v937, %v2490
        %v2556 = vmul.f32 %v936, %v2495
        %v2557 = vmul.f32 %v935, %v2500
        %v2558 = vmul.f32 %v934, %v2505
        %v2559 = vmul.f32 %v933, %v2510
        %v2560 = vmul.f32 %v932, %v2515
        %v2561 = vmul.f32 %v931, %v2520
        %v2562 = vmul.f32 %v962, %v2525
        %v2563 = vmul.f32 %v961, %v2530
        %v2564 = vpack.c.bf16 %v2533, %v2532
        %v2565 = vpack.c.bf16 %v2535, %v2534
        %v2566 = vpack.c.bf16 %v2537, %v2536
        %v2567 = vpack.c.bf16 %v2539, %v2538
        %v2568 = vpack.c.bf16 %v2541, %v2540
        %v2569 = vpack.c.bf16 %v2543, %v2542
        %v2570 = vpack.c.bf16 %v2545, %v2544
        %v2571 = vpack.c.bf16 %v2547, %v2546
        %v2572 = vpack.c.bf16 %v2549, %v2548
        %v2573 = vpack.c.bf16 %v2551, %v2550
        %v2574 = vpack.c.bf16 %v2553, %v2552
        %v2575 = vpack.c.bf16 %v2555, %v2554
        %v2576 = vpack.c.bf16 %v2557, %v2556
        %v2577 = vpack.c.bf16 %v2559, %v2558
        %v2578 = vpack.c.bf16 %v2561, %v2560
        %v2579 = vpack.c.bf16 %v2563, %v2562
        %2580 = vst [vmem:[#allocation2 + $0x30] sm:$0xff] %v2564
        %2581 = vst [vmem:[#allocation2 + $0x78] sm:$0xff] %v2565
        %2582 = vst [vmem:[#allocation2 + $0xc0] sm:$0xff] %v2566
        %2583 = vst [vmem:[#allocation2 + $0x108] sm:$0xff] %v2567
        %2584 = vst [vmem:[#allocation2 + $0x150] sm:$0xff] %v2568
        %2585 = vst [vmem:[#allocation2 + $0x198] sm:$0xff] %v2569
        %2586 = vst [vmem:[#allocation2 + $0x1e0] sm:$0xff] %v2570
        %2587 = vst [vmem:[#allocation2 + $0x228] sm:$0xff] %v2571
        %2588 = vst [vmem:[#allocation2 + $0x270] sm:$0xff] %v2572
        %2589 = vst [vmem:[#allocation2 + $0x2b8] sm:$0xff] %v2573
        %2590 = vst [vmem:[#allocation2 + $0x300] sm:$0xff] %v2574
        %2591 = vst [vmem:[#allocation2 + $0x348] sm:$0xff] %v2575
        %2592 = vst [vmem:[#allocation2 + $0x390] sm:$0xff] %v2576
        %2593 = vst [vmem:[#allocation2 + $0x3d8] sm:$0xff] %v2577
        %2594 = vst [vmem:[#allocation2 + $0x420] sm:$0xff] %v2578
        %2595 = vst [vmem:[#allocation2 + $0x468] sm:$0xff] %v2579
        %v2596 = vld [vmem:[%s0] sm:$0xff]
        %v2597 = vld [vmem:[%s0 + $0x8] sm:$0xff]
        %v2598 = vld [vmem:[%s0 + $0x10] sm:$0xff]
        %v2599 = vld [vmem:[%s0 + $0x18] sm:$0xff]
        %v2600 = vld [vmem:[%s0 + $0x20] sm:$0xff]
        %v2601 = vld [vmem:[%s0 + $0x28] sm:$0xff]
        %v2602 = vld [vmem:[%s0 + $0x30] sm:$0xff]
        %v2603 = vld [vmem:[%s0 + $0x38] sm:$0xff]
        %v2604 = vld [vmem:[%s0 + $0x40] sm:$0xff]
        %v2605 = vld [vmem:[%s0 + $0x48] sm:$0xff]
        %v2606 = vld [vmem:[%s0 + $0x50] sm:$0xff]
        %v2607 = vld [vmem:[%s0 + $0x58] sm:$0xff]
        %v2608 = vld [vmem:[%s0 + $0x60] sm:$0xff]
        %v2609 = vld [vmem:[%s0 + $0x68] sm:$0xff]
        %v2610 = vld [vmem:[%s0 + $0x70] sm:$0xff]
        %v2611 = vld [vmem:[%s0 + $0x78] sm:$0xff]
        %v2612 = vld [vmem:[%s0 + $0x80] sm:$0xff]
        %v2613 = vld [vmem:[%s0 + $0x88] sm:$0xff]
        %v2614 = vld [vmem:[%s0 + $0x90] sm:$0xff]
        %v2615 = vld [vmem:[%s0 + $0x98] sm:$0xff]
        %v2616 = vld [vmem:[%s0 + $0xa0] sm:$0xff]
        %v2617 = vld [vmem:[%s0 + $0xa8] sm:$0xff]
        %v2618 = vld [vmem:[%s0 + $0xb0] sm:$0xff]
        %v2619 = vld [vmem:[%s0 + $0xb8] sm:$0xff]
        %v2620 = vld [vmem:[%s0 + $0xc0] sm:$0xff]
        %v2621 = vld [vmem:[%s0 + $0xc8] sm:$0xff]
        %v2622 = vld [vmem:[%s0 + $0xd0] sm:$0xff]
        %v2623 = vld [vmem:[%s0 + $0xd8] sm:$0xff]
        %v2624 = vld [vmem:[%s0 + $0xe0] sm:$0xff]
        %v2625 = vld [vmem:[%s0 + $0xe8] sm:$0xff]
        %v2626 = vld [vmem:[%s0 + $0xf0] sm:$0xff]
        %v2627 = vld [vmem:[%s0 + $0xf8] sm:$0xff]
        %2629 = vset.pattern.permute.xlu0 7
        %2630 = vperm.xlu0 %2629, %v2596
        %v2631 = vpop.permute.xlu0 %2630
        %2634 = vset.pattern.permute.xlu0 7
        %2635 = vperm.xlu0 %2634, %v2597
        %v2636 = vpop.permute.xlu0 %2635
        %2639 = vset.pattern.permute.xlu0 7
        %2640 = vperm.xlu0 %2639, %v2598
        %v2641 = vpop.permute.xlu0 %2640
        %2644 = vset.pattern.permute.xlu0 7
        %2645 = vperm.xlu0 %2644, %v2599
        %v2646 = vpop.permute.xlu0 %2645
        %2649 = vset.pattern.permute.xlu0 7
        %2650 = vperm.xlu0 %2649, %v2600
        %v2651 = vpop.permute.xlu0 %2650
        %2654 = vset.pattern.permute.xlu0 7
        %2655 = vperm.xlu0 %2654, %v2601
        %v2656 = vpop.permute.xlu0 %2655
        %2659 = vset.pattern.permute.xlu0 7
        %2660 = vperm.xlu0 %2659, %v2602
        %v2661 = vpop.permute.xlu0 %2660
        %2664 = vset.pattern.permute.xlu0 7
        %2665 = vperm.xlu0 %2664, %v2603
        %v2666 = vpop.permute.xlu0 %2665
        %2669 = vset.pattern.permute.xlu0 7
        %2670 = vperm.xlu0 %2669, %v2604
        %v2671 = vpop.permute.xlu0 %2670
        %2674 = vset.pattern.permute.xlu0 7
        %2675 = vperm.xlu0 %2674, %v2605
        %v2676 = vpop.permute.xlu0 %2675
        %2679 = vset.pattern.permute.xlu0 7
        %2680 = vperm.xlu0 %2679, %v2606
        %v2681 = vpop.permute.xlu0 %2680
        %2684 = vset.pattern.permute.xlu0 7
        %2685 = vperm.xlu0 %2684, %v2607
        %v2686 = vpop.permute.xlu0 %2685
        %2689 = vset.pattern.permute.xlu0 7
        %2690 = vperm.xlu0 %2689, %v2608
        %v2691 = vpop.permute.xlu0 %2690
        %2694 = vset.pattern.permute.xlu0 7
        %2695 = vperm.xlu0 %2694, %v2609
        %v2696 = vpop.permute.xlu0 %2695
        %2699 = vset.pattern.permute.xlu0 7
        %2700 = vperm.xlu0 %2699, %v2610
        %v2701 = vpop.permute.xlu0 %2700
        %2704 = vset.pattern.permute.xlu0 7
        %2705 = vperm.xlu0 %2704, %v2611
        %v2706 = vpop.permute.xlu0 %2705
        %2709 = vset.pattern.permute.xlu0 7
        %2710 = vperm.xlu0 %2709, %v2612
        %v2711 = vpop.permute.xlu0 %2710
        %2714 = vset.pattern.permute.xlu0 7
        %2715 = vperm.xlu0 %2714, %v2613
        %v2716 = vpop.permute.xlu0 %2715
        %2719 = vset.pattern.permute.xlu0 7
        %2720 = vperm.xlu0 %2719, %v2614
        %v2721 = vpop.permute.xlu0 %2720
        %2724 = vset.pattern.permute.xlu0 7
        %2725 = vperm.xlu0 %2724, %v2615
        %v2726 = vpop.permute.xlu0 %2725
        %2729 = vset.pattern.permute.xlu0 7
        %2730 = vperm.xlu0 %2729, %v2616
        %v2731 = vpop.permute.xlu0 %2730
        %2734 = vset.pattern.permute.xlu0 7
        %2735 = vperm.xlu0 %2734, %v2617
        %v2736 = vpop.permute.xlu0 %2735
        %2739 = vset.pattern.permute.xlu0 7
        %2740 = vperm.xlu0 %2739, %v2618
        %v2741 = vpop.permute.xlu0 %2740
        %2744 = vset.pattern.permute.xlu0 7
        %2745 = vperm.xlu0 %2744, %v2619
        %v2746 = vpop.permute.xlu0 %2745
        %2749 = vset.pattern.permute.xlu0 7
        %2750 = vperm.xlu0 %2749, %v2620
        %v2751 = vpop.permute.xlu0 %2750
        %2754 = vset.pattern.permute.xlu0 7
        %2755 = vperm.xlu0 %2754, %v2621
        %v2756 = vpop.permute.xlu0 %2755
        %2759 = vset.pattern.permute.xlu0 7
        %2760 = vperm.xlu0 %2759, %v2622
        %v2761 = vpop.permute.xlu0 %2760
        %2764 = vset.pattern.permute.xlu0 7
        %2765 = vperm.xlu0 %2764, %v2623
        %v2766 = vpop.permute.xlu0 %2765
        %2769 = vset.pattern.permute.xlu0 7
        %2770 = vperm.xlu0 %2769, %v2624
        %v2771 = vpop.permute.xlu0 %2770
        %2774 = vset.pattern.permute.xlu0 7
        %2775 = vperm.xlu0 %2774, %v2625
        %v2776 = vpop.permute.xlu0 %2775
        %2779 = vset.pattern.permute.xlu0 7
        %2780 = vperm.xlu0 %2779, %v2626
        %v2781 = vpop.permute.xlu0 %2780
        %2784 = vset.pattern.permute.xlu0 7
        %2785 = vperm.xlu0 %2784, %v2627
        %v2786 = vpop.permute.xlu0 %2785
        %v2788 = vmul.f32 %v866, %v2631
        %v2789 = vmul.f32 %v867, %v2636
        %v2790 = vmul.f32 %v868, %v2641
        %v2791 = vmul.f32 %v869, %v2646
        %v2792 = vmul.f32 %v870, %v2651
        %v2793 = vmul.f32 %v871, %v2656
        %v2794 = vmul.f32 %v872, %v2661
        %v2795 = vmul.f32 %v873, %v2666
        %v2796 = vmul.f32 %v874, %v2671
        %v2797 = vmul.f32 %v875, %v2676
        %v2798 = vmul.f32 %v876, %v2681
        %v2799 = vmul.f32 %v877, %v2686
        %v2800 = vmul.f32 %v878, %v2691
        %v2801 = vmul.f32 %v879, %v2696
        %v2802 = vmul.f32 %v880, %v2701
        %v2803 = vmul.f32 %v881, %v2706
        %v2804 = vmul.f32 %v882, %v2711
        %v2805 = vmul.f32 %v883, %v2716
        %v2806 = vmul.f32 %v884, %v2721
        %v2807 = vmul.f32 %v885, %v2726
        %v2808 = vmul.f32 %v886, %v2731
        %v2809 = vmul.f32 %v887, %v2736
        %v2810 = vmul.f32 %v888, %v2741
        %v2811 = vmul.f32 %v889, %v2746
        %v2812 = vmul.f32 %v890, %v2751
        %v2813 = vmul.f32 %v891, %v2756
        %v2814 = vmul.f32 %v892, %v2761
        %v2815 = vmul.f32 %v893, %v2766
        %v2816 = vmul.f32 %v894, %v2771
        %v2817 = vmul.f32 %v895, %v2776
        %v2818 = vmul.f32 %v864, %v2781
        %v2819 = vmul.f32 %v865, %v2786
        %v2820 = vpack.c.bf16 %v2789, %v2788
        %v2821 = vpack.c.bf16 %v2791, %v2790
        %v2822 = vpack.c.bf16 %v2793, %v2792
        %v2823 = vpack.c.bf16 %v2795, %v2794
        %v2824 = vpack.c.bf16 %v2797, %v2796
        %v2825 = vpack.c.bf16 %v2799, %v2798
        %v2826 = vpack.c.bf16 %v2801, %v2800
        %v2827 = vpack.c.bf16 %v2803, %v2802
        %v2828 = vpack.c.bf16 %v2805, %v2804
        %v2829 = vpack.c.bf16 %v2807, %v2806
        %v2830 = vpack.c.bf16 %v2809, %v2808
        %v2831 = vpack.c.bf16 %v2811, %v2810
        %v2832 = vpack.c.bf16 %v2813, %v2812
        %v2833 = vpack.c.bf16 %v2815, %v2814
        %v2834 = vpack.c.bf16 %v2817, %v2816
        %v2835 = vpack.c.bf16 %v2819, %v2818
        %2836 = vst [vmem:[#allocation2 + $0x38] sm:$0xff] %v2820
        %2837 = vst [vmem:[#allocation2 + $0x80] sm:$0xff] %v2821
        %2838 = vst [vmem:[#allocation2 + $0xc8] sm:$0xff] %v2822
        %2839 = vst [vmem:[#allocation2 + $0x110] sm:$0xff] %v2823
        %2840 = vst [vmem:[#allocation2 + $0x158] sm:$0xff] %v2824
        %2841 = vst [vmem:[#allocation2 + $0x1a0] sm:$0xff] %v2825
        %2842 = vst [vmem:[#allocation2 + $0x1e8] sm:$0xff] %v2826
        %2843 = vst [vmem:[#allocation2 + $0x230] sm:$0xff] %v2827
        %2844 = vst [vmem:[#allocation2 + $0x278] sm:$0xff] %v2828
        %2845 = vst [vmem:[#allocation2 + $0x2c0] sm:$0xff] %v2829
        %2846 = vst [vmem:[#allocation2 + $0x308] sm:$0xff] %v2830
        %2847 = vst [vmem:[#allocation2 + $0x350] sm:$0xff] %v2831
        %2848 = vst [vmem:[#allocation2 + $0x398] sm:$0xff] %v2832
        %2849 = vst [vmem:[#allocation2 + $0x3e0] sm:$0xff] %v2833
        %2850 = vst [vmem:[#allocation2 + $0x428] sm:$0xff] %v2834
        %2851 = vst [vmem:[#allocation2 + $0x470] sm:$0xff] %v2835
        %v2852 = vld [vmem:[%s0] sm:$0xff]
        %v2853 = vld [vmem:[%s0 + $0x8] sm:$0xff]
        %v2854 = vld [vmem:[%s0 + $0x10] sm:$0xff]
        %v2855 = vld [vmem:[%s0 + $0x18] sm:$0xff]
        %v2856 = vld [vmem:[%s0 + $0x20] sm:$0xff]
        %v2857 = vld [vmem:[%s0 + $0x28] sm:$0xff]
        %v2858 = vld [vmem:[%s0 + $0x30] sm:$0xff]
        %v2859 = vld [vmem:[%s0 + $0x38] sm:$0xff]
        %v2860 = vld [vmem:[%s0 + $0x40] sm:$0xff]
        %v2861 = vld [vmem:[%s0 + $0x48] sm:$0xff]
        %v2862 = vld [vmem:[%s0 + $0x50] sm:$0xff]
        %v2863 = vld [vmem:[%s0 + $0x58] sm:$0xff]
        %v2864 = vld [vmem:[%s0 + $0x60] sm:$0xff]
        %v2865 = vld [vmem:[%s0 + $0x68] sm:$0xff]
        %v2866 = vld [vmem:[%s0 + $0x70] sm:$0xff]
        %v2867 = vld [vmem:[%s0 + $0x78] sm:$0xff]
        %v2868 = vld [vmem:[%s0 + $0x80] sm:$0xff]
        %v2869 = vld [vmem:[%s0 + $0x88] sm:$0xff]
        %v2870 = vld [vmem:[%s0 + $0x90] sm:$0xff]
        %v2871 = vld [vmem:[%s0 + $0x98] sm:$0xff]
        %v2872 = vld [vmem:[%s0 + $0xa0] sm:$0xff]
        %v2873 = vld [vmem:[%s0 + $0xa8] sm:$0xff]
        %v2874 = vld [vmem:[%s0 + $0xb0] sm:$0xff]
        %v2875 = vld [vmem:[%s0 + $0xb8] sm:$0xff]
        %v2876 = vld [vmem:[%s0 + $0xc0] sm:$0xff]
        %v2877 = vld [vmem:[%s0 + $0xc8] sm:$0xff]
        %v2878 = vld [vmem:[%s0 + $0xd0] sm:$0xff]
        %v2879 = vld [vmem:[%s0 + $0xd8] sm:$0xff]
        %v2880 = vld [vmem:[%s0 + $0xe0] sm:$0xff]
        %v2881 = vld [vmem:[%s0 + $0xe8] sm:$0xff]
        %v2882 = vld [vmem:[%s0 + $0xf0] sm:$0xff]
        %v2883 = vld [vmem:[%s0 + $0xf8] sm:$0xff]
        %2885 = vset.pattern.permute.xlu0 8
        %2886 = vperm.xlu0 %2885, %v2852
        %v2887 = vpop.permute.xlu0 %2886
        %2890 = vset.pattern.permute.xlu0 8
        %2891 = vperm.xlu0 %2890, %v2853
        %v2892 = vpop.permute.xlu0 %2891
        %2895 = vset.pattern.permute.xlu0 8
        %2896 = vperm.xlu0 %2895, %v2854
        %v2897 = vpop.permute.xlu0 %2896
        %2900 = vset.pattern.permute.xlu0 8
        %2901 = vperm.xlu0 %2900, %v2855
        %v2902 = vpop.permute.xlu0 %2901
        %2905 = vset.pattern.permute.xlu0 8
        %2906 = vperm.xlu0 %2905, %v2856
        %v2907 = vpop.permute.xlu0 %2906
        %2910 = vset.pattern.permute.xlu0 8
        %2911 = vperm.xlu0 %2910, %v2857
        %v2912 = vpop.permute.xlu0 %2911
        %2915 = vset.pattern.permute.xlu0 8
        %2916 = vperm.xlu0 %2915, %v2858
        %v2917 = vpop.permute.xlu0 %2916
        %2920 = vset.pattern.permute.xlu0 8
        %2921 = vperm.xlu0 %2920, %v2859
        %v2922 = vpop.permute.xlu0 %2921
        %2925 = vset.pattern.permute.xlu0 8
        %2926 = vperm.xlu0 %2925, %v2860
        %v2927 = vpop.permute.xlu0 %2926
        %2930 = vset.pattern.permute.xlu0 8
        %2931 = vperm.xlu0 %2930, %v2861
        %v2932 = vpop.permute.xlu0 %2931
        %2935 = vset.pattern.permute.xlu0 8
        %2936 = vperm.xlu0 %2935, %v2862
        %v2937 = vpop.permute.xlu0 %2936
        %2940 = vset.pattern.permute.xlu0 8
        %2941 = vperm.xlu0 %2940, %v2863
        %v2942 = vpop.permute.xlu0 %2941
        %2945 = vset.pattern.permute.xlu0 8
        %2946 = vperm.xlu0 %2945, %v2864
        %v2947 = vpop.permute.xlu0 %2946
        %2950 = vset.pattern.permute.xlu0 8
        %2951 = vperm.xlu0 %2950, %v2865
        %v2952 = vpop.permute.xlu0 %2951
        %2955 = vset.pattern.permute.xlu0 8
        %2956 = vperm.xlu0 %2955, %v2866
        %v2957 = vpop.permute.xlu0 %2956
        %2960 = vset.pattern.permute.xlu0 8
        %2961 = vperm.xlu0 %2960, %v2867
        %v2962 = vpop.permute.xlu0 %2961
        %2965 = vset.pattern.permute.xlu0 8
        %2966 = vperm.xlu0 %2965, %v2868
        %v2967 = vpop.permute.xlu0 %2966
        %2970 = vset.pattern.permute.xlu0 8
        %2971 = vperm.xlu0 %2970, %v2869
        %v2972 = vpop.permute.xlu0 %2971
        %2975 = vset.pattern.permute.xlu0 8
        %2976 = vperm.xlu0 %2975, %v2870
        %v2977 = vpop.permute.xlu0 %2976
        %2980 = vset.pattern.permute.xlu0 8
        %2981 = vperm.xlu0 %2980, %v2871
        %v2982 = vpop.permute.xlu0 %2981
        %2985 = vset.pattern.permute.xlu0 8
        %2986 = vperm.xlu0 %2985, %v2872
        %v2987 = vpop.permute.xlu0 %2986
        %2990 = vset.pattern.permute.xlu0 8
        %2991 = vperm.xlu0 %2990, %v2873
        %v2992 = vpop.permute.xlu0 %2991
        %2995 = vset.pattern.permute.xlu0 8
        %2996 = vperm.xlu0 %2995, %v2874
        %v2997 = vpop.permute.xlu0 %2996
        %3000 = vset.pattern.permute.xlu0 8
        %3001 = vperm.xlu0 %3000, %v2875
        %v3002 = vpop.permute.xlu0 %3001
        %3005 = vset.pattern.permute.xlu0 8
        %3006 = vperm.xlu0 %3005, %v2876
        %v3007 = vpop.permute.xlu0 %3006
        %3010 = vset.pattern.permute.xlu0 8
        %3011 = vperm.xlu0 %3010, %v2877
        %v3012 = vpop.permute.xlu0 %3011
        %3015 = vset.pattern.permute.xlu0 8
        %3016 = vperm.xlu0 %3015, %v2878
        %v3017 = vpop.permute.xlu0 %3016
        %3020 = vset.pattern.permute.xlu0 8
        %3021 = vperm.xlu0 %3020, %v2879
        %v3022 = vpop.permute.xlu0 %3021
        %3025 = vset.pattern.permute.xlu0 8
        %3026 = vperm.xlu0 %3025, %v2880
        %v3027 = vpop.permute.xlu0 %3026
        %3030 = vset.pattern.permute.xlu0 8
        %3031 = vperm.xlu0 %3030, %v2881
        %v3032 = vpop.permute.xlu0 %3031
        %3035 = vset.pattern.permute.xlu0 8
        %3036 = vperm.xlu0 %3035, %v2882
        %v3037 = vpop.permute.xlu0 %3036
        %3040 = vset.pattern.permute.xlu0 8
        %3041 = vperm.xlu0 %3040, %v2883
        %v3042 = vpop.permute.xlu0 %3041
        %v3044 = vmul.f32 %v1536, %v2887
        %v3045 = vmul.f32 %v1535, %v2892
        %v3046 = vmul.f32 %v1534, %v2897
        %v3047 = vmul.f32 %v1533, %v2902
        %v3048 = vmul.f32 %v1532, %v2907
        %v3049 = vmul.f32 %v1531, %v2912
        %v3050 = vmul.f32 %v1530, %v2917
        %v3051 = vmul.f32 %v1529, %v2922
        %v3052 = vmul.f32 %v1528, %v2927
        %v3053 = vmul.f32 %v1527, %v2932
        %v3054 = vmul.f32 %v1526, %v2937
        %v3055 = vmul.f32 %v1525, %v2942
        %v3056 = vmul.f32 %v1524, %v2947
        %v3057 = vmul.f32 %v1523, %v2952
        %v3058 = vmul.f32 %v1522, %v2957
        %v3059 = vmul.f32 %v1521, %v2962
        %v3060 = vmul.f32 %v1520, %v2967
        %v3061 = vmul.f32 %v1519, %v2972
        %v3062 = vmul.f32 %v1518, %v2977
        %v3063 = vmul.f32 %v1517, %v2982
        %v3064 = vmul.f32 %v1516, %v2987
        %v3065 = vmul.f32 %v1515, %v2992
        %v3066 = vmul.f32 %v1514, %v2997
        %v3067 = vmul.f32 %v1513, %v3002
        %v3068 = vmul.f32 %v1512, %v3007
        %v3069 = vmul.f32 %v1511, %v3012
        %v3070 = vmul.f32 %v1510, %v3017
        %v3071 = vmul.f32 %v1509, %v3022
        %v3072 = vmul.f32 %v1508, %v3027
        %v3073 = vmul.f32 %v1539, %v3032
        %v3074 = vmul.f32 %v1538, %v3037
        %v3075 = vmul.f32 %v1537, %v3042
        %v3076 = vpack.c.bf16 %v3045, %v3044
        %v3077 = vpack.c.bf16 %v3047, %v3046
        %v3078 = vpack.c.bf16 %v3049, %v3048
        %v3079 = vpack.c.bf16 %v3051, %v3050
        %v3080 = vpack.c.bf16 %v3053, %v3052
        %v3081 = vpack.c.bf16 %v3055, %v3054
        %v3082 = vpack.c.bf16 %v3057, %v3056
        %v3083 = vpack.c.bf16 %v3059, %v3058
        %v3084 = vpack.c.bf16 %v3061, %v3060
        %v3085 = vpack.c.bf16 %v3063, %v3062
        %v3086 = vpack.c.bf16 %v3065, %v3064
        %v3087 = vpack.c.bf16 %v3067, %v3066
        %v3088 = vpack.c.bf16 %v3069, %v3068
        %v3089 = vpack.c.bf16 %v3071, %v3070
        %v3090 = vpack.c.bf16 %v3073, %v3072
        %v3091 = vpack.c.bf16 %v3075, %v3074
        %3092 = vst [vmem:[#allocation2 + $0x40] sm:$0xff] %v3076
        %3093 = vst [vmem:[#allocation2 + $0x88] sm:$0xff] %v3077
        %3094 = vst [vmem:[#allocation2 + $0xd0] sm:$0xff] %v3078
        %3095 = vst [vmem:[#allocation2 + $0x118] sm:$0xff] %v3079
        %3096 = vst [vmem:[#allocation2 + $0x160] sm:$0xff] %v3080
        %3097 = vst [vmem:[#allocation2 + $0x1a8] sm:$0xff] %v3081
        %3098 = vst [vmem:[#allocation2 + $0x1f0] sm:$0xff] %v3082
        %3099 = vst [vmem:[#allocation2 + $0x238] sm:$0xff] %v3083
        %3100 = vst [vmem:[#allocation2 + $0x280] sm:$0xff] %v3084
        %3101 = vst [vmem:[#allocation2 + $0x2c8] sm:$0xff] %v3085
        %3102 = vst [vmem:[#allocation2 + $0x310] sm:$0xff] %v3086
        %3103 = vst [vmem:[#allocation2 + $0x358] sm:$0xff] %v3087
        %3104 = vst [vmem:[#allocation2 + $0x3a0] sm:$0xff] %v3088
        %3105 = vst [vmem:[#allocation2 + $0x3e8] sm:$0xff] %v3089
        %3106 = vst [vmem:[#allocation2 + $0x430] sm:$0xff] %v3090
        %3107 = vst [vmem:[#allocation2 + $0x478] sm:$0xff] %v3091
        %v3108 = vld [vmem:[#allocation2] sm:$0xff]
        %v3109 = vld [vmem:[#allocation2 + $0x8] sm:$0xff]
        %v3110 = vld [vmem:[#allocation2 + $0x10] sm:$0xff]
        %v3111 = vld [vmem:[#allocation2 + $0x18] sm:$0xff]
        %v3112 = vld [vmem:[#allocation2 + $0x20] sm:$0xff]
        %v3113 = vld [vmem:[#allocation2 + $0x28] sm:$0xff]
        %v3114 = vld [vmem:[#allocation2 + $0x30] sm:$0xff]
        %v3115 = vld [vmem:[#allocation2 + $0x38] sm:$0xff]
        %v3116 = vld [vmem:[#allocation2 + $0x40] sm:$0xff]
        %v3117 = vld [vmem:[#allocation2 + $0x48] sm:$0xff]
        %v3118 = vld [vmem:[#allocation2 + $0x50] sm:$0xff]
        %v3119 = vld [vmem:[#allocation2 + $0x58] sm:$0xff]
        %v3120 = vld [vmem:[#allocation2 + $0x60] sm:$0xff]
        %v3121 = vld [vmem:[#allocation2 + $0x68] sm:$0xff]
        %v3122 = vld [vmem:[#allocation2 + $0x70] sm:$0xff]
        %v3123 = vld [vmem:[#allocation2 + $0x78] sm:$0xff]
        %v3124 = vld [vmem:[#allocation2 + $0x80] sm:$0xff]
        %v3125 = vld [vmem:[#allocation2 + $0x88] sm:$0xff]
        %v3126 = vld [vmem:[#allocation2 + $0x90] sm:$0xff]
        %v3127 = vld [vmem:[#allocation2 + $0x98] sm:$0xff]
        %v3128 = vld [vmem:[#allocation2 + $0xa0] sm:$0xff]
        %v3129 = vld [vmem:[#allocation2 + $0xa8] sm:$0xff]
        %v3130 = vld [vmem:[#allocation2 + $0xb0] sm:$0xff]
        %v3131 = vld [vmem:[#allocation2 + $0xb8] sm:$0xff]
        %v3132 = vld [vmem:[#allocation2 + $0xc0] sm:$0xff]
        %v3133 = vld [vmem:[#allocation2 + $0xc8] sm:$0xff]
        %v3134 = vld [vmem:[#allocation2 + $0xd0] sm:$0xff]
        %v3135 = vld [vmem:[#allocation2 + $0xd8] sm:$0xff]
        %v3136 = vld [vmem:[#allocation2 + $0xe0] sm:$0xff]
        %v3137 = vld [vmem:[#allocation2 + $0xe8] sm:$0xff]
        %v3138 = vld [vmem:[#allocation2 + $0xf0] sm:$0xff]
        %v3139 = vld [vmem:[#allocation2 + $0xf8] sm:$0xff]
        %v3140 = vld [vmem:[#allocation2 + $0x100] sm:$0xff]
        %v3141 = vld [vmem:[#allocation2 + $0x108] sm:$0xff]
        %v3142 = vld [vmem:[#allocation2 + $0x110] sm:$0xff]
        %v3143 = vld [vmem:[#allocation2 + $0x118] sm:$0xff]
        %v3144 = vld [vmem:[#allocation2 + $0x120] sm:$0xff]
        %v3145 = vld [vmem:[#allocation2 + $0x128] sm:$0xff]
        %v3146 = vld [vmem:[#allocation2 + $0x130] sm:$0xff]
        %v3147 = vld [vmem:[#allocation2 + $0x138] sm:$0xff]
        %v3148 = vld [vmem:[#allocation2 + $0x140] sm:$0xff]
        %v3149 = vld [vmem:[#allocation2 + $0x148] sm:$0xff]
        %v3150 = vld [vmem:[#allocation2 + $0x150] sm:$0xff]
        %v3151 = vld [vmem:[#allocation2 + $0x158] sm:$0xff]
        %v3152 = vld [vmem:[#allocation2 + $0x160] sm:$0xff]
        %v3153 = vld [vmem:[#allocation2 + $0x168] sm:$0xff]
        %v3154 = vld [vmem:[#allocation2 + $0x170] sm:$0xff]
        %v3155 = vld [vmem:[#allocation2 + $0x178] sm:$0xff]
        %v3156 = vld [vmem:[#allocation2 + $0x180] sm:$0xff]
        %v3157 = vld [vmem:[#allocation2 + $0x188] sm:$0xff]
        %v3158 = vld [vmem:[#allocation2 + $0x190] sm:$0xff]
        %v3159 = vld [vmem:[#allocation2 + $0x198] sm:$0xff]
        %v3160 = vld [vmem:[#allocation2 + $0x1a0] sm:$0xff]
        %v3161 = vld [vmem:[#allocation2 + $0x1a8] sm:$0xff]
        %v3162 = vld [vmem:[#allocation2 + $0x1b0] sm:$0xff]
        %v3163 = vld [vmem:[#allocation2 + $0x1b8] sm:$0xff]
        %v3164 = vld [vmem:[#allocation2 + $0x1c0] sm:$0xff]
        %v3165 = vld [vmem:[#allocation2 + $0x1c8] sm:$0xff]
        %v3166 = vld [vmem:[#allocation2 + $0x1d0] sm:$0xff]
        %v3167 = vld [vmem:[#allocation2 + $0x1d8] sm:$0xff]
        %v3168 = vld [vmem:[#allocation2 + $0x1e0] sm:$0xff]
        %v3169 = vld [vmem:[#allocation2 + $0x1e8] sm:$0xff]
        %v3170 = vld [vmem:[#allocation2 + $0x1f0] sm:$0xff]
        %v3171 = vld [vmem:[#allocation2 + $0x1f8] sm:$0xff]
        %v3172 = vld [vmem:[#allocation2 + $0x200] sm:$0xff]
        %v3173 = vld [vmem:[#allocation2 + $0x208] sm:$0xff]
        %v3174 = vld [vmem:[#allocation2 + $0x210] sm:$0xff]
        %v3175 = vld [vmem:[#allocation2 + $0x218] sm:$0xff]
        %v3176 = vld [vmem:[#allocation2 + $0x220] sm:$0xff]
        %v3177 = vld [vmem:[#allocation2 + $0x228] sm:$0xff]
        %v3178 = vld [vmem:[#allocation2 + $0x230] sm:$0xff]
        %v3179 = vld [vmem:[#allocation2 + $0x238] sm:$0xff]
        %v3180 = vld [vmem:[#allocation2 + $0x240] sm:$0xff]
        %v3181 = vld [vmem:[#allocation2 + $0x248] sm:$0xff]
        %v3182 = vld [vmem:[#allocation2 + $0x250] sm:$0xff]
        %v3183 = vld [vmem:[#allocation2 + $0x258] sm:$0xff]
        %v3184 = vld [vmem:[#allocation2 + $0x260] sm:$0xff]
        %v3185 = vld [vmem:[#allocation2 + $0x268] sm:$0xff]
        %v3186 = vld [vmem:[#allocation2 + $0x270] sm:$0xff]
        %v3187 = vld [vmem:[#allocation2 + $0x278] sm:$0xff]
        %v3188 = vld [vmem:[#allocation2 + $0x280] sm:$0xff]
        %v3189 = vld [vmem:[#allocation2 + $0x288] sm:$0xff]
        %v3190 = vld [vmem:[#allocation2 + $0x290] sm:$0xff]
        %v3191 = vld [vmem:[#allocation2 + $0x298] sm:$0xff]
        %v3192 = vld [vmem:[#allocation2 + $0x2a0] sm:$0xff]
        %v3193 = vld [vmem:[#allocation2 + $0x2a8] sm:$0xff]
        %v3194 = vld [vmem:[#allocation2 + $0x2b0] sm:$0xff]
        %v3195 = vld [vmem:[#allocation2 + $0x2b8] sm:$0xff]
        %v3196 = vld [vmem:[#allocation2 + $0x2c0] sm:$0xff]
        %v3197 = vld [vmem:[#allocation2 + $0x2c8] sm:$0xff]
        %v3198 = vld [vmem:[#allocation2 + $0x2d0] sm:$0xff]
        %v3199 = vld [vmem:[#allocation2 + $0x2d8] sm:$0xff]
        %v3200 = vld [vmem:[#allocation2 + $0x2e0] sm:$0xff]
        %v3201 = vld [vmem:[#allocation2 + $0x2e8] sm:$0xff]
        %v3202 = vld [vmem:[#allocation2 + $0x2f0] sm:$0xff]
        %v3203 = vld [vmem:[#allocation2 + $0x2f8] sm:$0xff]
        %v3204 = vld [vmem:[#allocation2 + $0x300] sm:$0xff]
        %v3205 = vld [vmem:[#allocation2 + $0x308] sm:$0xff]
        %v3206 = vld [vmem:[#allocation2 + $0x310] sm:$0xff]
        %v3207 = vld [vmem:[#allocation2 + $0x318] sm:$0xff]
        %v3208 = vld [vmem:[#allocation2 + $0x320] sm:$0xff]
        %v3209 = vld [vmem:[#allocation2 + $0x328] sm:$0xff]
        %v3210 = vld [vmem:[#allocation2 + $0x330] sm:$0xff]
        %v3211 = vld [vmem:[#allocation2 + $0x338] sm:$0xff]
        %v3212 = vld [vmem:[#allocation2 + $0x340] sm:$0xff]
        %v3213 = vld [vmem:[#allocation2 + $0x348] sm:$0xff]
        %v3214 = vld [vmem:[#allocation2 + $0x350] sm:$0xff]
        %v3215 = vld [vmem:[#allocation2 + $0x358] sm:$0xff]
        %v3216 = vld [vmem:[#allocation2 + $0x360] sm:$0xff]
        %v3217 = vld [vmem:[#allocation2 + $0x368] sm:$0xff]
        %v3218 = vld [vmem:[#allocation2 + $0x370] sm:$0xff]
        %v3219 = vld [vmem:[#allocation2 + $0x378] sm:$0xff]
        %v3220 = vld [vmem:[#allocation2 + $0x380] sm:$0xff]
        %v3221 = vld [vmem:[#allocation2 + $0x388] sm:$0xff]
        %v3222 = vld [vmem:[#allocation2 + $0x390] sm:$0xff]
        %v3223 = vld [vmem:[#allocation2 + $0x398] sm:$0xff]
        %v3224 = vld [vmem:[#allocation2 + $0x3a0] sm:$0xff]
        %v3225 = vld [vmem:[#allocation2 + $0x3a8] sm:$0xff]
        %v3226 = vld [vmem:[#allocation2 + $0x3b0] sm:$0xff]
        %v3227 = vld [vmem:[#allocation2 + $0x3b8] sm:$0xff]
        %v3228 = vld [vmem:[#allocation2 + $0x3c0] sm:$0xff]
        %v3229 = vld [vmem:[#allocation2 + $0x3c8] sm:$0xff]
        %v3230 = vld [vmem:[#allocation2 + $0x3d0] sm:$0xff]
        %v3231 = vld [vmem:[#allocation2 + $0x3d8] sm:$0xff]
        %v3232 = vld [vmem:[#allocation2 + $0x3e0] sm:$0xff]
        %v3233 = vld [vmem:[#allocation2 + $0x3e8] sm:$0xff]
        %v3234 = vld [vmem:[#allocation2 + $0x3f0] sm:$0xff]
        %v3235 = vld [vmem:[#allocation2 + $0x3f8] sm:$0xff]
        %v3236 = vld [vmem:[#allocation2 + $0x400] sm:$0xff]
        %v3237 = vld [vmem:[#allocation2 + $0x408] sm:$0xff]
        %v3238 = vld [vmem:[#allocation2 + $0x410] sm:$0xff]
        %v3239 = vld [vmem:[#allocation2 + $0x418] sm:$0xff]
        %v3240 = vld [vmem:[#allocation2 + $0x420] sm:$0xff]
        %v3241 = vld [vmem:[#allocation2 + $0x428] sm:$0xff]
        %v3242 = vld [vmem:[#allocation2 + $0x430] sm:$0xff]
        %v3243 = vld [vmem:[#allocation2 + $0x438] sm:$0xff]
        %v3244 = vld [vmem:[#allocation2 + $0x440] sm:$0xff]
        %v3245 = vld [vmem:[#allocation2 + $0x448] sm:$0xff]
        %v3246 = vld [vmem:[#allocation2 + $0x450] sm:$0xff]
        %v3247 = vld [vmem:[#allocation2 + $0x458] sm:$0xff]
        %v3248 = vld [vmem:[#allocation2 + $0x460] sm:$0xff]
        %v3249 = vld [vmem:[#allocation2 + $0x468] sm:$0xff]
        %v3250 = vld [vmem:[#allocation2 + $0x470] sm:$0xff]
        %v3251 = vld [vmem:[#allocation2 + $0x478] sm:$0xff]
        %v3252 = vld [vmem:[#allocation6] sm:$0xf]
        %v3253 = vld [vmem:[#allocation6 + $0x4] sm:$0xf]
        %v3254 = vld [vmem:[#allocation6 + $0x8] sm:$0xf]
        %v3255 = vld [vmem:[#allocation6 + $0xc] sm:$0xf]
        %v3256 = vld [vmem:[#allocation6 + $0x10] sm:$0xf]
        %v3257 = vld [vmem:[#allocation6 + $0x14] sm:$0xf]
        %v3258 = vld [vmem:[#allocation6 + $0x18] sm:$0xf]
        %v3259 = vld [vmem:[#allocation6 + $0x1c] sm:$0xf]
        %v3260 = vld [vmem:[#allocation6 + $0x20] sm:$0xf]
        %v3261 = vld [vmem:[#allocation6 + $0x24] sm:$0xf]
        %v3262 = vld [vmem:[#allocation6 + $0x28] sm:$0xf]
        %v3263 = vld [vmem:[#allocation6 + $0x2c] sm:$0xf]
        %v3264 = vld [vmem:[#allocation6 + $0x30] sm:$0xf]
        %v3265 = vld [vmem:[#allocation6 + $0x34] sm:$0xf]
        %v3266 = vld [vmem:[#allocation6 + $0x38] sm:$0xf]
        %v3267 = vld [vmem:[#allocation6 + $0x3c] sm:$0xf]
        %v3268 = vld [vmem:[#allocation6 + $0x40] sm:$0xf]
        %v3269 = vld [vmem:[#allocation6 + $0x44] sm:$0xf]
        %v3270 = vld [vmem:[#allocation6 + $0x48] sm:$0xf]
        %v3271 = vld [vmem:[#allocation6 + $0x4c] sm:$0xf]
        %v3272 = vld [vmem:[#allocation6 + $0x50] sm:$0xf]
        %v3273 = vld [vmem:[#allocation6 + $0x54] sm:$0xf]
        %v3274 = vld [vmem:[#allocation6 + $0x58] sm:$0xf]
        %v3275 = vld [vmem:[#allocation6 + $0x5c] sm:$0xf]
        %v3276 = vld [vmem:[#allocation6 + $0x60] sm:$0xf]
        %v3277 = vld [vmem:[#allocation6 + $0x64] sm:$0xf]
        %v3278 = vld [vmem:[#allocation6 + $0x68] sm:$0xf]
        %v3279 = vld [vmem:[#allocation6 + $0x6c] sm:$0xf]
        %v3280 = vld [vmem:[#allocation6 + $0x70] sm:$0xf]
        %v3281 = vld [vmem:[#allocation6 + $0x74] sm:$0xf]
        %v3282 = vld [vmem:[#allocation6 + $0x78] sm:$0xf]
        %v3283 = vld [vmem:[#allocation6 + $0x7c] sm:$0xf]
        %v3284 = vld [vmem:[#allocation6 + $0x80] sm:$0xf]
        %v3285 = vld [vmem:[#allocation6 + $0x84] sm:$0xf]
        %v3286 = vld [vmem:[#allocation6 + $0x88] sm:$0xf]
        %v3287 = vld [vmem:[#allocation6 + $0x8c] sm:$0xf]
        %v3288 = vld [vmem:[#allocation6 + $0x90] sm:$0xf]
        %v3289 = vld [vmem:[#allocation6 + $0x94] sm:$0xf]
        %v3290 = vld [vmem:[#allocation6 + $0x98] sm:$0xf]
        %v3291 = vld [vmem:[#allocation6 + $0x9c] sm:$0xf]
        %v3292 = vld [vmem:[#allocation6 + $0xa0] sm:$0xf]
        %v3293 = vld [vmem:[#allocation6 + $0xa4] sm:$0xf]
        %v3294 = vld [vmem:[#allocation6 + $0xa8] sm:$0xf]
        %v3295 = vld [vmem:[#allocation6 + $0xac] sm:$0xf]
        %v3296 = vld [vmem:[#allocation6 + $0xb0] sm:$0xf]
        %v3297 = vld [vmem:[#allocation6 + $0xb4] sm:$0xf]
        %v3298 = vld [vmem:[#allocation6 + $0xb8] sm:$0xf]
        %v3299 = vld [vmem:[#allocation6 + $0xbc] sm:$0xf]
        %v3300 = vld [vmem:[#allocation6 + $0xc0] sm:$0xf]
        %v3301 = vld [vmem:[#allocation6 + $0xc4] sm:$0xf]
        %v3302 = vld [vmem:[#allocation6 + $0xc8] sm:$0xf]
        %v3303 = vld [vmem:[#allocation6 + $0xcc] sm:$0xf]
        %v3304 = vld [vmem:[#allocation6 + $0xd0] sm:$0xf]
        %v3305 = vld [vmem:[#allocation6 + $0xd4] sm:$0xf]
        %v3306 = vld [vmem:[#allocation6 + $0xd8] sm:$0xf]
        %v3307 = vld [vmem:[#allocation6 + $0xdc] sm:$0xf]
        %v3308 = vld [vmem:[#allocation6 + $0xe0] sm:$0xf]
        %v3309 = vld [vmem:[#allocation6 + $0xe4] sm:$0xf]
        %v3310 = vld [vmem:[#allocation6 + $0xe8] sm:$0xf]
        %v3311 = vld [vmem:[#allocation6 + $0xec] sm:$0xf]
        %v3312 = vld [vmem:[#allocation6 + $0xf0] sm:$0xf]
        %v3313 = vld [vmem:[#allocation6 + $0xf4] sm:$0xf]
        %v3314 = vld [vmem:[#allocation6 + $0xf8] sm:$0xf]
        %v3315 = vld [vmem:[#allocation6 + $0xfc] sm:$0xf]
        %v3316 = vld [vmem:[#allocation6 + $0x100] sm:$0xf]
        %v3317 = vld [vmem:[#allocation6 + $0x104] sm:$0xf]
        %v3318 = vld [vmem:[#allocation6 + $0x108] sm:$0xf]
        %v3319 = vld [vmem:[#allocation6 + $0x10c] sm:$0xf]
        %v3320 = vld [vmem:[#allocation6 + $0x110] sm:$0xf]
        %v3321 = vld [vmem:[#allocation6 + $0x114] sm:$0xf]
        %v3322 = vld [vmem:[#allocation6 + $0x118] sm:$0xf]
        %v3323 = vld [vmem:[#allocation6 + $0x11c] sm:$0xf]
        %v3324 = vld [vmem:[#allocation6 + $0x120] sm:$0xf]
        %v3325 = vld [vmem:[#allocation6 + $0x124] sm:$0xf]
        %v3326 = vld [vmem:[#allocation6 + $0x128] sm:$0xf]
        %v3327 = vld [vmem:[#allocation6 + $0x12c] sm:$0xf]
        %v3328 = vld [vmem:[#allocation6 + $0x130] sm:$0xf]
        %v3329 = vld [vmem:[#allocation6 + $0x134] sm:$0xf]
        %v3330 = vld [vmem:[#allocation6 + $0x138] sm:$0xf]
        %v3331 = vld [vmem:[#allocation6 + $0x13c] sm:$0xf]
        %v3332 = vld [vmem:[#allocation6 + $0x140] sm:$0xf]
        %v3333 = vld [vmem:[#allocation6 + $0x144] sm:$0xf]
        %v3334 = vld [vmem:[#allocation6 + $0x148] sm:$0xf]
        %v3335 = vld [vmem:[#allocation6 + $0x14c] sm:$0xf]
        %v3336 = vld [vmem:[#allocation6 + $0x150] sm:$0xf]
        %v3337 = vld [vmem:[#allocation6 + $0x154] sm:$0xf]
        %v3338 = vld [vmem:[#allocation6 + $0x158] sm:$0xf]
        %v3339 = vld [vmem:[#allocation6 + $0x15c] sm:$0xf]
        %v3340 = vld [vmem:[#allocation6 + $0x160] sm:$0xf]
        %v3341 = vld [vmem:[#allocation6 + $0x164] sm:$0xf]
        %v3342 = vld [vmem:[#allocation6 + $0x168] sm:$0xf]
        %v3343 = vld [vmem:[#allocation6 + $0x16c] sm:$0xf]
        %v3344 = vld [vmem:[#allocation6 + $0x170] sm:$0xf]
        %v3345 = vld [vmem:[#allocation6 + $0x174] sm:$0xf]
        %v3346 = vld [vmem:[#allocation6 + $0x178] sm:$0xf]
        %v3347 = vld [vmem:[#allocation6 + $0x17c] sm:$0xf]
        %v3348 = vld [vmem:[#allocation6 + $0x180] sm:$0xf]
        %v3349 = vld [vmem:[#allocation6 + $0x184] sm:$0xf]
        %v3350 = vld [vmem:[#allocation6 + $0x188] sm:$0xf]
        %v3351 = vld [vmem:[#allocation6 + $0x18c] sm:$0xf]
        %v3352 = vld [vmem:[#allocation6 + $0x190] sm:$0xf]
        %v3353 = vld [vmem:[#allocation6 + $0x194] sm:$0xf]
        %v3354 = vld [vmem:[#allocation6 + $0x198] sm:$0xf]
        %v3355 = vld [vmem:[#allocation6 + $0x19c] sm:$0xf]
        %v3356 = vld [vmem:[#allocation6 + $0x1a0] sm:$0xf]
        %v3357 = vld [vmem:[#allocation6 + $0x1a4] sm:$0xf]
        %v3358 = vld [vmem:[#allocation6 + $0x1a8] sm:$0xf]
        %v3359 = vld [vmem:[#allocation6 + $0x1ac] sm:$0xf]
        %v3360 = vld [vmem:[#allocation6 + $0x1b0] sm:$0xf]
        %v3361 = vld [vmem:[#allocation6 + $0x1b4] sm:$0xf]
        %v3362 = vld [vmem:[#allocation6 + $0x1b8] sm:$0xf]
        %v3363 = vld [vmem:[#allocation6 + $0x1bc] sm:$0xf]
        %v3364 = vld [vmem:[#allocation6 + $0x1c0] sm:$0xf]
        %v3365 = vld [vmem:[#allocation6 + $0x1c4] sm:$0xf]
        %v3366 = vld [vmem:[#allocation6 + $0x1c8] sm:$0xf]
        %v3367 = vld [vmem:[#allocation6 + $0x1cc] sm:$0xf]
        %v3368 = vld [vmem:[#allocation6 + $0x1d0] sm:$0xf]
        %v3369 = vld [vmem:[#allocation6 + $0x1d4] sm:$0xf]
        %v3370 = vld [vmem:[#allocation6 + $0x1d8] sm:$0xf]
        %v3371 = vld [vmem:[#allocation6 + $0x1dc] sm:$0xf]
        %v3372 = vld [vmem:[#allocation6 + $0x1e0] sm:$0xf]
        %v3373 = vld [vmem:[#allocation6 + $0x1e4] sm:$0xf]
        %v3374 = vld [vmem:[#allocation6 + $0x1e8] sm:$0xf]
        %v3375 = vld [vmem:[#allocation6 + $0x1ec] sm:$0xf]
        %v3376 = vld [vmem:[#allocation6 + $0x1f0] sm:$0xf]
        %v3377 = vld [vmem:[#allocation6 + $0x1f4] sm:$0xf]
        %v3378 = vld [vmem:[#allocation6 + $0x1f8] sm:$0xf]
        %v3379 = vld [vmem:[#allocation6 + $0x1fc] sm:$0xf]
        %v3380 = vld [vmem:[#allocation6 + $0x200] sm:$0xf]
        %v3381 = vld [vmem:[#allocation6 + $0x204] sm:$0xf]
        %v3382 = vld [vmem:[#allocation6 + $0x208] sm:$0xf]
        %v3383 = vld [vmem:[#allocation6 + $0x20c] sm:$0xf]
        %v3384 = vld [vmem:[#allocation6 + $0x210] sm:$0xf]
        %v3385 = vld [vmem:[#allocation6 + $0x214] sm:$0xf]
        %v3386 = vld [vmem:[#allocation6 + $0x218] sm:$0xf]
        %v3387 = vld [vmem:[#allocation6 + $0x21c] sm:$0xf]
        %v3388 = vld [vmem:[#allocation6 + $0x220] sm:$0xf]
        %v3389 = vld [vmem:[#allocation6 + $0x224] sm:$0xf]
        %v3390 = vld [vmem:[#allocation6 + $0x228] sm:$0xf]
        %v3391 = vld [vmem:[#allocation6 + $0x22c] sm:$0xf]
        %v3392 = vld [vmem:[#allocation6 + $0x230] sm:$0xf]
        %v3393 = vld [vmem:[#allocation6 + $0x234] sm:$0xf]
        %v3394 = vld [vmem:[#allocation6 + $0x238] sm:$0xf]
        %v3395 = vld [vmem:[#allocation6 + $0x23c] sm:$0xf]
        %v3540 = vunpack.c.l.b16 %v3252
        %v3541 = vunpack.c.l.b16 %v3253
        %v3542 = vunpack.c.l.b16 %v3254
        %v3543 = vunpack.c.l.b16 %v3255
        %v3544 = vunpack.c.l.b16 %v3256
        %v3545 = vunpack.c.l.b16 %v3257
        %v3546 = vunpack.c.l.b16 %v3258
        %v3547 = vunpack.c.l.b16 %v3259
        %v3548 = vunpack.c.l.b16 %v3260
        %v3549 = vunpack.c.l.b16 %v3261
        %v3550 = vunpack.c.l.b16 %v3262
        %v3551 = vunpack.c.l.b16 %v3263
        %v3552 = vunpack.c.l.b16 %v3264
        %v3553 = vunpack.c.l.b16 %v3265
        %v3554 = vunpack.c.l.b16 %v3266
        %v3555 = vunpack.c.l.b16 %v3267
        %v3556 = vunpack.c.l.b16 %v3268
        %v3557 = vunpack.c.l.b16 %v3269
        %v3558 = vunpack.c.l.b16 %v3270
        %v3559 = vunpack.c.l.b16 %v3271
        %v3560 = vunpack.c.l.b16 %v3272
        %v3561 = vunpack.c.l.b16 %v3273
        %v3562 = vunpack.c.l.b16 %v3274
        %v3563 = vunpack.c.l.b16 %v3275
        %v3564 = vunpack.c.l.b16 %v3276
        %v3565 = vunpack.c.l.b16 %v3277
        %v3566 = vunpack.c.l.b16 %v3278
        %v3567 = vunpack.c.l.b16 %v3279
        %v3568 = vunpack.c.l.b16 %v3280
        %v3569 = vunpack.c.l.b16 %v3281
        %v3570 = vunpack.c.l.b16 %v3282
        %v3571 = vunpack.c.l.b16 %v3283
        %v3572 = vunpack.c.l.b16 %v3284
        %v3573 = vunpack.c.l.b16 %v3285
        %v3574 = vunpack.c.l.b16 %v3286
        %v3575 = vunpack.c.l.b16 %v3287
        %v3576 = vunpack.c.l.b16 %v3288
        %v3577 = vunpack.c.l.b16 %v3289
        %v3578 = vunpack.c.l.b16 %v3290
        %v3579 = vunpack.c.l.b16 %v3291
        %v3580 = vunpack.c.l.b16 %v3292
        %v3581 = vunpack.c.l.b16 %v3293
        %v3582 = vunpack.c.l.b16 %v3294
        %v3583 = vunpack.c.l.b16 %v3295
        %v3584 = vunpack.c.l.b16 %v3296
        %v3585 = vunpack.c.l.b16 %v3297
        %v3586 = vunpack.c.l.b16 %v3298
        %v3587 = vunpack.c.l.b16 %v3299
        %v3588 = vunpack.c.l.b16 %v3300
        %v3589 = vunpack.c.l.b16 %v3301
        %v3590 = vunpack.c.l.b16 %v3302
        %v3591 = vunpack.c.l.b16 %v3303
        %v3592 = vunpack.c.l.b16 %v3304
        %v3593 = vunpack.c.l.b16 %v3305
        %v3594 = vunpack.c.l.b16 %v3306
        %v3595 = vunpack.c.l.b16 %v3307
        %v3596 = vunpack.c.l.b16 %v3308
        %v3597 = vunpack.c.l.b16 %v3309
        %v3598 = vunpack.c.l.b16 %v3310
        %v3599 = vunpack.c.l.b16 %v3311
        %v3600 = vunpack.c.l.b16 %v3312
        %v3601 = vunpack.c.l.b16 %v3313
        %v3602 = vunpack.c.l.b16 %v3314
        %v3603 = vunpack.c.l.b16 %v3315
        %v3604 = vunpack.c.l.b16 %v3316
        %v3605 = vunpack.c.l.b16 %v3317
        %v3606 = vunpack.c.l.b16 %v3318
        %v3607 = vunpack.c.l.b16 %v3319
        %v3608 = vunpack.c.l.b16 %v3320
        %v3609 = vunpack.c.l.b16 %v3321
        %v3610 = vunpack.c.l.b16 %v3322
        %v3611 = vunpack.c.l.b16 %v3323
        %v3612 = vunpack.c.l.b16 %v3324
        %v3613 = vunpack.c.l.b16 %v3325
        %v3614 = vunpack.c.l.b16 %v3326
        %v3615 = vunpack.c.l.b16 %v3327
        %v3616 = vunpack.c.l.b16 %v3328
        %v3617 = vunpack.c.l.b16 %v3329
        %v3618 = vunpack.c.l.b16 %v3330
        %v3619 = vunpack.c.l.b16 %v3331
        %v3620 = vunpack.c.l.b16 %v3332
        %v3621 = vunpack.c.l.b16 %v3333
        %v3622 = vunpack.c.l.b16 %v3334
        %v3623 = vunpack.c.l.b16 %v3335
        %v3624 = vunpack.c.l.b16 %v3336
        %v3625 = vunpack.c.l.b16 %v3337
        %v3626 = vunpack.c.l.b16 %v3338
        %v3627 = vunpack.c.l.b16 %v3339
        %v3628 = vunpack.c.l.b16 %v3340
        %v3629 = vunpack.c.l.b16 %v3341
        %v3630 = vunpack.c.l.b16 %v3342
        %v3631 = vunpack.c.l.b16 %v3343
        %v3632 = vunpack.c.l.b16 %v3344
        %v3633 = vunpack.c.l.b16 %v3345
        %v3634 = vunpack.c.l.b16 %v3346
        %v3635 = vunpack.c.l.b16 %v3347
        %v3636 = vunpack.c.l.b16 %v3348
        %v3637 = vunpack.c.l.b16 %v3349
        %v3638 = vunpack.c.l.b16 %v3350
        %v3639 = vunpack.c.l.b16 %v3351
        %v3640 = vunpack.c.l.b16 %v3352
        %v3641 = vunpack.c.l.b16 %v3353
        %v3642 = vunpack.c.l.b16 %v3354
        %v3643 = vunpack.c.l.b16 %v3355
        %v3644 = vunpack.c.l.b16 %v3356
        %v3645 = vunpack.c.l.b16 %v3357
        %v3646 = vunpack.c.l.b16 %v3358
        %v3647 = vunpack.c.l.b16 %v3359
        %v3648 = vunpack.c.l.b16 %v3360
        %v3649 = vunpack.c.l.b16 %v3361
        %v3650 = vunpack.c.l.b16 %v3362
        %v3651 = vunpack.c.l.b16 %v3363
        %v3652 = vunpack.c.l.b16 %v3364
        %v3653 = vunpack.c.l.b16 %v3365
        %v3654 = vunpack.c.l.b16 %v3366
        %v3655 = vunpack.c.l.b16 %v3367
        %v3656 = vunpack.c.l.b16 %v3368
        %v3657 = vunpack.c.l.b16 %v3369
        %v3658 = vunpack.c.l.b16 %v3370
        %v3659 = vunpack.c.l.b16 %v3371
        %v3660 = vunpack.c.l.b16 %v3372
        %v3661 = vunpack.c.l.b16 %v3373
        %v3662 = vunpack.c.l.b16 %v3374
        %v3663 = vunpack.c.l.b16 %v3375
        %v3664 = vunpack.c.l.b16 %v3376
        %v3665 = vunpack.c.l.b16 %v3377
        %v3666 = vunpack.c.l.b16 %v3378
        %v3667 = vunpack.c.l.b16 %v3379
        %v3668 = vunpack.c.l.b16 %v3380
        %v3669 = vunpack.c.l.b16 %v3381
        %v3670 = vunpack.c.l.b16 %v3382
        %v3671 = vunpack.c.l.b16 %v3383
        %v3672 = vunpack.c.l.b16 %v3384
        %v3673 = vunpack.c.l.b16 %v3385
        %v3674 = vunpack.c.l.b16 %v3386
        %v3675 = vunpack.c.l.b16 %v3387
        %v3676 = vunpack.c.l.b16 %v3388
        %v3677 = vunpack.c.l.b16 %v3389
        %v3678 = vunpack.c.l.b16 %v3390
        %v3679 = vunpack.c.l.b16 %v3391
        %v3680 = vunpack.c.l.b16 %v3392
        %v3681 = vunpack.c.l.b16 %v3393
        %v3682 = vunpack.c.l.b16 %v3394
        %v3683 = vunpack.c.l.b16 %v3395
        %v3684 = vpack.c.b16 %v3541, %v3540
        %v3685 = vpack.c.b16 %v3543, %v3542
        %v3686 = vpack.c.b16 %v3545, %v3544
        %v3687 = vpack.c.b16 %v3547, %v3546
        %v3688 = vpack.c.b16 %v3549, %v3548
        %v3689 = vpack.c.b16 %v3551, %v3550
        %v3690 = vpack.c.b16 %v3553, %v3552
        %v3691 = vpack.c.b16 %v3555, %v3554
        %v3692 = vpack.c.b16 %v3557, %v3556
        %v3693 = vpack.c.b16 %v3559, %v3558
        %v3694 = vpack.c.b16 %v3561, %v3560
        %v3695 = vpack.c.b16 %v3563, %v3562
        %v3696 = vpack.c.b16 %v3565, %v3564
        %v3697 = vpack.c.b16 %v3567, %v3566
        %v3698 = vpack.c.b16 %v3569, %v3568
        %v3699 = vpack.c.b16 %v3571, %v3570
        %v3700 = vpack.c.b16 %v3573, %v3572
        %v3701 = vpack.c.b16 %v3575, %v3574
        %v3702 = vpack.c.b16 %v3577, %v3576
        %v3703 = vpack.c.b16 %v3579, %v3578
        %v3704 = vpack.c.b16 %v3581, %v3580
        %v3705 = vpack.c.b16 %v3583, %v3582
        %v3706 = vpack.c.b16 %v3585, %v3584
        %v3707 = vpack.c.b16 %v3587, %v3586
        %v3708 = vpack.c.b16 %v3589, %v3588
        %v3709 = vpack.c.b16 %v3591, %v3590
        %v3710 = vpack.c.b16 %v3593, %v3592
        %v3711 = vpack.c.b16 %v3595, %v3594
        %v3712 = vpack.c.b16 %v3597, %v3596
        %v3713 = vpack.c.b16 %v3599, %v3598
        %v3714 = vpack.c.b16 %v3601, %v3600
        %v3715 = vpack.c.b16 %v3603, %v3602
        %v3716 = vpack.c.b16 %v3605, %v3604
        %v3717 = vpack.c.b16 %v3607, %v3606
        %v3718 = vpack.c.b16 %v3609, %v3608
        %v3719 = vpack.c.b16 %v3611, %v3610
        %v3720 = vpack.c.b16 %v3613, %v3612
        %v3721 = vpack.c.b16 %v3615, %v3614
        %v3722 = vpack.c.b16 %v3617, %v3616
        %v3723 = vpack.c.b16 %v3619, %v3618
        %v3724 = vpack.c.b16 %v3621, %v3620
        %v3725 = vpack.c.b16 %v3623, %v3622
        %v3726 = vpack.c.b16 %v3625, %v3624
        %v3727 = vpack.c.b16 %v3627, %v3626
        %v3728 = vpack.c.b16 %v3629, %v3628
        %v3729 = vpack.c.b16 %v3631, %v3630
        %v3730 = vpack.c.b16 %v3633, %v3632
        %v3731 = vpack.c.b16 %v3635, %v3634
        %v3732 = vpack.c.b16 %v3637, %v3636
        %v3733 = vpack.c.b16 %v3639, %v3638
        %v3734 = vpack.c.b16 %v3641, %v3640
        %v3735 = vpack.c.b16 %v3643, %v3642
        %v3736 = vpack.c.b16 %v3645, %v3644
        %v3737 = vpack.c.b16 %v3647, %v3646
        %v3738 = vpack.c.b16 %v3649, %v3648
        %v3739 = vpack.c.b16 %v3651, %v3650
        %v3740 = vpack.c.b16 %v3653, %v3652
        %v3741 = vpack.c.b16 %v3655, %v3654
        %v3742 = vpack.c.b16 %v3657, %v3656
        %v3743 = vpack.c.b16 %v3659, %v3658
        %v3744 = vpack.c.b16 %v3661, %v3660
        %v3745 = vpack.c.b16 %v3663, %v3662
        %v3746 = vpack.c.b16 %v3665, %v3664
        %v3747 = vpack.c.b16 %v3667, %v3666
        %v3748 = vpack.c.b16 %v3669, %v3668
        %v3749 = vpack.c.b16 %v3671, %v3670
        %v3750 = vpack.c.b16 %v3673, %v3672
        %v3751 = vpack.c.b16 %v3675, %v3674
        %v3752 = vpack.c.b16 %v3677, %v3676
        %v3753 = vpack.c.b16 %v3679, %v3678
        %v3754 = vpack.c.b16 %v3681, %v3680
        %v3755 = vpack.c.b16 %v3683, %v3682
        %3828 = vmatprep.subr.bf16.mxu0 0
        %3829 = vmatpush1.bf16.msra.mxu0 %v3684
        %3830 = vmatprep.subr.bf16.mxu0 0
        %3831 = vmatpush1.bf16.msra.mxu0 %v3685
        %3832 = vmatprep.subr.bf16.mxu0 0
        %3833 = vmatpush1.bf16.msra.mxu0 %v3686
        %3834 = vmatprep.subr.bf16.mxu0 0
        %3835 = vmatpush1.bf16.msra.mxu0 %v3687
        %3836 = vmatprep.subr.bf16.mxu0 0
        %3837 = vmatpush1.bf16.msra.mxu0 %v3688
        %3838 = vmatprep.subr.bf16.mxu0 0
        %3839 = vmatpush1.bf16.msra.mxu0 %v3689
        %3840 = vmatprep.subr.bf16.mxu0 0
        %3841 = vmatpush1.bf16.msra.mxu0 %v3690
        %3842 = vmatprep.subr.bf16.mxu0 0
        %3843 = vmatpush1.bf16.msra.mxu0 %v3691
        %3844 = vmatprep.subr.bf16.mxu0 0
        %3845 = vmatpush1.bf16.msra.mxu0 %v3692
        %3846 = vmatprep.subr.bf16.mxu0 0
        %3847 = vmatpush1.bf16.msra.mxu0 %v3693
        %3848 = vmatprep.subr.bf16.mxu0 0
        %3849 = vmatpush1.bf16.msra.mxu0 %v3694
        %3850 = vmatprep.subr.bf16.mxu0 0
        %3851 = vmatpush1.bf16.msra.mxu0 %v3695
        %3852 = vmatprep.subr.bf16.mxu0 0
        %3853 = vmatpush1.bf16.msra.mxu0 %v3696
        %3854 = vmatprep.subr.bf16.mxu0 0
        %3855 = vmatpush1.bf16.msra.mxu0 %v3697
        %3856 = vmatprep.subr.bf16.mxu0 0
        %3857 = vmatpush1.bf16.msra.mxu0 %v3698
        %3858 = vmatprep.subr.bf16.mxu0 0
        %3859 = vmatpush1.bf16.msra.mxu0 %v3699
        %3860 = vmatprep.mubr.bf16.mxu0 %v3109
        %3861 = vmatmul.mubr.bf16.gmra.mrb[0].mxu0 %v3108
        %v3862 = vpop.f32.mrb[0].mxu0
        %v3863 = vadd.f32 0.0, %v3862
        %v3864 = vpop.f32.mrb[0].mxu0
        %v3865 = vpop.f32.mrb[0].mxu0
        %v3866 = vadd.f32 0.0, %v3865
        %v3867 = vpop.f32.mrb[0].mxu0
        %3868 = vmatprep.mubr.bf16.mxu0 %v3118
        %3869 = vmatmul.mubr.bf16.gmra.mrb[0].mxu0 %v3117
        %v3870 = vpop.f32.mrb[0].mxu0
        %v3871 = vadd.f32 0.0, %v3870
        %v3872 = vpop.f32.mrb[0].mxu0
        %v3873 = vpop.f32.mrb[0].mxu0
        %v3874 = vadd.f32 0.0, %v3873
        %v3875 = vpop.f32.mrb[0].mxu0
        %3876 = vmatprep.mubr.bf16.mxu0 %v3127
        %3877 = vmatmul.mubr.bf16.gmra.mrb[0].mxu0 %v3126
        %v3878 = vpop.f32.mrb[0].mxu0
        %v3879 = vadd.f32 0.0, %v3878
        %v3880 = vpop.f32.mrb[0].mxu0
        %v3881 = vpop.f32.mrb[0].mxu0
        %v3882 = vadd.f32 0.0, %v3881
        %v3883 = vpop.f32.mrb[0].mxu0
        %3884 = vmatprep.mubr.bf16.mxu0 %v3136
        %3885 = vmatmul.mubr.bf16.gmra.mrb[0].mxu0 %v3135
        %v3886 = vpop.f32.mrb[0].mxu0
        %v3887 = vadd.f32 0.0, %v3886
        %v3888 = vpop.f32.mrb[0].mxu0
        %v3889 = vpop.f32.mrb[0].mxu0
        %v3890 = vadd.f32 0.0, %v3889
        %v3891 = vpop.f32.mrb[0].mxu0
        %3892 = vmatprep.mubr.bf16.mxu0 %v3145
        %3893 = vmatmul.mubr.bf16.gmra.mrb[0].mxu0 %v3144
        %v3894 = vpop.f32.mrb[0].mxu0
        %v3895 = vadd.f32 0.0, %v3894
        %v3896 = vpop.f32.mrb[0].mxu0
        %v3897 = vpop.f32.mrb[0].mxu0
        %v3898 = vadd.f32 0.0, %v3897
        %v3899 = vpop.f32.mrb[0].mxu0
        %3900 = vmatprep.mubr.bf16.mxu0 %v3154
        %3901 = vmatmul.mubr.bf16.gmra.mrb[0].mxu0 %v3153
        %v3902 = vpop.f32.mrb[0].mxu0
        %v3903 = vadd.f32 0.0, %v3902
        %v3904 = vpop.f32.mrb[0].mxu0
        %v3905 = vpop.f32.mrb[0].mxu0
        %v3906 = vadd.f32 0.0, %v3905
        %v3907 = vpop.f32.mrb[0].mxu0
        %3908 = vmatprep.mubr.bf16.mxu0 %v3163
        %3909 = vmatmul.mubr.bf16.gmra.mrb[0].mxu0 %v3162
        %v3910 = vpop.f32.mrb[0].mxu0
        %v3911 = vadd.f32 0.0, %v3910
        %v3912 = vpop.f32.mrb[0].mxu0
        %v3913 = vpop.f32.mrb[0].mxu0
        %v3914 = vadd.f32 0.0, %v3913
        %v3915 = vpop.f32.mrb[0].mxu0
        %3916 = vmatprep.mubr.bf16.mxu0 %v3172
        %3917 = vmatmul.mubr.bf16.gmra.mrb[0].mxu0 %v3171
        %v3918 = vpop.f32.mrb[0].mxu0
        %v3919 = vadd.f32 0.0, %v3918
        %v3920 = vpop.f32.mrb[0].mxu0
        %v3921 = vpop.f32.mrb[0].mxu0
        %v3922 = vadd.f32 0.0, %v3921
        %v3923 = vpop.f32.mrb[0].mxu0
        %3924 = vmatprep.mubr.bf16.mxu0 %v3181
        %3925 = vmatmul.mubr.bf16.gmra.mrb[0].mxu0 %v3180
        %v3926 = vpop.f32.mrb[0].mxu0
        %v3927 = vadd.f32 0.0, %v3926
        %v3928 = vpop.f32.mrb[0].mxu0
        %v3929 = vpop.f32.mrb[0].mxu0
        %v3930 = vadd.f32 0.0, %v3929
        %v3931 = vpop.f32.mrb[0].mxu0
        %3932 = vmatprep.mubr.bf16.mxu0 %v3190
        %3933 = vmatmul.mubr.bf16.gmra.mrb[0].mxu0 %v3189
        %v3934 = vpop.f32.mrb[0].mxu0
        %v3935 = vadd.f32 0.0, %v3934
        %v3936 = vpop.f32.mrb[0].mxu0
        %v3937 = vpop.f32.mrb[0].mxu0
        %v3938 = vadd.f32 0.0, %v3937
        %v3939 = vpop.f32.mrb[0].mxu0
        %3940 = vmatprep.mubr.bf16.mxu0 %v3199
        %3941 = vmatmul.mubr.bf16.gmra.mrb[0].mxu0 %v3198
        %v3942 = vpop.f32.mrb[0].mxu0
        %v3943 = vadd.f32 0.0, %v3942
        %v3944 = vpop.f32.mrb[0].mxu0
        %v3945 = vpop.f32.mrb[0].mxu0
        %v3946 = vadd.f32 0.0, %v3945
        %v3947 = vpop.f32.mrb[0].mxu0
        %3948 = vmatprep.mubr.bf16.mxu0 %v3208
        %3949 = vmatmul.mubr.bf16.gmra.mrb[0].mxu0 %v3207
        %v3950 = vpop.f32.mrb[0].mxu0
        %v3951 = vadd.f32 0.0, %v3950
        %v3952 = vpop.f32.mrb[0].mxu0
        %v3953 = vpop.f32.mrb[0].mxu0
        %v3954 = vadd.f32 0.0, %v3953
        %v3955 = vpop.f32.mrb[0].mxu0
        %3956 = vmatprep.mubr.bf16.mxu0 %v3217
        %3957 = vmatmul.mubr.bf16.gmra.mrb[0].mxu0 %v3216
        %v3958 = vpop.f32.mrb[0].mxu0
        %v3959 = vadd.f32 0.0, %v3958
        %v3960 = vpop.f32.mrb[0].mxu0
        %v3961 = vpop.f32.mrb[0].mxu0
        %v3962 = vadd.f32 0.0, %v3961
        %v3963 = vpop.f32.mrb[0].mxu0
        %3964 = vmatprep.mubr.bf16.mxu0 %v3226
        %3965 = vmatmul.mubr.bf16.gmra.mrb[0].mxu0 %v3225
        %v3966 = vpop.f32.mrb[0].mxu0
        %v3967 = vadd.f32 0.0, %v3966
        %v3968 = vpop.f32.mrb[0].mxu0
        %v3969 = vpop.f32.mrb[0].mxu0
        %v3970 = vadd.f32 0.0, %v3969
        %v3971 = vpop.f32.mrb[0].mxu0
        %3972 = vmatprep.mubr.bf16.mxu0 %v3235
        %3973 = vmatmul.mubr.bf16.gmra.mrb[0].mxu0 %v3234
        %v3974 = vpop.f32.mrb[0].mxu0
        %v3975 = vadd.f32 0.0, %v3974
        %v3976 = vpop.f32.mrb[0].mxu0
        %v3977 = vpop.f32.mrb[0].mxu0
        %v3978 = vadd.f32 0.0, %v3977
        %v3979 = vpop.f32.mrb[0].mxu0
        %3980 = vmatprep.mubr.bf16.mxu0 %v3244
        %3981 = vmatmul.mubr.bf16.gmra.mrb[0].mxu0 %v3243
        %v3982 = vpop.f32.mrb[0].mxu0
        %v3983 = vadd.f32 0.0, %v3982
        %v3984 = vpop.f32.mrb[0].mxu0
        %v3985 = vpop.f32.mrb[0].mxu0
        %v3986 = vadd.f32 0.0, %v3985
        %v3987 = vpop.f32.mrb[0].mxu0
        %3988 = vdwg.mxu0
        %3989 = vmatprep.subr.bf16.mxu0 0
        %3990 = vmatpush1.bf16.msra.mxu0 %v3700
        %3991 = vmatprep.subr.bf16.mxu0 0
        %3992 = vmatpush1.bf16.msra.mxu0 %v3701
        %3993 = vmatprep.subr.bf16.mxu0 0
        %3994 = vmatpush1.bf16.msra.mxu0 %v3702
        %3995 = vmatprep.subr.bf16.mxu0 0
        %3996 = vmatpush1.bf16.msra.mxu0 %v3703
        %3997 = vmatprep.subr.bf16.mxu0 0
        %3998 = vmatpush1.bf16.msra.mxu0 %v3704
        %3999 = vmatprep.subr.bf16.mxu0 0
        %4000 = vmatpush1.bf16.msra.mxu0 %v3705
        %4001 = vmatprep.subr.bf16.mxu0 0
        %4002 = vmatpush1.bf16.msra.mxu0 %v3706
        %4003 = vmatprep.subr.bf16.mxu0 0
        %4004 = vmatpush1.bf16.msra.mxu0 %v3707
        %4005 = vmatprep.subr.bf16.mxu0 0
        %4006 = vmatpush1.bf16.msra.mxu0 %v3708
        %4007 = vmatprep.subr.bf16.mxu0 0
        %4008 = vmatpush1.bf16.msra.mxu0 %v3709
        %4009 = vmatprep.subr.bf16.mxu0 0
        %4010 = vmatpush1.bf16.msra.mxu0 %v3710
        %4011 = vmatprep.subr.bf16.mxu0 0
        %4012 = vmatpush1.bf16.msra.mxu0 %v3711
        %4013 = vmatprep.subr.bf16.mxu0 0
        %4014 = vmatpush1.bf16.msra.mxu0 %v3712
        %4015 = vmatprep.subr.bf16.mxu0 0
        %4016 = vmatpush1.bf16.msra.mxu0 %v3713
        %4017 = vmatprep.subr.bf16.mxu0 0
        %4018 = vmatpush1.bf16.msra.mxu0 %v3714
        %4019 = vmatprep.subr.bf16.mxu0 0
        %4020 = vmatpush1.bf16.msra.mxu0 %v3715
        %4021 = vmatprep.mubr.bf16.mxu0 %v3111
        %4022 = vmatmul.mubr.bf16.gmra.mrb[0].mxu0 %v3110
        %v4023 = vpop.f32.mrb[0].mxu0
        %v4024 = vadd.f32 %v3863, %v4023
        %v4025 = vpop.f32.mrb[0].mxu0
        %v4026 = vpop.f32.mrb[0].mxu0
        %v4027 = vadd.f32 %v3866, %v4026
        %v4028 = vpop.f32.mrb[0].mxu0
        %4029 = vmatprep.mubr.bf16.mxu0 %v3120
        %4030 = vmatmul.mubr.bf16.gmra.mrb[0].mxu0 %v3119
        %v4031 = vpop.f32.mrb[0].mxu0
        %v4032 = vadd.f32 %v3871, %v4031
        %v4033 = vpop.f32.mrb[0].mxu0
        %v4034 = vpop.f32.mrb[0].mxu0
        %v4035 = vadd.f32 %v3874, %v4034
        %v4036 = vpop.f32.mrb[0].mxu0
        %4037 = vmatprep.mubr.bf16.mxu0 %v3129
        %4038 = vmatmul.mubr.bf16.gmra.mrb[0].mxu0 %v3128
        %v4039 = vpop.f32.mrb[0].mxu0
        %v4040 = vadd.f32 %v3879, %v4039
        %v4041 = vpop.f32.mrb[0].mxu0
        %v4042 = vpop.f32.mrb[0].mxu0
        %v4043 = vadd.f32 %v3882, %v4042
        %v4044 = vpop.f32.mrb[0].mxu0
        %4045 = vmatprep.mubr.bf16.mxu0 %v3138
        %4046 = vmatmul.mubr.bf16.gmra.mrb[0].mxu0 %v3137
        %v4047 = vpop.f32.mrb[0].mxu0
        %v4048 = vadd.f32 %v3887, %v4047
        %v4049 = vpop.f32.mrb[0].mxu0
        %v4050 = vpop.f32.mrb[0].mxu0
        %v4051 = vadd.f32 %v3890, %v4050
        %v4052 = vpop.f32.mrb[0].mxu0
        %4053 = vmatprep.mubr.bf16.mxu0 %v3147
        %4054 = vmatmul.mubr.bf16.gmra.mrb[0].mxu0 %v3146
        %v4055 = vpop.f32.mrb[0].mxu0
        %v4056 = vadd.f32 %v3895, %v4055
        %v4057 = vpop.f32.mrb[0].mxu0
        %v4058 = vpop.f32.mrb[0].mxu0
        %v4059 = vadd.f32 %v3898, %v4058
        %v4060 = vpop.f32.mrb[0].mxu0
        %4061 = vmatprep.mubr.bf16.mxu0 %v3156
        %4062 = vmatmul.mubr.bf16.gmra.mrb[0].mxu0 %v3155
        %v4063 = vpop.f32.mrb[0].mxu0
        %v4064 = vadd.f32 %v3903, %v4063
        %v4065 = vpop.f32.mrb[0].mxu0
        %v4066 = vpop.f32.mrb[0].mxu0
        %v4067 = vadd.f32 %v3906, %v4066
        %v4068 = vpop.f32.mrb[0].mxu0
        %4069 = vmatprep.mubr.bf16.mxu0 %v3165
        %4070 = vmatmul.mubr.bf16.gmra.mrb[0].mxu0 %v3164
        %v4071 = vpop.f32.mrb[0].mxu0
        %v4072 = vadd.f32 %v3911, %v4071
        %v4073 = vpop.f32.mrb[0].mxu0
        %v4074 = vpop.f32.mrb[0].mxu0
        %v4075 = vadd.f32 %v3914, %v4074
        %v4076 = vpop.f32.mrb[0].mxu0
        %4077 = vmatprep.mubr.bf16.mxu0 %v3174
        %4078 = vmatmul.mubr.bf16.gmra.mrb[0].mxu0 %v3173
        %v4079 = vpop.f32.mrb[0].mxu0
        %v4080 = vadd.f32 %v3919, %v4079
        %v4081 = vpop.f32.mrb[0].mxu0
        %v4082 = vpop.f32.mrb[0].mxu0
        %v4083 = vadd.f32 %v3922, %v4082
        %v4084 = vpop.f32.mrb[0].mxu0
        %4085 = vmatprep.mubr.bf16.mxu0 %v3183
        %4086 = vmatmul.mubr.bf16.gmra.mrb[0].mxu0 %v3182
        %v4087 = vpop.f32.mrb[0].mxu0
        %v4088 = vadd.f32 %v3927, %v4087
        %v4089 = vpop.f32.mrb[0].mxu0
        %v4090 = vpop.f32.mrb[0].mxu0
        %v4091 = vadd.f32 %v3930, %v4090
        %v4092 = vpop.f32.mrb[0].mxu0
        %4093 = vmatprep.mubr.bf16.mxu0 %v3192
        %4094 = vmatmul.mubr.bf16.gmra.mrb[0].mxu0 %v3191
        %v4095 = vpop.f32.mrb[0].mxu0
        %v4096 = vadd.f32 %v3935, %v4095
        %v4097 = vpop.f32.mrb[0].mxu0
        %v4098 = vpop.f32.mrb[0].mxu0
        %v4099 = vadd.f32 %v3938, %v4098
        %v4100 = vpop.f32.mrb[0].mxu0
        %4101 = vmatprep.mubr.bf16.mxu0 %v3201
        %4102 = vmatmul.mubr.bf16.gmra.mrb[0].mxu0 %v3200
        %v4103 = vpop.f32.mrb[0].mxu0
        %v4104 = vadd.f32 %v3943, %v4103
        %v4105 = vpop.f32.mrb[0].mxu0
        %v4106 = vpop.f32.mrb[0].mxu0
        %v4107 = vadd.f32 %v3946, %v4106
        %v4108 = vpop.f32.mrb[0].mxu0
        %4109 = vmatprep.mubr.bf16.mxu0 %v3210
        %4110 = vmatmul.mubr.bf16.gmra.mrb[0].mxu0 %v3209
        %v4111 = vpop.f32.mrb[0].mxu0
        %v4112 = vadd.f32 %v3951, %v4111
        %v4113 = vpop.f32.mrb[0].mxu0
        %v4114 = vpop.f32.mrb[0].mxu0
        %v4115 = vadd.f32 %v3954, %v4114
        %v4116 = vpop.f32.mrb[0].mxu0
        %4117 = vmatprep.mubr.bf16.mxu0 %v3219
        %4118 = vmatmul.mubr.bf16.gmra.mrb[0].mxu0 %v3218
        %v4119 = vpop.f32.mrb[0].mxu0
        %v4120 = vadd.f32 %v3959, %v4119
        %v4121 = vpop.f32.mrb[0].mxu0
        %v4122 = vpop.f32.mrb[0].mxu0
        %v4123 = vadd.f32 %v3962, %v4122
        %v4124 = vpop.f32.mrb[0].mxu0
        %4125 = vmatprep.mubr.bf16.mxu0 %v3228
        %4126 = vmatmul.mubr.bf16.gmra.mrb[0].mxu0 %v3227
        %v4127 = vpop.f32.mrb[0].mxu0
        %v4128 = vadd.f32 %v3967, %v4127
        %v4129 = vpop.f32.mrb[0].mxu0
        %v4130 = vpop.f32.mrb[0].mxu0
        %v4131 = vadd.f32 %v3970, %v4130
        %v4132 = vpop.f32.mrb[0].mxu0
        %4133 = vmatprep.mubr.bf16.mxu0 %v3237
        %4134 = vmatmul.mubr.bf16.gmra.mrb[0].mxu0 %v3236
        %v4135 = vpop.f32.mrb[0].mxu0
        %v4136 = vadd.f32 %v3975, %v4135
        %v4137 = vpop.f32.mrb[0].mxu0
        %v4138 = vpop.f32.mrb[0].mxu0
        %v4139 = vadd.f32 %v3978, %v4138
        %v4140 = vpop.f32.mrb[0].mxu0
        %4141 = vmatprep.mubr.bf16.mxu0 %v3246
        %4142 = vmatmul.mubr.bf16.gmra.mrb[0].mxu0 %v3245
        %v4143 = vpop.f32.mrb[0].mxu0
        %v4144 = vadd.f32 %v3983, %v4143
        %v4145 = vpop.f32.mrb[0].mxu0
        %v4146 = vpop.f32.mrb[0].mxu0
        %v4147 = vadd.f32 %v3986, %v4146
        %v4148 = vpop.f32.mrb[0].mxu0
        %4149 = vdwg.mxu0
        %4150 = vmatprep.subr.bf16.mxu0 0
        %4151 = vmatpush1.bf16.msra.mxu0 %v3716
        %4152 = vmatprep.subr.bf16.mxu0 0
        %4153 = vmatpush1.bf16.msra.mxu0 %v3717
        %4154 = vmatprep.subr.bf16.mxu0 0
        %4155 = vmatpush1.bf16.msra.mxu0 %v3718
        %4156 = vmatprep.subr.bf16.mxu0 0
        %4157 = vmatpush1.bf16.msra.mxu0 %v3719
        %4158 = vmatprep.subr.bf16.mxu0 0
        %4159 = vmatpush1.bf16.msra.mxu0 %v3720
        %4160 = vmatprep.subr.bf16.mxu0 0
        %4161 = vmatpush1.bf16.msra.mxu0 %v3721
        %4162 = vmatprep.subr.bf16.mxu0 0
        %4163 = vmatpush1.bf16.msra.mxu0 %v3722
        %4164 = vmatprep.subr.bf16.mxu0 0
        %4165 = vmatpush1.bf16.msra.mxu0 %v3723
        %4166 = vmatprep.subr.bf16.mxu0 0
        %4167 = vmatpush1.bf16.msra.mxu0 %v3724
        %4168 = vmatprep.subr.bf16.mxu0 0
        %4169 = vmatpush1.bf16.msra.mxu0 %v3725
        %4170 = vmatprep.subr.bf16.mxu0 0
        %4171 = vmatpush1.bf16.msra.mxu0 %v3726
        %4172 = vmatprep.subr.bf16.mxu0 0
        %4173 = vmatpush1.bf16.msra.mxu0 %v3727
        %4174 = vmatprep.subr.bf16.mxu0 0
        %4175 = vmatpush1.bf16.msra.mxu0 %v3728
        %4176 = vmatprep.subr.bf16.mxu0 0
        %4177 = vmatpush1.bf16.msra.mxu0 %v3729
        %4178 = vmatprep.subr.bf16.mxu0 0
        %4179 = vmatpush1.bf16.msra.mxu0 %v3730
        %4180 = vmatprep.subr.bf16.mxu0 0
        %4181 = vmatpush1.bf16.msra.mxu0 %v3731
        %4182 = vmatprep.mubr.bf16.mxu0 %v3113
        %4183 = vmatmul.mubr.bf16.gmra.mrb[0].mxu0 %v3112
        %v4184 = vpop.f32.mrb[0].mxu0
        %v4185 = vadd.f32 %v4024, %v4184
        %v4186 = vpop.f32.mrb[0].mxu0
        %v4187 = vpop.f32.mrb[0].mxu0
        %v4188 = vadd.f32 %v4027, %v4187
        %v4189 = vpop.f32.mrb[0].mxu0
        %4190 = vmatprep.mubr.bf16.mxu0 %v3122
        %4191 = vmatmul.mubr.bf16.gmra.mrb[0].mxu0 %v3121
        %v4192 = vpop.f32.mrb[0].mxu0
        %v4193 = vadd.f32 %v4032, %v4192
        %v4194 = vpop.f32.mrb[0].mxu0
        %v4195 = vpop.f32.mrb[0].mxu0
        %v4196 = vadd.f32 %v4035, %v4195
        %v4197 = vpop.f32.mrb[0].mxu0
        %4198 = vmatprep.mubr.bf16.mxu0 %v3131
        %4199 = vmatmul.mubr.bf16.gmra.mrb[0].mxu0 %v3130
        %v4200 = vpop.f32.mrb[0].mxu0
        %v4201 = vadd.f32 %v4040, %v4200
        %v4202 = vpop.f32.mrb[0].mxu0
        %v4203 = vpop.f32.mrb[0].mxu0
        %v4204 = vadd.f32 %v4043, %v4203
        %v4205 = vpop.f32.mrb[0].mxu0
        %4206 = vmatprep.mubr.bf16.mxu0 %v3140
        %4207 = vmatmul.mubr.bf16.gmra.mrb[0].mxu0 %v3139
        %v4208 = vpop.f32.mrb[0].mxu0
        %v4209 = vadd.f32 %v4048, %v4208
        %v4210 = vpop.f32.mrb[0].mxu0
        %v4211 = vpop.f32.mrb[0].mxu0
        %v4212 = vadd.f32 %v4051, %v4211
        %v4213 = vpop.f32.mrb[0].mxu0
        %4214 = vmatprep.mubr.bf16.mxu0 %v3149
        %4215 = vmatmul.mubr.bf16.gmra.mrb[0].mxu0 %v3148
        %v4216 = vpop.f32.mrb[0].mxu0
        %v4217 = vadd.f32 %v4056, %v4216
        %v4218 = vpop.f32.mrb[0].mxu0
        %v4219 = vpop.f32.mrb[0].mxu0
        %v4220 = vadd.f32 %v4059, %v4219
        %v4221 = vpop.f32.mrb[0].mxu0
        %4222 = vmatprep.mubr.bf16.mxu0 %v3158
        %4223 = vmatmul.mubr.bf16.gmra.mrb[0].mxu0 %v3157
        %v4224 = vpop.f32.mrb[0].mxu0
        %v4225 = vadd.f32 %v4064, %v4224
        %v4226 = vpop.f32.mrb[0].mxu0
        %v4227 = vpop.f32.mrb[0].mxu0
        %v4228 = vadd.f32 %v4067, %v4227
        %v4229 = vpop.f32.mrb[0].mxu0
        %4230 = vmatprep.mubr.bf16.mxu0 %v3167
        %4231 = vmatmul.mubr.bf16.gmra.mrb[0].mxu0 %v3166
        %v4232 = vpop.f32.mrb[0].mxu0
        %v4233 = vadd.f32 %v4072, %v4232
        %v4234 = vpop.f32.mrb[0].mxu0
        %v4235 = vpop.f32.mrb[0].mxu0
        %v4236 = vadd.f32 %v4075, %v4235
        %v4237 = vpop.f32.mrb[0].mxu0
        %4238 = vmatprep.mubr.bf16.mxu0 %v3176
        %4239 = vmatmul.mubr.bf16.gmra.mrb[0].mxu0 %v3175
        %v4240 = vpop.f32.mrb[0].mxu0
        %v4241 = vadd.f32 %v4080, %v4240
        %v4242 = vpop.f32.mrb[0].mxu0
        %v4243 = vpop.f32.mrb[0].mxu0
        %v4244 = vadd.f32 %v4083, %v4243
        %v4245 = vpop.f32.mrb[0].mxu0
        %4246 = vmatprep.mubr.bf16.mxu0 %v3185
        %4247 = vmatmul.mubr.bf16.gmra.mrb[0].mxu0 %v3184
        %v4248 = vpop.f32.mrb[0].mxu0
        %v4249 = vadd.f32 %v4088, %v4248
        %v4250 = vpop.f32.mrb[0].mxu0
        %v4251 = vpop.f32.mrb[0].mxu0
        %v4252 = vadd.f32 %v4091, %v4251
        %v4253 = vpop.f32.mrb[0].mxu0
        %4254 = vmatprep.mubr.bf16.mxu0 %v3194
        %4255 = vmatmul.mubr.bf16.gmra.mrb[0].mxu0 %v3193
        %v4256 = vpop.f32.mrb[0].mxu0
        %v4257 = vadd.f32 %v4096, %v4256
        %v4258 = vpop.f32.mrb[0].mxu0
        %v4259 = vpop.f32.mrb[0].mxu0
        %v4260 = vadd.f32 %v4099, %v4259
        %v4261 = vpop.f32.mrb[0].mxu0
        %4262 = vmatprep.mubr.bf16.mxu0 %v3203
        %4263 = vmatmul.mubr.bf16.gmra.mrb[0].mxu0 %v3202
        %v4264 = vpop.f32.mrb[0].mxu0
        %v4265 = vadd.f32 %v4104, %v4264
        %v4266 = vpop.f32.mrb[0].mxu0
        %v4267 = vpop.f32.mrb[0].mxu0
        %v4268 = vadd.f32 %v4107, %v4267
        %v4269 = vpop.f32.mrb[0].mxu0
        %4270 = vmatprep.mubr.bf16.mxu0 %v3212
        %4271 = vmatmul.mubr.bf16.gmra.mrb[0].mxu0 %v3211
        %v4272 = vpop.f32.mrb[0].mxu0
        %v4273 = vadd.f32 %v4112, %v4272
        %v4274 = vpop.f32.mrb[0].mxu0
        %v4275 = vpop.f32.mrb[0].mxu0
        %v4276 = vadd.f32 %v4115, %v4275
        %v4277 = vpop.f32.mrb[0].mxu0
        %4278 = vmatprep.mubr.bf16.mxu0 %v3221
        %4279 = vmatmul.mubr.bf16.gmra.mrb[0].mxu0 %v3220
        %v4280 = vpop.f32.mrb[0].mxu0
        %v4281 = vadd.f32 %v4120, %v4280
        %v4282 = vpop.f32.mrb[0].mxu0
        %v4283 = vpop.f32.mrb[0].mxu0
        %v4284 = vadd.f32 %v4123, %v4283
        %v4285 = vpop.f32.mrb[0].mxu0
        %4286 = vmatprep.mubr.bf16.mxu0 %v3230
        %4287 = vmatmul.mubr.bf16.gmra.mrb[0].mxu0 %v3229
        %v4288 = vpop.f32.mrb[0].mxu0
        %v4289 = vadd.f32 %v4128, %v4288
        %v4290 = vpop.f32.mrb[0].mxu0
        %v4291 = vpop.f32.mrb[0].mxu0
        %v4292 = vadd.f32 %v4131, %v4291
        %v4293 = vpop.f32.mrb[0].mxu0
        %4294 = vmatprep.mubr.bf16.mxu0 %v3239
        %4295 = vmatmul.mubr.bf16.gmra.mrb[0].mxu0 %v3238
        %v4296 = vpop.f32.mrb[0].mxu0
        %v4297 = vadd.f32 %v4136, %v4296
        %v4298 = vpop.f32.mrb[0].mxu0
        %v4299 = vpop.f32.mrb[0].mxu0
        %v4300 = vadd.f32 %v4139, %v4299
        %v4301 = vpop.f32.mrb[0].mxu0
        %4302 = vmatprep.mubr.bf16.mxu0 %v3248
        %4303 = vmatmul.mubr.bf16.gmra.mrb[0].mxu0 %v3247
        %v4304 = vpop.f32.mrb[0].mxu0
        %v4305 = vadd.f32 %v4144, %v4304
        %v4306 = vpop.f32.mrb[0].mxu0
        %v4307 = vpop.f32.mrb[0].mxu0
        %v4308 = vadd.f32 %v4147, %v4307
        %v4309 = vpop.f32.mrb[0].mxu0
        %4310 = vdwg.mxu0
        %4311 = vmatprep.subr.bf16.mxu0 0
        %4312 = vmatpush1.bf16.msra.mxu0 %v3732
        %4313 = vmatprep.subr.bf16.mxu0 0
        %4314 = vmatpush1.bf16.msra.mxu0 %v3733
        %4315 = vmatprep.subr.bf16.mxu0 0
        %4316 = vmatpush1.bf16.msra.mxu0 %v3734
        %4317 = vmatprep.subr.bf16.mxu0 0
        %4318 = vmatpush1.bf16.msra.mxu0 %v3735
        %4319 = vmatprep.subr.bf16.mxu0 0
        %4320 = vmatpush1.bf16.msra.mxu0 %v3736
        %4321 = vmatprep.subr.bf16.mxu0 0
        %4322 = vmatpush1.bf16.msra.mxu0 %v3737
        %4323 = vmatprep.subr.bf16.mxu0 0
        %4324 = vmatpush1.bf16.msra.mxu0 %v3738
        %4325 = vmatprep.subr.bf16.mxu0 0
        %4326 = vmatpush1.bf16.msra.mxu0 %v3739
        %4327 = vmatprep.subr.bf16.mxu0 0
        %4328 = vmatpush1.bf16.msra.mxu0 %v3740
        %4329 = vmatprep.subr.bf16.mxu0 0
        %4330 = vmatpush1.bf16.msra.mxu0 %v3741
        %4331 = vmatprep.subr.bf16.mxu0 0
        %4332 = vmatpush1.bf16.msra.mxu0 %v3742
        %4333 = vmatprep.subr.bf16.mxu0 0
        %4334 = vmatpush1.bf16.msra.mxu0 %v3743
        %4335 = vmatprep.subr.bf16.mxu0 0
        %4336 = vmatpush1.bf16.msra.mxu0 %v3744
        %4337 = vmatprep.subr.bf16.mxu0 0
        %4338 = vmatpush1.bf16.msra.mxu0 %v3745
        %4339 = vmatprep.subr.bf16.mxu0 0
        %4340 = vmatpush1.bf16.msra.mxu0 %v3746
        %4341 = vmatprep.subr.bf16.mxu0 0
        %4342 = vmatpush1.bf16.msra.mxu0 %v3747
        %4343 = vmatprep.mubr.bf16.mxu0 %v3115
        %4344 = vmatmul.mubr.bf16.gmra.mrb[0].mxu0 %v3114
        %v4345 = vpop.f32.mrb[0].mxu0
        %v4346 = vadd.f32 %v4185, %v4345
        %v4347 = vpop.f32.mrb[0].mxu0
        %v4348 = vpop.f32.mrb[0].mxu0
        %v4349 = vadd.f32 %v4188, %v4348
        %v4350 = vpop.f32.mrb[0].mxu0
        %4351 = vmatprep.mubr.bf16.mxu0 %v3124
        %4352 = vmatmul.mubr.bf16.gmra.mrb[0].mxu0 %v3123
        %v4353 = vpop.f32.mrb[0].mxu0
        %v4354 = vadd.f32 %v4193, %v4353
        %v4355 = vpop.f32.mrb[0].mxu0
        %v4356 = vpop.f32.mrb[0].mxu0
        %v4357 = vadd.f32 %v4196, %v4356
        %v4358 = vpop.f32.mrb[0].mxu0
        %4359 = vmatprep.mubr.bf16.mxu0 %v3133
        %4360 = vmatmul.mubr.bf16.gmra.mrb[0].mxu0 %v3132
        %v4361 = vpop.f32.mrb[0].mxu0
        %v4362 = vadd.f32 %v4201, %v4361
        %v4363 = vpop.f32.mrb[0].mxu0
        %v4364 = vpop.f32.mrb[0].mxu0
        %v4365 = vadd.f32 %v4204, %v4364
        %v4366 = vpop.f32.mrb[0].mxu0
        %4367 = vmatprep.mubr.bf16.mxu0 %v3142
        %4368 = vmatmul.mubr.bf16.gmra.mrb[0].mxu0 %v3141
        %v4369 = vpop.f32.mrb[0].mxu0
        %v4370 = vadd.f32 %v4209, %v4369
        %v4371 = vpop.f32.mrb[0].mxu0
        %v4372 = vpop.f32.mrb[0].mxu0
        %v4373 = vadd.f32 %v4212, %v4372
        %v4374 = vpop.f32.mrb[0].mxu0
        %4375 = vmatprep.mubr.bf16.mxu0 %v3151
        %4376 = vmatmul.mubr.bf16.gmra.mrb[0].mxu0 %v3150
        %v4377 = vpop.f32.mrb[0].mxu0
        %v4378 = vadd.f32 %v4217, %v4377
        %v4379 = vpop.f32.mrb[0].mxu0
        %v4380 = vpop.f32.mrb[0].mxu0
        %v4381 = vadd.f32 %v4220, %v4380
        %v4382 = vpop.f32.mrb[0].mxu0
        %4383 = vmatprep.mubr.bf16.mxu0 %v3160
        %4384 = vmatmul.mubr.bf16.gmra.mrb[0].mxu0 %v3159
        %v4385 = vpop.f32.mrb[0].mxu0
        %v4386 = vadd.f32 %v4225, %v4385
        %v4387 = vpop.f32.mrb[0].mxu0
        %v4388 = vpop.f32.mrb[0].mxu0
        %v4389 = vadd.f32 %v4228, %v4388
        %v4390 = vpop.f32.mrb[0].mxu0
        %4391 = vmatprep.mubr.bf16.mxu0 %v3169
        %4392 = vmatmul.mubr.bf16.gmra.mrb[0].mxu0 %v3168
        %v4393 = vpop.f32.mrb[0].mxu0
        %v4394 = vadd.f32 %v4233, %v4393
        %v4395 = vpop.f32.mrb[0].mxu0
        %v4396 = vpop.f32.mrb[0].mxu0
        %v4397 = vadd.f32 %v4236, %v4396
        %v4398 = vpop.f32.mrb[0].mxu0
        %4399 = vmatprep.mubr.bf16.mxu0 %v3178
        %4400 = vmatmul.mubr.bf16.gmra.mrb[0].mxu0 %v3177
        %v4401 = vpop.f32.mrb[0].mxu0
        %v4402 = vadd.f32 %v4241, %v4401
        %v4403 = vpop.f32.mrb[0].mxu0
        %v4404 = vpop.f32.mrb[0].mxu0
        %v4405 = vadd.f32 %v4244, %v4404
        %v4406 = vpop.f32.mrb[0].mxu0
        %4407 = vmatprep.mubr.bf16.mxu0 %v3187
        %4408 = vmatmul.mubr.bf16.gmra.mrb[0].mxu0 %v3186
        %v4409 = vpop.f32.mrb[0].mxu0
        %v4410 = vadd.f32 %v4249, %v4409
        %v4411 = vpop.f32.mrb[0].mxu0
        %v4412 = vpop.f32.mrb[0].mxu0
        %v4413 = vadd.f32 %v4252, %v4412
        %v4414 = vpop.f32.mrb[0].mxu0
        %4415 = vmatprep.mubr.bf16.mxu0 %v3196
        %4416 = vmatmul.mubr.bf16.gmra.mrb[0].mxu0 %v3195
        %v4417 = vpop.f32.mrb[0].mxu0
        %v4418 = vadd.f32 %v4257, %v4417
        %v4419 = vpop.f32.mrb[0].mxu0
        %v4420 = vpop.f32.mrb[0].mxu0
        %v4421 = vadd.f32 %v4260, %v4420
        %v4422 = vpop.f32.mrb[0].mxu0
        %4423 = vmatprep.mubr.bf16.mxu0 %v3205
        %4424 = vmatmul.mubr.bf16.gmra.mrb[0].mxu0 %v3204
        %v4425 = vpop.f32.mrb[0].mxu0
        %v4426 = vadd.f32 %v4265, %v4425
        %v4427 = vpop.f32.mrb[0].mxu0
        %v4428 = vpop.f32.mrb[0].mxu0
        %v4429 = vadd.f32 %v4268, %v4428
        %v4430 = vpop.f32.mrb[0].mxu0
        %4431 = vmatprep.mubr.bf16.mxu0 %v3214
        %4432 = vmatmul.mubr.bf16.gmra.mrb[0].mxu0 %v3213
        %v4433 = vpop.f32.mrb[0].mxu0
        %v4434 = vadd.f32 %v4273, %v4433
        %v4435 = vpop.f32.mrb[0].mxu0
        %v4436 = vpop.f32.mrb[0].mxu0
        %v4437 = vadd.f32 %v4276, %v4436
        %v4438 = vpop.f32.mrb[0].mxu0
        %4439 = vmatprep.mubr.bf16.mxu0 %v3223
        %4440 = vmatmul.mubr.bf16.gmra.mrb[0].mxu0 %v3222
        %v4441 = vpop.f32.mrb[0].mxu0
        %v4442 = vadd.f32 %v4281, %v4441
        %v4443 = vpop.f32.mrb[0].mxu0
        %v4444 = vpop.f32.mrb[0].mxu0
        %v4445 = vadd.f32 %v4284, %v4444
        %v4446 = vpop.f32.mrb[0].mxu0
        %4447 = vmatprep.mubr.bf16.mxu0 %v3232
        %4448 = vmatmul.mubr.bf16.gmra.mrb[0].mxu0 %v3231
        %v4449 = vpop.f32.mrb[0].mxu0
        %v4450 = vadd.f32 %v4289, %v4449
        %v4451 = vpop.f32.mrb[0].mxu0
        %v4452 = vpop.f32.mrb[0].mxu0
        %v4453 = vadd.f32 %v4292, %v4452
        %v4454 = vpop.f32.mrb[0].mxu0
        %4455 = vmatprep.mubr.bf16.mxu0 %v3241
        %4456 = vmatmul.mubr.bf16.gmra.mrb[0].mxu0 %v3240
        %v4457 = vpop.f32.mrb[0].mxu0
        %v4458 = vadd.f32 %v4297, %v4457
        %v4459 = vpop.f32.mrb[0].mxu0
        %v4460 = vpop.f32.mrb[0].mxu0
        %v4461 = vadd.f32 %v4300, %v4460
        %v4462 = vpop.f32.mrb[0].mxu0
        %4463 = vmatprep.mubr.bf16.mxu0 %v3250
        %4464 = vmatmul.mubr.bf16.gmra.mrb[0].mxu0 %v3249
        %v4465 = vpop.f32.mrb[0].mxu0
        %v4466 = vadd.f32 %v4305, %v4465
        %v4467 = vpop.f32.mrb[0].mxu0
        %v4468 = vpop.f32.mrb[0].mxu0
        %v4469 = vadd.f32 %v4308, %v4468
        %v4470 = vpop.f32.mrb[0].mxu0
        %4471 = vdwg.mxu0
        %4472 = vmatprep.subr.bf16.mxu0 0
        %4473 = vmatpush1.bf16.msra.mxu0 %v3748
        %4474 = vmatprep.subr.bf16.mxu0 0
        %4475 = vmatpush1.bf16.msra.mxu0 %v3749
        %4476 = vmatprep.subr.bf16.mxu0 0
        %4477 = vmatpush1.bf16.msra.mxu0 %v3750
        %4478 = vmatprep.subr.bf16.mxu0 0
        %4479 = vmatpush1.bf16.msra.mxu0 %v3751
        %4480 = vmatprep.subr.bf16.mxu0 0
        %4481 = vmatpush1.bf16.msra.mxu0 %v3752
        %4482 = vmatprep.subr.bf16.mxu0 0
        %4483 = vmatpush1.bf16.msra.mxu0 %v3753
        %4484 = vmatprep.subr.bf16.mxu0 0
        %4485 = vmatpush1.bf16.msra.mxu0 %v3754
        %4486 = vmatprep.subr.bf16.mxu0 0
        %4487 = vmatpush1.bf16.msra.mxu0 %v3755
        %4488 = vmatprep.subr.bf16.mxu0 0
        %4489 = vmatpush1.bf16.msra.mxu0 0
        %4490 = vmatprep.subr.bf16.mxu0 0
        %4491 = vmatpush1.bf16.msra.mxu0 0
        %4492 = vmatprep.subr.bf16.mxu0 0
        %4493 = vmatpush1.bf16.msra.mxu0 0
        %4494 = vmatprep.subr.bf16.mxu0 0
        %4495 = vmatpush1.bf16.msra.mxu0 0
        %4496 = vmatprep.subr.bf16.mxu0 0
        %4497 = vmatpush1.bf16.msra.mxu0 0
        %4498 = vmatprep.subr.bf16.mxu0 0
        %4499 = vmatpush1.bf16.msra.mxu0 0
        %4500 = vmatprep.subr.bf16.mxu0 0
        %4501 = vmatpush1.bf16.msra.mxu0 0
        %4502 = vmatprep.subr.bf16.mxu0 0
        %4503 = vmatpush1.bf16.msra.mxu0 0
        %4504 = vmatprep.mubr.bf16.mxu0 0
        %4505 = vmatmul.mubr.bf16.gmra.mrb[0].mxu0 %v3116
        %v4506 = vpop.f32.mrb[0].mxu0
        %v4507 = vadd.f32 %v4346, %v4506
        %v4508 = vpop.f32.mrb[0].mxu0
        %v4509 = vpop.f32.mrb[0].mxu0
        %v4510 = vadd.f32 %v4349, %v4509
        %v4511 = vpop.f32.mrb[0].mxu0
        %4512 = vmatprep.mubr.bf16.mxu0 0
        %4513 = vmatmul.mubr.bf16.gmra.mrb[0].mxu0 %v3125
        %v4514 = vpop.f32.mrb[0].mxu0
        %v4515 = vadd.f32 %v4354, %v4514
        %v4516 = vpop.f32.mrb[0].mxu0
        %v4517 = vpop.f32.mrb[0].mxu0
        %v4518 = vadd.f32 %v4357, %v4517
        %v4519 = vpop.f32.mrb[0].mxu0
        %4520 = vmatprep.mubr.bf16.mxu0 0
        %4521 = vmatmul.mubr.bf16.gmra.mrb[0].mxu0 %v3134
        %v4522 = vpop.f32.mrb[0].mxu0
        %v4523 = vadd.f32 %v4362, %v4522
        %v4524 = vpop.f32.mrb[0].mxu0
        %v4525 = vpop.f32.mrb[0].mxu0
        %v4526 = vadd.f32 %v4365, %v4525
        %v4527 = vpop.f32.mrb[0].mxu0
        %4528 = vmatprep.mubr.bf16.mxu0 0
        %4529 = vmatmul.mubr.bf16.gmra.mrb[0].mxu0 %v3143
        %v4530 = vpop.f32.mrb[0].mxu0
        %v4531 = vadd.f32 %v4370, %v4530
        %v4532 = vpop.f32.mrb[0].mxu0
        %v4533 = vpop.f32.mrb[0].mxu0
        %v4534 = vadd.f32 %v4373, %v4533
        %v4535 = vpop.f32.mrb[0].mxu0
        %4536 = vmatprep.mubr.bf16.mxu0 0
        %4537 = vmatmul.mubr.bf16.gmra.mrb[0].mxu0 %v3152
        %v4538 = vpop.f32.mrb[0].mxu0
        %v4539 = vadd.f32 %v4378, %v4538
        %v4540 = vpop.f32.mrb[0].mxu0
        %v4541 = vpop.f32.mrb[0].mxu0
        %v4542 = vadd.f32 %v4381, %v4541
        %v4543 = vpop.f32.mrb[0].mxu0
        %4544 = vmatprep.mubr.bf16.mxu0 0
        %4545 = vmatmul.mubr.bf16.gmra.mrb[0].mxu0 %v3161
        %v4546 = vpop.f32.mrb[0].mxu0
        %v4547 = vadd.f32 %v4386, %v4546
        %v4548 = vpop.f32.mrb[0].mxu0
        %v4549 = vpop.f32.mrb[0].mxu0
        %v4550 = vadd.f32 %v4389, %v4549
        %v4551 = vpop.f32.mrb[0].mxu0
        %4552 = vmatprep.mubr.bf16.mxu0 0
        %4553 = vmatmul.mubr.bf16.gmra.mrb[0].mxu0 %v3170
        %v4554 = vpop.f32.mrb[0].mxu0
        %v4555 = vadd.f32 %v4394, %v4554
        %v4556 = vpop.f32.mrb[0].mxu0
        %v4557 = vpop.f32.mrb[0].mxu0
        %v4558 = vadd.f32 %v4397, %v4557
        %v4559 = vpop.f32.mrb[0].mxu0
        %4560 = vmatprep.mubr.bf16.mxu0 0
        %4561 = vmatmul.mubr.bf16.gmra.mrb[0].mxu0 %v3179
        %v4562 = vpop.f32.mrb[0].mxu0
        %v4563 = vadd.f32 %v4402, %v4562
        %v4564 = vpop.f32.mrb[0].mxu0
        %v4565 = vpop.f32.mrb[0].mxu0
        %v4566 = vadd.f32 %v4405, %v4565
        %v4567 = vpop.f32.mrb[0].mxu0
        %4568 = vmatprep.mubr.bf16.mxu0 0
        %4569 = vmatmul.mubr.bf16.gmra.mrb[0].mxu0 %v3188
        %v4570 = vpop.f32.mrb[0].mxu0
        %v4571 = vadd.f32 %v4410, %v4570
        %v4572 = vpop.f32.mrb[0].mxu0
        %v4573 = vpop.f32.mrb[0].mxu0
        %v4574 = vadd.f32 %v4413, %v4573
        %v4575 = vpop.f32.mrb[0].mxu0
        %4576 = vmatprep.mubr.bf16.mxu0 0
        %4577 = vmatmul.mubr.bf16.gmra.mrb[0].mxu0 %v3197
        %v4578 = vpop.f32.mrb[0].mxu0
        %v4579 = vadd.f32 %v4418, %v4578
        %v4580 = vpop.f32.mrb[0].mxu0
        %v4581 = vpop.f32.mrb[0].mxu0
        %v4582 = vadd.f32 %v4421, %v4581
        %v4583 = vpop.f32.mrb[0].mxu0
        %4584 = vmatprep.mubr.bf16.mxu0 0
        %4585 = vmatmul.mubr.bf16.gmra.mrb[0].mxu0 %v3206
        %v4586 = vpop.f32.mrb[0].mxu0
        %v4587 = vadd.f32 %v4426, %v4586
        %v4588 = vpop.f32.mrb[0].mxu0
        %v4589 = vpop.f32.mrb[0].mxu0
        %v4590 = vadd.f32 %v4429, %v4589
        %v4591 = vpop.f32.mrb[0].mxu0
        %4592 = vmatprep.mubr.bf16.mxu0 0
        %4593 = vmatmul.mubr.bf16.gmra.mrb[0].mxu0 %v3215
        %v4594 = vpop.f32.mrb[0].mxu0
        %v4595 = vadd.f32 %v4434, %v4594
        %v4596 = vpop.f32.mrb[0].mxu0
        %v4597 = vpop.f32.mrb[0].mxu0
        %v4598 = vadd.f32 %v4437, %v4597
        %v4599 = vpop.f32.mrb[0].mxu0
        %4600 = vmatprep.mubr.bf16.mxu0 0
        %4601 = vmatmul.mubr.bf16.gmra.mrb[0].mxu0 %v3224
        %v4602 = vpop.f32.mrb[0].mxu0
        %v4603 = vadd.f32 %v4442, %v4602
        %v4604 = vpop.f32.mrb[0].mxu0
        %v4605 = vpop.f32.mrb[0].mxu0
        %v4606 = vadd.f32 %v4445, %v4605
        %v4607 = vpop.f32.mrb[0].mxu0
        %4608 = vmatprep.mubr.bf16.mxu0 0
        %4609 = vmatmul.mubr.bf16.gmra.mrb[0].mxu0 %v3233
        %v4610 = vpop.f32.mrb[0].mxu0
        %v4611 = vadd.f32 %v4450, %v4610
        %v4612 = vpop.f32.mrb[0].mxu0
        %v4613 = vpop.f32.mrb[0].mxu0
        %v4614 = vadd.f32 %v4453, %v4613
        %v4615 = vpop.f32.mrb[0].mxu0
        %4616 = vmatprep.mubr.bf16.mxu0 0
        %4617 = vmatmul.mubr.bf16.gmra.mrb[0].mxu0 %v3242
        %v4618 = vpop.f32.mrb[0].mxu0
        %v4619 = vadd.f32 %v4458, %v4618
        %v4620 = vpop.f32.mrb[0].mxu0
        %v4621 = vpop.f32.mrb[0].mxu0
        %v4622 = vadd.f32 %v4461, %v4621
        %v4623 = vpop.f32.mrb[0].mxu0
        %4624 = vmatprep.mubr.bf16.mxu0 0
        %4625 = vmatmul.mubr.bf16.gmra.mrb[0].mxu0 %v3251
        %v4626 = vpop.f32.mrb[0].mxu0
        %v4627 = vadd.f32 %v4466, %v4626
        %v4628 = vpop.f32.mrb[0].mxu0
        %v4629 = vpop.f32.mrb[0].mxu0
        %v4630 = vadd.f32 %v4469, %v4629
        %v4631 = vpop.f32.mrb[0].mxu0
        %4632 = vdwg.mxu0
        %v4633 = vld [vmem:[%s6] sm:$0x1]
        %v4635 = vlaneseq
        %v4636 = vshrl.u32 %v4635, 7
        %v4637 = vsub.s32 0, %v4636
        %v4638 = vrot.slane %v4633, %v4637
        %v4640 = vmul.f32 %v4507, %v4638
        %v4641 = vmul.f32 %v4510, %v4638
        %v4642 = vmul.f32 %v4515, %v4638
        %v4643 = vmul.f32 %v4518, %v4638
        %v4644 = vmul.f32 %v4523, %v4638
        %v4645 = vmul.f32 %v4526, %v4638
        %v4646 = vmul.f32 %v4531, %v4638
        %v4647 = vmul.f32 %v4534, %v4638
        %v4648 = vmul.f32 %v4539, %v4638
        %v4649 = vmul.f32 %v4542, %v4638
        %v4650 = vmul.f32 %v4547, %v4638
        %v4651 = vmul.f32 %v4550, %v4638
        %v4652 = vmul.f32 %v4555, %v4638
        %v4653 = vmul.f32 %v4558, %v4638
        %v4654 = vmul.f32 %v4563, %v4638
        %v4655 = vmul.f32 %v4566, %v4638
        %v4656 = vmul.f32 %v4571, %v4638
        %v4657 = vmul.f32 %v4574, %v4638
        %v4658 = vmul.f32 %v4579, %v4638
        %v4659 = vmul.f32 %v4582, %v4638
        %v4660 = vmul.f32 %v4587, %v4638
        %v4661 = vmul.f32 %v4590, %v4638
        %v4662 = vmul.f32 %v4595, %v4638
        %v4663 = vmul.f32 %v4598, %v4638
        %v4664 = vmul.f32 %v4603, %v4638
        %v4665 = vmul.f32 %v4606, %v4638
        %v4666 = vmul.f32 %v4611, %v4638
        %v4667 = vmul.f32 %v4614, %v4638
        %v4668 = vmul.f32 %v4619, %v4638
        %v4669 = vmul.f32 %v4622, %v4638
        %v4670 = vmul.f32 %v4627, %v4638
        %v4671 = vmul.f32 %v4630, %v4638
        %v4672 = vld [vmem:[%s7] sm:$0x1]
        %v4674 = vlaneseq
        %v4675 = vshrl.u32 %v4674, 7
        %v4676 = vsub.s32 0, %v4675
        %v4677 = vrot.slane %v4672, %v4676
        %v4679 = vadd.f32 %v4640, %v4677
        %v4680 = vadd.f32 %v4641, %v4677
        %v4681 = vadd.f32 %v4642, %v4677
        %v4682 = vadd.f32 %v4643, %v4677
        %v4683 = vadd.f32 %v4644, %v4677
        %v4684 = vadd.f32 %v4645, %v4677
        %v4685 = vadd.f32 %v4646, %v4677
        %v4686 = vadd.f32 %v4647, %v4677
        %v4687 = vadd.f32 %v4648, %v4677
        %v4688 = vadd.f32 %v4649, %v4677
        %v4689 = vadd.f32 %v4650, %v4677
        %v4690 = vadd.f32 %v4651, %v4677
        %v4691 = vadd.f32 %v4652, %v4677
        %v4692 = vadd.f32 %v4653, %v4677
        %v4693 = vadd.f32 %v4654, %v4677
        %v4694 = vadd.f32 %v4655, %v4677
        %v4695 = vadd.f32 %v4656, %v4677
        %v4696 = vadd.f32 %v4657, %v4677
        %v4697 = vadd.f32 %v4658, %v4677
        %v4698 = vadd.f32 %v4659, %v4677
        %v4699 = vadd.f32 %v4660, %v4677
        %v4700 = vadd.f32 %v4661, %v4677
        %v4701 = vadd.f32 %v4662, %v4677
        %v4702 = vadd.f32 %v4663, %v4677
        %v4703 = vadd.f32 %v4664, %v4677
        %v4704 = vadd.f32 %v4665, %v4677
        %v4705 = vadd.f32 %v4666, %v4677
        %v4706 = vadd.f32 %v4667, %v4677
        %v4707 = vadd.f32 %v4668, %v4677
        %v4708 = vadd.f32 %v4669, %v4677
        %v4709 = vadd.f32 %v4670, %v4677
        %v4710 = vadd.f32 %v4671, %v4677
        %v4711 = vmax.f32 %v4679, 0.0
        %v4712 = vmax.f32 %v4680, 0.0
        %v4713 = vmax.f32 %v4681, 0.0
        %v4714 = vmax.f32 %v4682, 0.0
        %v4715 = vmax.f32 %v4683, 0.0
        %v4716 = vmax.f32 %v4684, 0.0
        %v4717 = vmax.f32 %v4685, 0.0
        %v4718 = vmax.f32 %v4686, 0.0
        %v4719 = vmax.f32 %v4687, 0.0
        %v4720 = vmax.f32 %v4688, 0.0
        %v4721 = vmax.f32 %v4689, 0.0
        %v4722 = vmax.f32 %v4690, 0.0
        %v4723 = vmax.f32 %v4691, 0.0
        %v4724 = vmax.f32 %v4692, 0.0
        %v4725 = vmax.f32 %v4693, 0.0
        %v4726 = vmax.f32 %v4694, 0.0
        %v4727 = vmax.f32 %v4695, 0.0
        %v4728 = vmax.f32 %v4696, 0.0
        %v4729 = vmax.f32 %v4697, 0.0
        %v4730 = vmax.f32 %v4698, 0.0
        %v4731 = vmax.f32 %v4699, 0.0
        %v4732 = vmax.f32 %v4700, 0.0
        %v4733 = vmax.f32 %v4701, 0.0
        %v4734 = vmax.f32 %v4702, 0.0
        %v4735 = vmax.f32 %v4703, 0.0
        %v4736 = vmax.f32 %v4704, 0.0
        %v4737 = vmax.f32 %v4705, 0.0
        %v4738 = vmax.f32 %v4706, 0.0
        %v4739 = vmax.f32 %v4707, 0.0
        %v4740 = vmax.f32 %v4708, 0.0
        %v4741 = vmax.f32 %v4709, 0.0
        %v4742 = vmax.f32 %v4710, 0.0
        %v4743 = vpack.c.bf16 %v4712, %v4711
        %v4744 = vpack.c.bf16 %v4714, %v4713
        %v4745 = vpack.c.bf16 %v4716, %v4715
        %v4746 = vpack.c.bf16 %v4718, %v4717
        %v4747 = vpack.c.bf16 %v4720, %v4719
        %v4748 = vpack.c.bf16 %v4722, %v4721
        %v4749 = vpack.c.bf16 %v4724, %v4723
        %v4750 = vpack.c.bf16 %v4726, %v4725
        %v4751 = vpack.c.bf16 %v4728, %v4727
        %v4752 = vpack.c.bf16 %v4730, %v4729
        %v4753 = vpack.c.bf16 %v4732, %v4731
        %v4754 = vpack.c.bf16 %v4734, %v4733
        %v4755 = vpack.c.bf16 %v4736, %v4735
        %v4756 = vpack.c.bf16 %v4738, %v4737
        %v4757 = vpack.c.bf16 %v4740, %v4739
        %v4758 = vpack.c.bf16 %v4742, %v4741
        %v4759 = vld [vmem:[#allocation8] sm:$0xf]
        %v4760 = vld [vmem:[#allocation8 + $0x4] sm:$0xf]
        %v4761 = vld [vmem:[#allocation8 + $0x8] sm:$0xf]
        %v4762 = vld [vmem:[#allocation8 + $0xc] sm:$0xf]
        %v4763 = vld [vmem:[#allocation8 + $0x10] sm:$0xf]
        %v4764 = vld [vmem:[#allocation8 + $0x14] sm:$0xf]
        %v4765 = vld [vmem:[#allocation8 + $0x18] sm:$0xf]
        %v4766 = vld [vmem:[#allocation8 + $0x1c] sm:$0xf]
        %v4767 = vld [vmem:[#allocation8 + $0x20] sm:$0xf]
        %v4768 = vld [vmem:[#allocation8 + $0x24] sm:$0xf]
        %v4769 = vld [vmem:[#allocation8 + $0x28] sm:$0xf]
        %v4770 = vld [vmem:[#allocation8 + $0x2c] sm:$0xf]
        %v4771 = vld [vmem:[#allocation8 + $0x30] sm:$0xf]
        %v4772 = vld [vmem:[#allocation8 + $0x34] sm:$0xf]
        %v4773 = vld [vmem:[#allocation8 + $0x38] sm:$0xf]
        %v4774 = vld [vmem:[#allocation8 + $0x3c] sm:$0xf]
        %v4791 = vunpack.c.l.b16 %v4759
        %v4792 = vunpack.c.l.b16 %v4760
        %v4793 = vunpack.c.l.b16 %v4761
        %v4794 = vunpack.c.l.b16 %v4762
        %v4795 = vunpack.c.l.b16 %v4763
        %v4796 = vunpack.c.l.b16 %v4764
        %v4797 = vunpack.c.l.b16 %v4765
        %v4798 = vunpack.c.l.b16 %v4766
        %v4799 = vunpack.c.l.b16 %v4767
        %v4800 = vunpack.c.l.b16 %v4768
        %v4801 = vunpack.c.l.b16 %v4769
        %v4802 = vunpack.c.l.b16 %v4770
        %v4803 = vunpack.c.l.b16 %v4771
        %v4804 = vunpack.c.l.b16 %v4772
        %v4805 = vunpack.c.l.b16 %v4773
        %v4806 = vunpack.c.l.b16 %v4774
        %v4807 = vpack.c.b16 %v4792, %v4791
        %v4808 = vpack.c.b16 %v4794, %v4793
        %v4809 = vpack.c.b16 %v4796, %v4795
        %v4810 = vpack.c.b16 %v4798, %v4797
        %v4811 = vpack.c.b16 %v4800, %v4799
        %v4812 = vpack.c.b16 %v4802, %v4801
        %v4813 = vpack.c.b16 %v4804, %v4803
        %v4814 = vpack.c.b16 %v4806, %v4805
        %4823 = vmatprep.subr.bf16.mxu0 0
        %4824 = vmatpush1.bf16.msra.mxu0 %v4807
        %4825 = vmatprep.subr.bf16.mxu0 0
        %4826 = vmatpush1.bf16.msra.mxu0 %v4808
        %4827 = vmatprep.subr.bf16.mxu0 0
        %4828 = vmatpush1.bf16.msra.mxu0 %v4809
        %4829 = vmatprep.subr.bf16.mxu0 0
        %4830 = vmatpush1.bf16.msra.mxu0 %v4810
        %4831 = vmatprep.subr.bf16.mxu0 0
        %4832 = vmatpush1.bf16.msra.mxu0 %v4811
        %4833 = vmatprep.subr.bf16.mxu0 0
        %4834 = vmatpush1.bf16.msra.mxu0 %v4812
        %4835 = vmatprep.subr.bf16.mxu0 0
        %4836 = vmatpush1.bf16.msra.mxu0 %v4813
        %4837 = vmatprep.subr.bf16.mxu0 0
        %4838 = vmatpush1.bf16.msra.mxu0 %v4814
        %4839 = vmatprep.subr.bf16.mxu0 0
        %4840 = vmatpush1.bf16.msra.mxu0 0
        %4841 = vmatprep.subr.bf16.mxu0 0
        %4842 = vmatpush1.bf16.msra.mxu0 0
        %4843 = vmatprep.subr.bf16.mxu0 0
        %4844 = vmatpush1.bf16.msra.mxu0 0
        %4845 = vmatprep.subr.bf16.mxu0 0
        %4846 = vmatpush1.bf16.msra.mxu0 0
        %4847 = vmatprep.subr.bf16.mxu0 0
        %4848 = vmatpush1.bf16.msra.mxu0 0
        %4849 = vmatprep.subr.bf16.mxu0 0
        %4850 = vmatpush1.bf16.msra.mxu0 0
        %4851 = vmatprep.subr.bf16.mxu0 0
        %4852 = vmatpush1.bf16.msra.mxu0 0
        %4853 = vmatprep.subr.bf16.mxu0 0
        %4854 = vmatpush1.bf16.msra.mxu0 0
        %4855 = vmatprep.mubr.bf16.mxu0 0
        %4856 = vmatmul.mubr.bf16.gmra.mrb[0].mxu0 %v4743
        %v4857 = vpop.f32.mrb[0].mxu0
        %v4858 = vadd.f32 0.0, %v4857
        %v4859 = vpop.f32.mrb[0].mxu0
        %v4860 = vpop.f32.mrb[0].mxu0
        %v4861 = vadd.f32 0.0, %v4860
        %v4862 = vpop.f32.mrb[0].mxu0
        %4863 = vmatprep.mubr.bf16.mxu0 0
        %4864 = vmatmul.mubr.bf16.gmra.mrb[0].mxu0 %v4744
        %v4865 = vpop.f32.mrb[0].mxu0
        %v4866 = vadd.f32 0.0, %v4865
        %v4867 = vpop.f32.mrb[0].mxu0
        %v4868 = vpop.f32.mrb[0].mxu0
        %v4869 = vadd.f32 0.0, %v4868
        %v4870 = vpop.f32.mrb[0].mxu0
        %4871 = vmatprep.mubr.bf16.mxu0 0
        %4872 = vmatmul.mubr.bf16.gmra.mrb[0].mxu0 %v4745
        %v4873 = vpop.f32.mrb[0].mxu0
        %v4874 = vadd.f32 0.0, %v4873
        %v4875 = vpop.f32.mrb[0].mxu0
        %v4876 = vpop.f32.mrb[0].mxu0
        %v4877 = vadd.f32 0.0, %v4876
        %v4878 = vpop.f32.mrb[0].mxu0
        %4879 = vmatprep.mubr.bf16.mxu0 0
        %4880 = vmatmul.mubr.bf16.gmra.mrb[0].mxu0 %v4746
        %v4881 = vpop.f32.mrb[0].mxu0
        %v4882 = vadd.f32 0.0, %v4881
        %v4883 = vpop.f32.mrb[0].mxu0
        %v4884 = vpop.f32.mrb[0].mxu0
        %v4885 = vadd.f32 0.0, %v4884
        %v4886 = vpop.f32.mrb[0].mxu0
        %4887 = vmatprep.mubr.bf16.mxu0 0
        %4888 = vmatmul.mubr.bf16.gmra.mrb[0].mxu0 %v4747
        %v4889 = vpop.f32.mrb[0].mxu0
        %v4890 = vadd.f32 0.0, %v4889
        %v4891 = vpop.f32.mrb[0].mxu0
        %v4892 = vpop.f32.mrb[0].mxu0
        %v4893 = vadd.f32 0.0, %v4892
        %v4894 = vpop.f32.mrb[0].mxu0
        %4895 = vmatprep.mubr.bf16.mxu0 0
        %4896 = vmatmul.mubr.bf16.gmra.mrb[0].mxu0 %v4748
        %v4897 = vpop.f32.mrb[0].mxu0
        %v4898 = vadd.f32 0.0, %v4897
        %v4899 = vpop.f32.mrb[0].mxu0
        %v4900 = vpop.f32.mrb[0].mxu0
        %v4901 = vadd.f32 0.0, %v4900
        %v4902 = vpop.f32.mrb[0].mxu0
        %4903 = vmatprep.mubr.bf16.mxu0 0
        %4904 = vmatmul.mubr.bf16.gmra.mrb[0].mxu0 %v4749
        %v4905 = vpop.f32.mrb[0].mxu0
        %v4906 = vadd.f32 0.0, %v4905
        %v4907 = vpop.f32.mrb[0].mxu0
        %v4908 = vpop.f32.mrb[0].mxu0
        %v4909 = vadd.f32 0.0, %v4908
        %v4910 = vpop.f32.mrb[0].mxu0
        %4911 = vmatprep.mubr.bf16.mxu0 0
        %4912 = vmatmul.mubr.bf16.gmra.mrb[0].mxu0 %v4750
        %v4913 = vpop.f32.mrb[0].mxu0
        %v4914 = vadd.f32 0.0, %v4913
        %v4915 = vpop.f32.mrb[0].mxu0
        %v4916 = vpop.f32.mrb[0].mxu0
        %v4917 = vadd.f32 0.0, %v4916
        %v4918 = vpop.f32.mrb[0].mxu0
        %4919 = vmatprep.mubr.bf16.mxu0 0
        %4920 = vmatmul.mubr.bf16.gmra.mrb[0].mxu0 %v4751
        %v4921 = vpop.f32.mrb[0].mxu0
        %v4922 = vadd.f32 0.0, %v4921
        %v4923 = vpop.f32.mrb[0].mxu0
        %v4924 = vpop.f32.mrb[0].mxu0
        %v4925 = vadd.f32 0.0, %v4924
        %v4926 = vpop.f32.mrb[0].mxu0
        %4927 = vmatprep.mubr.bf16.mxu0 0
        %4928 = vmatmul.mubr.bf16.gmra.mrb[0].mxu0 %v4752
        %v4929 = vpop.f32.mrb[0].mxu0
        %v4930 = vadd.f32 0.0, %v4929
        %v4931 = vpop.f32.mrb[0].mxu0
        %v4932 = vpop.f32.mrb[0].mxu0
        %v4933 = vadd.f32 0.0, %v4932
        %v4934 = vpop.f32.mrb[0].mxu0
        %4935 = vmatprep.mubr.bf16.mxu0 0
        %4936 = vmatmul.mubr.bf16.gmra.mrb[0].mxu0 %v4753
        %v4937 = vpop.f32.mrb[0].mxu0
        %v4938 = vadd.f32 0.0, %v4937
        %v4939 = vpop.f32.mrb[0].mxu0
        %v4940 = vpop.f32.mrb[0].mxu0
        %v4941 = vadd.f32 0.0, %v4940
        %v4942 = vpop.f32.mrb[0].mxu0
        %4943 = vmatprep.mubr.bf16.mxu0 0
        %4944 = vmatmul.mubr.bf16.gmra.mrb[0].mxu0 %v4754
        %v4945 = vpop.f32.mrb[0].mxu0
        %v4946 = vadd.f32 0.0, %v4945
        %v4947 = vpop.f32.mrb[0].mxu0
        %v4948 = vpop.f32.mrb[0].mxu0
        %v4949 = vadd.f32 0.0, %v4948
        %v4950 = vpop.f32.mrb[0].mxu0
        %4951 = vmatprep.mubr.bf16.mxu0 0
        %4952 = vmatmul.mubr.bf16.gmra.mrb[0].mxu0 %v4755
        %v4953 = vpop.f32.mrb[0].mxu0
        %v4954 = vadd.f32 0.0, %v4953
        %v4955 = vpop.f32.mrb[0].mxu0
        %v4956 = vpop.f32.mrb[0].mxu0
        %v4957 = vadd.f32 0.0, %v4956
        %v4958 = vpop.f32.mrb[0].mxu0
        %4959 = vmatprep.mubr.bf16.mxu0 0
        %4960 = vmatmul.mubr.bf16.gmra.mrb[0].mxu0 %v4756
        %v4961 = vpop.f32.mrb[0].mxu0
        %v4962 = vadd.f32 0.0, %v4961
        %v4963 = vpop.f32.mrb[0].mxu0
        %v4964 = vpop.f32.mrb[0].mxu0
        %v4965 = vadd.f32 0.0, %v4964
        %v4966 = vpop.f32.mrb[0].mxu0
        %4967 = vmatprep.mubr.bf16.mxu0 0
        %4968 = vmatmul.mubr.bf16.gmra.mrb[0].mxu0 %v4757
        %v4969 = vpop.f32.mrb[0].mxu0
        %v4970 = vadd.f32 0.0, %v4969
        %v4971 = vpop.f32.mrb[0].mxu0
        %v4972 = vpop.f32.mrb[0].mxu0
        %v4973 = vadd.f32 0.0, %v4972
        %v4974 = vpop.f32.mrb[0].mxu0
        %4975 = vmatprep.mubr.bf16.mxu0 0
        %4976 = vmatmul.mubr.bf16.gmra.mrb[0].mxu0 %v4758
        %v4977 = vpop.f32.mrb[0].mxu0
        %v4978 = vadd.f32 0.0, %v4977
        %v4979 = vpop.f32.mrb[0].mxu0
        %v4980 = vpop.f32.mrb[0].mxu0
        %v4981 = vadd.f32 0.0, %v4980
        %v4982 = vpop.f32.mrb[0].mxu0
        %4983 = vdwg.mxu0
        %v4984 = vld [vmem:[%s9] sm:$0x1]
        %v4986 = vlaneseq
        %v4987 = vshrl.u32 %v4986, 7
        %v4988 = vsub.s32 0, %v4987
        %v4989 = vrot.slane %v4984, %v4988
        %v4991 = vmul.f32 %v4858, %v4989
        %v4992 = vmul.f32 %v4861, %v4989
        %v4993 = vmul.f32 %v4866, %v4989
        %v4994 = vmul.f32 %v4869, %v4989
        %v4995 = vmul.f32 %v4874, %v4989
        %v4996 = vmul.f32 %v4877, %v4989
        %v4997 = vmul.f32 %v4882, %v4989
        %v4998 = vmul.f32 %v4885, %v4989
        %v4999 = vmul.f32 %v4890, %v4989
        %v5000 = vmul.f32 %v4893, %v4989
        %v5001 = vmul.f32 %v4898, %v4989
        %v5002 = vmul.f32 %v4901, %v4989
        %v5003 = vmul.f32 %v4906, %v4989
        %v5004 = vmul.f32 %v4909, %v4989
        %v5005 = vmul.f32 %v4914, %v4989
        %v5006 = vmul.f32 %v4917, %v4989
        %v5007 = vmul.f32 %v4922, %v4989
        %v5008 = vmul.f32 %v4925, %v4989
        %v5009 = vmul.f32 %v4930, %v4989
        %v5010 = vmul.f32 %v4933, %v4989
        %v5011 = vmul.f32 %v4938, %v4989
        %v5012 = vmul.f32 %v4941, %v4989
        %v5013 = vmul.f32 %v4946, %v4989
        %v5014 = vmul.f32 %v4949, %v4989
        %v5015 = vmul.f32 %v4954, %v4989
        %v5016 = vmul.f32 %v4957, %v4989
        %v5017 = vmul.f32 %v4962, %v4989
        %v5018 = vmul.f32 %v4965, %v4989
        %v5019 = vmul.f32 %v4970, %v4989
        %v5020 = vmul.f32 %v4973, %v4989
        %v5021 = vmul.f32 %v4978, %v4989
        %v5022 = vmul.f32 %v4981, %v4989
        %v5023 = vld [vmem:[%s10] sm:$0x1]
        %v5025 = vlaneseq
        %v5026 = vshrl.u32 %v5025, 7
        %v5027 = vsub.s32 0, %v5026
        %v5028 = vrot.slane %v5023, %v5027
        %v5030 = vadd.f32 %v4991, %v5028
        %v5031 = vadd.f32 %v4992, %v5028
        %v5032 = vadd.f32 %v4993, %v5028
        %v5033 = vadd.f32 %v4994, %v5028
        %v5034 = vadd.f32 %v4995, %v5028
        %v5035 = vadd.f32 %v4996, %v5028
        %v5036 = vadd.f32 %v4997, %v5028
        %v5037 = vadd.f32 %v4998, %v5028
        %v5038 = vadd.f32 %v4999, %v5028
        %v5039 = vadd.f32 %v5000, %v5028
        %v5040 = vadd.f32 %v5001, %v5028
        %v5041 = vadd.f32 %v5002, %v5028
        %v5042 = vadd.f32 %v5003, %v5028
        %v5043 = vadd.f32 %v5004, %v5028
        %v5044 = vadd.f32 %v5005, %v5028
        %v5045 = vadd.f32 %v5006, %v5028
        %v5046 = vadd.f32 %v5007, %v5028
        %v5047 = vadd.f32 %v5008, %v5028
        %v5048 = vadd.f32 %v5009, %v5028
        %v5049 = vadd.f32 %v5010, %v5028
        %v5050 = vadd.f32 %v5011, %v5028
        %v5051 = vadd.f32 %v5012, %v5028
        %v5052 = vadd.f32 %v5013, %v5028
        %v5053 = vadd.f32 %v5014, %v5028
        %v5054 = vadd.f32 %v5015, %v5028
        %v5055 = vadd.f32 %v5016, %v5028
        %v5056 = vadd.f32 %v5017, %v5028
        %v5057 = vadd.f32 %v5018, %v5028
        %v5058 = vadd.f32 %v5019, %v5028
        %v5059 = vadd.f32 %v5020, %v5028
        %v5060 = vadd.f32 %v5021, %v5028
        %v5061 = vadd.f32 %v5022, %v5028
        %v5062 = vld [vmem:[%s429] sm:$0xf]
        %v5063 = vld [vmem:[%s429 + $0x4] sm:$0xf]
        %v5064 = vld [vmem:[%s429 + $0x8] sm:$0xf]
        %v5065 = vld [vmem:[%s429 + $0xc] sm:$0xf]
        %v5066 = vld [vmem:[%s429 + $0x10] sm:$0xf]
        %v5067 = vld [vmem:[%s429 + $0x14] sm:$0xf]
        %v5068 = vld [vmem:[%s429 + $0x18] sm:$0xf]
        %v5069 = vld [vmem:[%s429 + $0x1c] sm:$0xf]
        %v5070 = vld [vmem:[%s429 + $0x20] sm:$0xf]
        %v5071 = vld [vmem:[%s429 + $0x24] sm:$0xf]
        %v5072 = vld [vmem:[%s429 + $0x28] sm:$0xf]
        %v5073 = vld [vmem:[%s429 + $0x2c] sm:$0xf]
        %v5074 = vld [vmem:[%s429 + $0x30] sm:$0xf]
        %v5075 = vld [vmem:[%s429 + $0x34] sm:$0xf]
        %v5076 = vld [vmem:[%s429 + $0x38] sm:$0xf]
        %v5077 = vld [vmem:[%s429 + $0x3c] sm:$0xf]
        %v5078 = vld [vmem:[%s429 + $0x40] sm:$0xf]
        %v5079 = vld [vmem:[%s429 + $0x44] sm:$0xf]
        %v5080 = vld [vmem:[%s429 + $0x48] sm:$0xf]
        %v5081 = vld [vmem:[%s429 + $0x4c] sm:$0xf]
        %v5082 = vld [vmem:[%s429 + $0x50] sm:$0xf]
        %v5083 = vld [vmem:[%s429 + $0x54] sm:$0xf]
        %v5084 = vld [vmem:[%s429 + $0x58] sm:$0xf]
        %v5085 = vld [vmem:[%s429 + $0x5c] sm:$0xf]
        %v5086 = vld [vmem:[%s429 + $0x60] sm:$0xf]
        %v5087 = vld [vmem:[%s429 + $0x64] sm:$0xf]
        %v5088 = vld [vmem:[%s429 + $0x68] sm:$0xf]
        %v5089 = vld [vmem:[%s429 + $0x6c] sm:$0xf]
        %v5090 = vld [vmem:[%s429 + $0x70] sm:$0xf]
        %v5091 = vld [vmem:[%s429 + $0x74] sm:$0xf]
        %v5092 = vld [vmem:[%s429 + $0x78] sm:$0xf]
        %v5093 = vld [vmem:[%s429 + $0x7c] sm:$0xf]
        %v5094 = vunpack.c.l.bf16 %v5062
        %v5095 = vunpack.c.l.bf16 %v5063
        %v5096 = vunpack.c.l.bf16 %v5064
        %v5097 = vunpack.c.l.bf16 %v5065
        %v5098 = vunpack.c.l.bf16 %v5066
        %v5099 = vunpack.c.l.bf16 %v5067
        %v5100 = vunpack.c.l.bf16 %v5068
        %v5101 = vunpack.c.l.bf16 %v5069
        %v5102 = vunpack.c.l.bf16 %v5070
        %v5103 = vunpack.c.l.bf16 %v5071
        %v5104 = vunpack.c.l.bf16 %v5072
        %v5105 = vunpack.c.l.bf16 %v5073
        %v5106 = vunpack.c.l.bf16 %v5074
        %v5107 = vunpack.c.l.bf16 %v5075
        %v5108 = vunpack.c.l.bf16 %v5076
        %v5109 = vunpack.c.l.bf16 %v5077
        %v5110 = vunpack.c.l.bf16 %v5078
        %v5111 = vunpack.c.l.bf16 %v5079
        %v5112 = vunpack.c.l.bf16 %v5080
        %v5113 = vunpack.c.l.bf16 %v5081
        %v5114 = vunpack.c.l.bf16 %v5082
        %v5115 = vunpack.c.l.bf16 %v5083
        %v5116 = vunpack.c.l.bf16 %v5084
        %v5117 = vunpack.c.l.bf16 %v5085
        %v5118 = vunpack.c.l.bf16 %v5086
        %v5119 = vunpack.c.l.bf16 %v5087
        %v5120 = vunpack.c.l.bf16 %v5088
        %v5121 = vunpack.c.l.bf16 %v5089
        %v5122 = vunpack.c.l.bf16 %v5090
        %v5123 = vunpack.c.l.bf16 %v5091
        %v5124 = vunpack.c.l.bf16 %v5092
        %v5125 = vunpack.c.l.bf16 %v5093
        %v5126 = vadd.f32 %v5030, %v5094
        %v5127 = vadd.f32 %v5031, %v5095
        %v5128 = vadd.f32 %v5032, %v5096
        %v5129 = vadd.f32 %v5033, %v5097
        %v5130 = vadd.f32 %v5034, %v5098
        %v5131 = vadd.f32 %v5035, %v5099
        %v5132 = vadd.f32 %v5036, %v5100
        %v5133 = vadd.f32 %v5037, %v5101
        %v5134 = vadd.f32 %v5038, %v5102
        %v5135 = vadd.f32 %v5039, %v5103
        %v5136 = vadd.f32 %v5040, %v5104
        %v5137 = vadd.f32 %v5041, %v5105
        %v5138 = vadd.f32 %v5042, %v5106
        %v5139 = vadd.f32 %v5043, %v5107
        %v5140 = vadd.f32 %v5044, %v5108
        %v5141 = vadd.f32 %v5045, %v5109
        %v5142 = vadd.f32 %v5046, %v5110
        %v5143 = vadd.f32 %v5047, %v5111
        %v5144 = vadd.f32 %v5048, %v5112
        %v5145 = vadd.f32 %v5049, %v5113
        %v5146 = vadd.f32 %v5050, %v5114
        %v5147 = vadd.f32 %v5051, %v5115
        %v5148 = vadd.f32 %v5052, %v5116
        %v5149 = vadd.f32 %v5053, %v5117
        %v5150 = vadd.f32 %v5054, %v5118
        %v5151 = vadd.f32 %v5055, %v5119
        %v5152 = vadd.f32 %v5056, %v5120
        %v5153 = vadd.f32 %v5057, %v5121
        %v5154 = vadd.f32 %v5058, %v5122
        %v5155 = vadd.f32 %v5059, %v5123
        %v5156 = vadd.f32 %v5060, %v5124
        %v5157 = vadd.f32 %v5061, %v5125
        %v5158 = vmax.f32 %v5126, 0.0
        %v5159 = vmax.f32 %v5127, 0.0
        %v5160 = vmax.f32 %v5128, 0.0
        %v5161 = vmax.f32 %v5129, 0.0
        %v5162 = vmax.f32 %v5130, 0.0
        %v5163 = vmax.f32 %v5131, 0.0
        %v5164 = vmax.f32 %v5132, 0.0
        %v5165 = vmax.f32 %v5133, 0.0
        %v5166 = vmax.f32 %v5134, 0.0
        %v5167 = vmax.f32 %v5135, 0.0
        %v5168 = vmax.f32 %v5136, 0.0
        %v5169 = vmax.f32 %v5137, 0.0
        %v5170 = vmax.f32 %v5138, 0.0
        %v5171 = vmax.f32 %v5139, 0.0
        %v5172 = vmax.f32 %v5140, 0.0
        %v5173 = vmax.f32 %v5141, 0.0
        %v5174 = vmax.f32 %v5142, 0.0
        %v5175 = vmax.f32 %v5143, 0.0
        %v5176 = vmax.f32 %v5144, 0.0
        %v5177 = vmax.f32 %v5145, 0.0
        %v5178 = vmax.f32 %v5146, 0.0
        %v5179 = vmax.f32 %v5147, 0.0
        %v5180 = vmax.f32 %v5148, 0.0
        %v5181 = vmax.f32 %v5149, 0.0
        %v5182 = vmax.f32 %v5150, 0.0
        %v5183 = vmax.f32 %v5151, 0.0
        %v5184 = vmax.f32 %v5152, 0.0
        %v5185 = vmax.f32 %v5153, 0.0
        %v5186 = vmax.f32 %v5154, 0.0
        %v5187 = vmax.f32 %v5155, 0.0
        %v5188 = vmax.f32 %v5156, 0.0
        %v5189 = vmax.f32 %v5157, 0.0
        %5190 = vst [vmem:[%s424] sm:$0xff] %v5158
        %5191 = vst [vmem:[%s424 + $0x8] sm:$0xff] %v5159
        %5192 = vst [vmem:[%s424 + $0x10] sm:$0xff] %v5160
        %5193 = vst [vmem:[%s424 + $0x18] sm:$0xff] %v5161
        %5194 = vst [vmem:[%s424 + $0x20] sm:$0xff] %v5162
        %5195 = vst [vmem:[%s424 + $0x28] sm:$0xff] %v5163
        %5196 = vst [vmem:[%s424 + $0x30] sm:$0xff] %v5164
        %5197 = vst [vmem:[%s424 + $0x38] sm:$0xff] %v5165
        %5198 = vst [vmem:[%s424 + $0x40] sm:$0xff] %v5166
        %5199 = vst [vmem:[%s424 + $0x48] sm:$0xff] %v5167
        %5200 = vst [vmem:[%s424 + $0x50] sm:$0xff] %v5168
        %5201 = vst [vmem:[%s424 + $0x58] sm:$0xff] %v5169
        %5202 = vst [vmem:[%s424 + $0x60] sm:$0xff] %v5170
        %5203 = vst [vmem:[%s424 + $0x68] sm:$0xff] %v5171
        %5204 = vst [vmem:[%s424 + $0x70] sm:$0xff] %v5172
        %5205 = vst [vmem:[%s424 + $0x78] sm:$0xff] %v5173
        %5206 = vst [vmem:[%s424 + $0x80] sm:$0xff] %v5174
        %5207 = vst [vmem:[%s424 + $0x88] sm:$0xff] %v5175
        %5208 = vst [vmem:[%s424 + $0x90] sm:$0xff] %v5176
        %5209 = vst [vmem:[%s424 + $0x98] sm:$0xff] %v5177
        %5210 = vst [vmem:[%s424 + $0xa0] sm:$0xff] %v5178
        %5211 = vst [vmem:[%s424 + $0xa8] sm:$0xff] %v5179
        %5212 = vst [vmem:[%s424 + $0xb0] sm:$0xff] %v5180
        %5213 = vst [vmem:[%s424 + $0xb8] sm:$0xff] %v5181
        %5214 = vst [vmem:[%s424 + $0xc0] sm:$0xff] %v5182
        %5215 = vst [vmem:[%s424 + $0xc8] sm:$0xff] %v5183
        %5216 = vst [vmem:[%s424 + $0xd0] sm:$0xff] %v5184
        %5217 = vst [vmem:[%s424 + $0xd8] sm:$0xff] %v5185
        %5218 = vst [vmem:[%s424 + $0xe0] sm:$0xff] %v5186
        %5219 = vst [vmem:[%s424 + $0xe8] sm:$0xff] %v5187
        %5220 = vst [vmem:[%s424 + $0xf0] sm:$0xff] %v5188
        %5221 = vst [vmem:[%s424 + $0xf8] sm:$0xff] %v5189
        %s5222 = sand.u32 %s271, 1
        %s5223 = scalar_lea.sflag [#allocation5], %s5222
        %s5224 = sand.u32 %s271, 1
        %s5225 = smul.addr %s5224, 256
        %s5226 = scalar_lea.vmem [#allocation9], %s5225
        // Predicated region
        $region77: #{tpu_custom_call.1} parent=63 // pred_check
          %p5227 = pneg %p281
        $region78: #{tpu_custom_call.1} parent=63 // pred_check_branch
          %5229 = sbr.rel (%p5227) target = $region80
        $region79: #{tpu_custom_call.1} parent=63 // pred_region
          %s5230 = smul.u32 32, %s27
          %s5232 = ssub.s32 4096, 4096
          %5233 = vsyncadd %s5223, %s5232
          %s5234 = smul.addr %s5230, 128
          %s5235 = scalar_lea.hbm %s11, %s5234
          %s5236 = sshll.u32 %s5226, 4
          %s5237 = int_to_ptr.vmem [resolvable:$true] %s5236
          %5242 = dma.vmem_to_hbm [thread:$0]  %s5237, 4096, %s5235, %s5223, 128, 128, 8
        $region80: #{tpu_custom_call.1} parent=63 // pred_fallthru
          _
      $region64: #{tpu_custom_call.1} parent=5 // pred_fallthru
        _
      %p5243 = scmp.le.s32.totalorder 2, %s22
      // Predicated region
      $region81: #{tpu_custom_call.1} parent=5 // pred_check
        %p5244 = pneg %p5243
      $region82: #{tpu_custom_call.1} parent=5 // pred_check_branch
        %5246 = sbr.rel (%p5244) target = $region84
      $region83: #{tpu_custom_call.1} parent=5 // pred_region
        %s5247 = ssub.s32 %s22, 2
        // Predicated region
        $region85: #{tpu_custom_call.1} parent=83 // pred_check
          %p5248 = pneg %p287
        $region86: #{tpu_custom_call.1} parent=83 // pred_check_branch
          %5250 = sbr.rel (%p5248) target = $region88
        $region87: #{tpu_custom_call.1} parent=83 // pred_region
          %s5251 = sand.u32 %s272, 1
          %s5252 = scalar_lea.sflag [#allocation5], %s5251
          %s5253 = sand.u32 %s272, 1
          %s5254 = smul.addr %s5253, 256
          %s5255 = scalar_lea.vmem [#allocation9], %s5254
          %5256 = dma.done %s5252, 4096
        $region88: #{tpu_custom_call.1} parent=83 // pred_fallthru
          _
      $region84: #{tpu_custom_call.1} parent=5 // pred_fallthru
        _
    $region6: #{tpu_custom_call.1} parent=1 // loop_footer
      %s26 = sadd.s32 1, %s22
    $region7: #{tpu_custom_call.1} parent=1 // loop_footer_branch
      %21 = sbr.rel target = $region3
    $region8: #{tpu_custom_call.1} parent=1 // loop_exit
      _
    %5257 = vsyncpa [#allocation4], 1
    %s5258 = scalar_lea.sflag [#allocation4], 1
    %5259 = vsyncpa %s5258, 1
    %5260 = vsyncpa [#allocation7], 1
    %5261 = vsyncpa [#allocation5], 1
    %s5262 = scalar_lea.sflag [#allocation5], 1
    %5263 = vsyncpa %s5262, 1

</llo_original>
